<compile_context>
chip_gen: v5e
topology: v5e:2x2
jax: 0.10.0
libtpu: 0.0.40
codegen_flags: <defaults>
</compile_context>

<pallas_src>
import functools

import jax
import jax.numpy as jnp
from jax import lax
from jax.experimental import pallas as pl
from jax.experimental.pallas import tpu as pltpu

EPS = 1e-5
LANE = 128
F32 = jnp.float32


def _round_up(v, m):
    return (v + m - 1) // m * m


def _largest_divisor_leq(n, cap):
    best = 1
    for t in range(1, n + 1):
        if n % t == 0 and t <= cap:
            best = t
    return best


def _vmem_limit_bytes():
    cap = 64 * 1024 * 1024
    try:
        info = pltpu.get_tpu_info()
        cap = int(getattr(info, "vmem_capacity_bytes", cap))
    except Exception:
        pass
    # ~70% of physical VMEM: ~89 MiB on v5e/v6e (128 MiB), ~44 MiB on v7x (64 MiB).
    return int(min(100 * 1024 * 1024, cap * 7 // 10))


def building_block_downsample(x_nchw, params, *, mxu_dtype=jnp.bfloat16,
                              gemm_rows=256, epi_rows=2048):
    """Forward pass of BuildingBlockWithDownSample (training-mode BN stats)."""
    x = jnp.transpose(x_nchw, (0, 2, 3, 1)).astype(F32)          # NHWC
    N, H, W, Cin = x.shape
    assert H % 2 == 0 and W % 2 == 0, "even spatial dims expected"
    Cout = params["w1"].shape[-1]
    Cp = _round_up(Cout, LANE)                                    # lane-dense channels
    Ho, Wo = H // 2, W // 2
    M = N * Ho * Wo
    HE, WE = Ho + 1, Wo + 1                                       # phase-plane extents
    inter_dtype = jnp.bfloat16 if mxu_dtype == jnp.bfloat16 else F32
    mxu_bytes = jnp.dtype(mxu_dtype).itemsize
    inter_bytes = jnp.dtype(inter_dtype).itemsize

    # GEMM M tile: target ~gemm_rows output rows per step (keeps the f32
    # accumulator <= ~half the vreg file at Cp=128; lower gemm_rows for larger Cp).
    TH = _largest_divisor_leq(Ho, max(1, gemm_rows // Wo))
    n_rb = Ho // TH
    R = TH * Wo

    vmem_limit = _vmem_limit_bytes()
    cparams = pltpu.CompilerParams(
        dimension_semantics=("parallel", "parallel"),
        vmem_limit_bytes=vmem_limit)

    # ---- lane-dense (zero-padded) weights & affine params -------------------
    def padc(a, axis):
        pads = [(0, 0)] * a.ndim
        pads[axis] = (0, Cp - a.shape[axis])
        return jnp.pad(a, pads)

    w1_9 = padc(params["w1"].astype(F32), 3).reshape(9, Cin, Cp)
    wd = padc(params["wd"].astype(F32), 1)                        # [Cin, Cp]
    # Fuse the 1x1/s2 downsample into conv1's centre tap (N-dim = 2*Cp).
    wc = jnp.concatenate([w1_9[4], wd], axis=-1).astype(mxu_dtype)  # [Cin, 2Cp]
    w1o = w1_9[jnp.asarray([0, 1, 2, 3, 5, 6, 7, 8])].astype(mxu_dtype)  # [8,Cin,Cp]
    w2 = (padc(padc(params["w2"].astype(F32), 3), 2)
          .reshape(9, Cp, Cp).astype(mxu_dtype))
    g1, b1 = padc(params["g1"], 0), padc(params["b1"], 0)
    g2, b2 = padc(params["g2"], 0), padc(params["b2"], 0)
    gd, bd = padc(params["gd"], 0), padc(params["bd"], 0)

    # ---- phase-split padded input: stride-2 taps become contiguous slices ---
    # (pad + strided slices are fused by XLA into the four plane outputs)
    xp = jnp.pad(x, ((0, 0), (1, 1), (1, 1), (0, 0)))
    planes = (xp[:, 0::2, 0::2, :], xp[:, 0::2, 1::2, :],         # (row, col) parity
              xp[:, 1::2, 0::2, :], xp[:, 1::2, 1::2, :])         # ee, eo, oe, oo

    grid = (N, n_rb)
    blk_out = pl.BlockSpec((1, TH, Wo, Cp), lambda n, rb: (n, rb, 0, 0))
    blk_st = pl.BlockSpec((1, 1, 8, Cp), lambda n, rb: (n, rb, 0, 0))
    blk_vec = pl.BlockSpec((1, Cp), lambda n, rb: (0, 0))
    blk_plane = pl.BlockSpec((1, HE, WE, Cin), lambda n, rb: (n, 0, 0, 0))

    # ===== K1: conv1 (3x3 s2) + fused downsample (1x1 s2) + partial BN stats =
    def conv1_ds_kernel(xee, xeo, xoe, xoo, w1o_ref, wc_ref,
                        y1_ref, yd_ref, st_ref):
        oh0 = pl.program_id(1) * TH
        par = ((xee, xeo), (xoe, xoo))            # [row parity][col parity]
        # Centre tap (kh=kw=1) doubles as the 1x1/s2 downsample input.
        ctr = par[1][1][0, pl.ds(oh0, TH), pl.ds(0, Wo), :]
        ctr = ctr.reshape(R, Cin).astype(mxu_dtype)
        both = jnp.dot(ctr, wc_ref[...], preferred_element_type=F32)
        acc = both[:, :Cp]
        yd = both[:, Cp:]
        t = 0
        for kh in range(3):
            rpar, roff = kh % 2, (1 if kh == 2 else 0)
            for kw in range(3):
                if kh == 1 and kw == 1:
                    continue
                cpar, coff = kw % 2, (1 if kw == 2 else 0)
                tap = par[rpar][cpar][0, pl.ds(oh0 + roff, TH),
                                      pl.ds(coff, Wo), :]
                tap = tap.reshape(R, Cin).astype(mxu_dtype)
                acc = acc + jnp.dot(tap, w1o_ref[t],
                                    preferred_element_type=F32)
                t += 1
        y1_ref[...] = acc.reshape(1, TH, Wo, Cp).astype(y1_ref.dtype)
        yd_ref[...] = yd.reshape(1, TH, Wo, Cp).astype(yd_ref.dtype)
        st = jnp.concatenate(
            [jnp.sum(acc, axis=0, keepdims=True),
             jnp.sum(acc * acc, axis=0, keepdims=True),
             jnp.sum(yd, axis=0, keepdims=True),
             jnp.sum(yd * yd, axis=0, keepdims=True),
             jnp.zeros((4, Cp), F32)], axis=0)
        st_ref[...] = st.reshape(1, 1, 8, Cp)

    cost1 = pl.CostEstimate(
        flops=2 * M * Cin * Cp * 10, transcendentals=0,
        bytes_accessed=(4 * N * HE * WE * Cin * 4
                        + (8 * Cin * Cp + Cin * 2 * Cp) * mxu_bytes
                        + 2 * M * Cp * inter_bytes
                        + N * n_rb * 8 * Cp * 4))

    y1, yd, st1 = pl.pallas_call(
        conv1_ds_kernel, grid=grid,
        in_specs=[blk_plane, blk_plane, blk_plane, blk_plane,
                  pl.BlockSpec((8, Cin, Cp), lambda n, rb: (0, 0, 0)),
                  pl.BlockSpec((Cin, 2 * Cp), lambda n, rb: (0, 0))],
        out_specs=(blk_out, blk_out, blk_st),
        out_shape=(jax.ShapeDtypeStruct((N, Ho, Wo, Cp), inter_dtype),
                   jax.ShapeDtypeStruct((N, Ho, Wo, Cp), inter_dtype),
                   jax.ShapeDtypeStruct((N, n_rb, 8, Cp), F32)),
        compiler_params=cparams, cost_estimate=cost1,
    )(planes[0], planes[1], planes[2], planes[3], w1o, wc)

    # ---- finalize BN stats: fold into per-channel scale/bias (tiny) ---------
    def fold_stats(sum_, sumsq, gamma, beta):
        mean = sum_ / M
        # NOTE: E[x^2]-E[x]^2 in f32; acceptable at these magnitudes/tolerances.
        var = sumsq / M - mean * mean
        scale = gamma * lax.rsqrt(var + EPS)
        return scale.reshape(1, Cp), (beta - mean * scale).reshape(1, Cp)

    s1 = jnp.sum(st1, axis=(0, 1))
    sc1, bi1 = fold_stats(s1[0], s1[1], g1, b1)
    scd, bid = fold_stats(s1[2], s1[3], gd, bd)

    # ===== K2: bn1 + relu1 fused into conv2 (3x3 s1) + partial BN stats ======
    def conv2_kernel(y1_ref, sc1_ref, bi1_ref, w2_ref, y2_ref, st_ref, hbuf):
        rb = pl.program_id(1)
        oh0 = rb * TH
        sc = sc1_ref[...].reshape(1, 1, Cp)
        bi = bi1_ref[...].reshape(1, 1, Cp)

        # Build bn1+relu'd hidden rows with a zero halo in VMEM scratch:
        # conv2's zero padding lives in h-space (post bn/relu), so the halo
        # must be exactly 0 (not relu(bias)).
        hbuf[...] = jnp.zeros_like(hbuf)
        ctr = y1_ref[0, pl.ds(oh0, TH), :, :].astype(F32)
        hbuf[pl.ds(1, TH), pl.ds(1, Wo), :] = jnp.maximum(ctr * sc + bi, 0.0)

        @pl.when(rb > 0)
        def _():
            top = y1_ref[0, pl.ds(oh0 - 1, 1), :, :].astype(F32)
            hbuf[pl.ds(0, 1), pl.ds(1, Wo), :] = jnp.maximum(
                top * sc + bi, 0.0)

        @pl.when(rb < n_rb - 1)
        def _():
            bot = y1_ref[0, pl.ds(oh0 + TH, 1), :, :].astype(F32)
            hbuf[pl.ds(TH + 1, 1), pl.ds(1, Wo), :] = jnp.maximum(
                bot * sc + bi, 0.0)

        acc = jnp.zeros((R, Cp), F32)
        for kh in range(3):
            for kw in range(3):
                tap = hbuf[pl.ds(kh, TH), pl.ds(kw, Wo), :]
                tap = tap.reshape(R, Cp).astype(mxu_dtype)
                acc = acc + jnp.dot(tap, w2_ref[3 * kh + kw],
                                    preferred_element_type=F32)
        y2_ref[...] = acc.reshape(1, TH, Wo, Cp).astype(y2_ref.dtype)
        st = jnp.concatenate(
            [jnp.sum(acc, axis=0, keepdims=True),
             jnp.sum(acc * acc, axis=0, keepdims=True),
             jnp.zeros((6, Cp), F32)], axis=0)
        st_ref[...] = st.reshape(1, 1, 8, Cp)

    cost2 = pl.CostEstimate(
        flops=2 * M * 9 * Cp * Cp, transcendentals=0,
        bytes_accessed=(N * Ho * Wo * Cp * inter_bytes
                        + 9 * Cp * Cp * mxu_bytes
                        + M * Cp * inter_bytes
                        + N * n_rb * 8 * Cp * 4))

    y2, st2 = pl.pallas_call(
        conv2_kernel, grid=grid,
        in_specs=[pl.BlockSpec((1, Ho, Wo, Cp), lambda n, rb: (n, 0, 0, 0)),
                  blk_vec, blk_vec,
                  pl.BlockSpec((9, Cp, Cp), lambda n, rb: (0, 0, 0))],
        out_specs=(blk_out, blk_st),
        out_shape=(jax.ShapeDtypeStruct((N, Ho, Wo, Cp), inter_dtype),
                   jax.ShapeDtypeStruct((N, n_rb, 8, Cp), F32)),
        scratch_shapes=[pltpu.VMEM((TH + 2, Wo + 2, Cp), F32)],
        compiler_params=cparams, cost_estimate=cost2,
    )(y1, sc1, bi1, w2)

    s2 = jnp.sum(st2, axis=(0, 1))
    sc2, bi2 = fold_stats(s2[0], s2[1], g2, b2)

    # ===== K3: bn2 + bn_downsample + residual add + relu2 (large row blocks) =
    TM = _largest_divisor_leq(M, epi_rows)
    y2f = y2.reshape(M, Cp)
    ydf = yd.reshape(M, Cp)
    blk_row = pl.BlockSpec((TM, Cp), lambda i: (i, 0))
    blk_v1 = pl.BlockSpec((1, Cp), lambda i: (0, 0))

    def epilogue_kernel(y2_ref, yd_ref, s2_ref, b2_ref, sd_ref, bd_ref, o_ref):
        o_ref[...] = jnp.maximum(
            y2_ref[...].astype(F32) * s2_ref[...] + b2_ref[...]
            + yd_ref[...].astype(F32) * sd_ref[...] + bd_ref[...], 0.0)

    out_flat = pl.pallas_call(
        epilogue_kernel, grid=(M // TM,),
        in_specs=[blk_row, blk_row, blk_v1, blk_v1, blk_v1, blk_v1],
        out_specs=blk_row,
        out_shape=jax.ShapeDtypeStruct((M, Cp), F32),
        compiler_params=pltpu.CompilerParams(
            dimension_semantics=("parallel",),
            vmem_limit_bytes=vmem_limit),
    )(y2f, ydf, sc2, bi2, scd, bid)

    out = out_flat.reshape(N, Ho, Wo, Cp)[:, :, :, :Cout]
    return jnp.transpose(out, (0, 3, 1, 2))                      # back to NCHW


# ---------------------------- pure-JAX reference -----------------------------
def reference(x_nchw, params):
    x = x_nchw.astype(jnp.float32)

    def conv(z, w_hwio, stride, pad):
        return lax.conv_general_dilated(
            z, w_hwio, window_strides=(stride, stride),
            padding=((pad, pad), (pad, pad)),
            dimension_numbers=("NCHW", "HWIO", "NCHW"))

    def bn(y, g, b):
        mean = jnp.mean(y, axis=(0, 2, 3), keepdims=True)
        var = jnp.mean((y - mean) ** 2, axis=(0, 2, 3), keepdims=True)
        return ((y - mean) / jnp.sqrt(var + EPS)
                * g.reshape(1, -1, 1, 1) + b.reshape(1, -1, 1, 1))

    Cin, Cout = params["wd"].shape
    idn = bn(conv(x, params["wd"].reshape(1, 1, Cin, Cout), 2, 0),
             params["gd"], params["bd"])
    out = jnp.maximum(bn(conv(x, params["w1"], 2, 1),
                         params["g1"], params["b1"]), 0.0)
    out = bn(conv(out, params["w2"], 1, 1), params["g2"], params["b2"])
    return jnp.maximum(out + idn, 0.0)


if __name__ == "__main__":
    key = jax.random.PRNGKey(0)
    kx, k1, k2, kd = jax.random.split(key, 4)

    N, Cin, H, W = 2, 4, 16, 16
    Cout = 8

    x = jax.random.normal(kx, (N, Cin, H, W), dtype=jnp.float32)

    params = {
        # conv weights stored HWIO ([kh, kw, Cin, Cout])
        "w1": jax.random.normal(k1, (3, 3, Cin, Cout), jnp.float32) * 0.2,
        "w2": jax.random.normal(k2, (3, 3, Cout, Cout), jnp.float32) * 0.2,
        "wd": jax.random.normal(kd, (Cin, Cout), jnp.float32) * 0.2,
        # batch-norm affine params (deterministic, non-trivial)
        "g1": 1.0 + 0.10 * jnp.arange(Cout, dtype=jnp.float32),
        "b1": 0.05 * jnp.arange(Cout, dtype=jnp.float32),
        "g2": 1.0 - 0.05 * jnp.arange(Cout, dtype=jnp.float32),
        "b2": -0.03 * jnp.arange(Cout, dtype=jnp.float32),
        "gd": 1.0 + 0.02 * jnp.arange(Cout, dtype=jnp.float32),
        "bd": 0.01 * jnp.arange(Cout, dtype=jnp.float32),
    }

    ref = reference(x, params)

    # f32 MXU operands + f32 intermediates: tight check (single row block).
    fwd_f32 = jax.jit(functools.partial(building_block_downsample,
                                        mxu_dtype=jnp.float32))
    out_f32 = jax.block_until_ready(fwd_f32(x, params))
    err_f32 = float(jnp.max(jnp.abs(out_f32 - ref)))

    # Small tiles: forces n_rb > 1 so the fused bn1+relu+conv2 halo path is
    # exercised at runtime.
    fwd_small = jax.jit(functools.partial(building_block_downsample,
                                          mxu_dtype=jnp.float32,
                                          gemm_rows=32))
    out_small = jax.block_until_ready(fwd_small(x, params))
    err_small = float(jnp.max(jnp.abs(out_small - ref)))

    # bf16 MXU operands + bf16 HBM intermediates (production config): loose check.
    fwd_bf16 = jax.jit(functools.partial(building_block_downsample,
                                         mxu_dtype=jnp.bfloat16))
    out_bf16 = jax.block_until_ready(fwd_bf16(x, params))
    err_bf16 = float(jnp.max(jnp.abs(out_bf16 - ref)))

    shape_ok = out_f32.shape == (N, Cout, H // 2, W // 2)
    if shape_ok and err_f32 < 1e-3 and err_small < 1e-3 and err_bf16 < 0.3:
        print("KERNEL_OK")
    else:
        print(f"MISMATCH shape={out_f32.shape} err_f32={err_f32} "
              f"err_small={err_small} err_bf16={err_bf16}")
</pallas_src>

<mosaic_0001>
module attributes {stable_mosaic.version = 11 : i64} {
  func.func @conv1_ds_kernel(%arg0: i32, %arg1: i32, %arg2: memref<1x9x9x4xf32, #tpu.memory_space<vmem>>, %arg3: memref<1x9x9x4xf32, #tpu.memory_space<vmem>>, %arg4: memref<1x9x9x4xf32, #tpu.memory_space<vmem>>, %arg5: memref<1x9x9x4xf32, #tpu.memory_space<vmem>>, %arg6: memref<8x4x128xf32, #tpu.memory_space<vmem>>, %arg7: memref<4x256xf32, #tpu.memory_space<vmem>>, %arg8: memref<1x8x8x128xf32, #tpu.memory_space<vmem>>, %arg9: memref<1x8x8x128xf32, #tpu.memory_space<vmem>>, %arg10: memref<1x1x8x128xf32, #tpu.memory_space<vmem>>) attributes {dimension_semantics = [#tpu.dimension_semantics<parallel>, #tpu.dimension_semantics<parallel>], iteration_bounds = array<i64: 2, 1>, scalar_prefetch = 0 : i64, scratch_operands = 0 : i64, tpu.core_type = #tpu.core_type<tc>, window_params = [{transform_indices = @transform_0, window_bounds = array<i64: 1, 9, 9, 4>}, {transform_indices = @transform_1, window_bounds = array<i64: 1, 9, 9, 4>}, {transform_indices = @transform_2, window_bounds = array<i64: 1, 9, 9, 4>}, {transform_indices = @transform_3, window_bounds = array<i64: 1, 9, 9, 4>}, {pipeline_mode = #tpu.pipeline_mode<synchronous>, transform_indices = @transform_4, window_bounds = array<i64: 8, 4, 128>}, {pipeline_mode = #tpu.pipeline_mode<synchronous>, transform_indices = @transform_5, window_bounds = array<i64: 4, 256>}, {transform_indices = @transform_6, window_bounds = array<i64: 1, 8, 8, 128>}, {transform_indices = @transform_7, window_bounds = array<i64: 1, 8, 8, 128>}, {transform_indices = @transform_8, window_bounds = array<i64: 1, 1, 8, 128>}]} {
    %c8_i32 = arith.constant 8 : i32
    %0 = arith.muli %arg1, %c8_i32 : i32
    %c0 = arith.constant 0 : index
    %1 = arith.index_cast %0 : i32 to index
    %c0_0 = arith.constant 0 : index
    %c0_1 = arith.constant 0 : index
    %2 = vector.load %arg5[%c0, %1, %c0_0, %c0_1] : memref<1x9x9x4xf32, #tpu.memory_space<vmem>>, vector<1x8x8x4xf32>
    %3 = vector.shape_cast %2 : vector<1x8x8x4xf32> to vector<8x8x4xf32>
    %4 = vector.shape_cast %3 : vector<8x8x4xf32> to vector<64x4xf32>
    %c0_2 = arith.constant 0 : index
    %c0_3 = arith.constant 0 : index
    %5 = vector.load %arg7[%c0_2, %c0_3] : memref<4x256xf32, #tpu.memory_space<vmem>>, vector<4x256xf32>
    %cst = arith.constant dense<0.000000e+00> : vector<64x256xf32>
    %6 = tpu.matmul %4, %5, %cst {dimension_numbers = #tpu.dot_dimension_numbers<[1], [0], [0], [1], [0, 0, 1, 1], [], []>} : vector<64x4xf32>, vector<4x256xf32>, vector<64x256xf32> -> vector<64x256xf32>
    %7 = vector.extract_strided_slice %6 {offsets = [0, 0], sizes = [64, 128], strides = [1, 1]} : vector<64x256xf32> to vector<64x128xf32>
    %8 = vector.extract_strided_slice %6 {offsets = [0, 128], sizes = [64, 128], strides = [1, 1]} : vector<64x256xf32> to vector<64x128xf32>
    %c0_i32 = arith.constant 0 : i32
    %9 = arith.addi %0, %c0_i32 : i32
    %c0_4 = arith.constant 0 : index
    %10 = arith.index_cast %9 : i32 to index
    %c0_5 = arith.constant 0 : index
    %c0_6 = arith.constant 0 : index
    %11 = vector.load %arg2[%c0_4, %10, %c0_5, %c0_6] : memref<1x9x9x4xf32, #tpu.memory_space<vmem>>, vector<1x8x8x4xf32>
    %12 = vector.shape_cast %11 : vector<1x8x8x4xf32> to vector<8x8x4xf32>
    %13 = vector.shape_cast %12 : vector<8x8x4xf32> to vector<64x4xf32>
    %c0_7 = arith.constant 0 : index
    %c0_8 = arith.constant 0 : index
    %c0_9 = arith.constant 0 : index
    %14 = vector.load %arg6[%c0_7, %c0_8, %c0_9] : memref<8x4x128xf32, #tpu.memory_space<vmem>>, vector<1x4x128xf32>
    %15 = vector.shape_cast %14 : vector<1x4x128xf32> to vector<4x128xf32>
    %cst_10 = arith.constant dense<0.000000e+00> : vector<64x128xf32>
    %16 = tpu.matmul %13, %15, %cst_10 {dimension_numbers = #tpu.dot_dimension_numbers<[1], [0], [0], [1], [0, 0, 1, 1], [], []>} : vector<64x4xf32>, vector<4x128xf32>, vector<64x128xf32> -> vector<64x128xf32>
    %17 = arith.addf %7, %16 : vector<64x128xf32>
    %c0_i32_11 = arith.constant 0 : i32
    %18 = arith.addi %0, %c0_i32_11 : i32
    %c0_12 = arith.constant 0 : index
    %19 = arith.index_cast %18 : i32 to index
    %c0_13 = arith.constant 0 : index
    %c0_14 = arith.constant 0 : index
    %20 = vector.load %arg3[%c0_12, %19, %c0_13, %c0_14] : memref<1x9x9x4xf32, #tpu.memory_space<vmem>>, vector<1x8x8x4xf32>
    %21 = vector.shape_cast %20 : vector<1x8x8x4xf32> to vector<8x8x4xf32>
    %22 = vector.shape_cast %21 : vector<8x8x4xf32> to vector<64x4xf32>
    %c1 = arith.constant 1 : index
    %c0_15 = arith.constant 0 : index
    %c0_16 = arith.constant 0 : index
    %23 = vector.load %arg6[%c1, %c0_15, %c0_16] : memref<8x4x128xf32, #tpu.memory_space<vmem>>, vector<1x4x128xf32>
    %24 = vector.shape_cast %23 : vector<1x4x128xf32> to vector<4x128xf32>
    %cst_17 = arith.constant dense<0.000000e+00> : vector<64x128xf32>
    %25 = tpu.matmul %22, %24, %cst_17 {dimension_numbers = #tpu.dot_dimension_numbers<[1], [0], [0], [1], [0, 0, 1, 1], [], []>} : vector<64x4xf32>, vector<4x128xf32>, vector<64x128xf32> -> vector<64x128xf32>
    %26 = arith.addf %17, %25 : vector<64x128xf32>
    %c0_i32_18 = arith.constant 0 : i32
    %27 = arith.addi %0, %c0_i32_18 : i32
    %c0_19 = arith.constant 0 : index
    %28 = arith.index_cast %27 : i32 to index
    %c1_20 = arith.constant 1 : index
    %c0_21 = arith.constant 0 : index
    %29 = vector.load %arg2[%c0_19, %28, %c1_20, %c0_21] : memref<1x9x9x4xf32, #tpu.memory_space<vmem>>, vector<1x8x8x4xf32>
    %30 = vector.shape_cast %29 : vector<1x8x8x4xf32> to vector<8x8x4xf32>
    %31 = vector.shape_cast %30 : vector<8x8x4xf32> to vector<64x4xf32>
    %c2 = arith.constant 2 : index
    %c0_22 = arith.constant 0 : index
    %c0_23 = arith.constant 0 : index
    %32 = vector.load %arg6[%c2, %c0_22, %c0_23] : memref<8x4x128xf32, #tpu.memory_space<vmem>>, vector<1x4x128xf32>
    %33 = vector.shape_cast %32 : vector<1x4x128xf32> to vector<4x128xf32>
    %cst_24 = arith.constant dense<0.000000e+00> : vector<64x128xf32>
    %34 = tpu.matmul %31, %33, %cst_24 {dimension_numbers = #tpu.dot_dimension_numbers<[1], [0], [0], [1], [0, 0, 1, 1], [], []>} : vector<64x4xf32>, vector<4x128xf32>, vector<64x128xf32> -> vector<64x128xf32>
    %35 = arith.addf %26, %34 : vector<64x128xf32>
    %c0_i32_25 = arith.constant 0 : i32
    %36 = arith.addi %0, %c0_i32_25 : i32
    %c0_26 = arith.constant 0 : index
    %37 = arith.index_cast %36 : i32 to index
    %c0_27 = arith.constant 0 : index
    %c0_28 = arith.constant 0 : index
    %38 = vector.load %arg4[%c0_26, %37, %c0_27, %c0_28] : memref<1x9x9x4xf32, #tpu.memory_space<vmem>>, vector<1x8x8x4xf32>
    %39 = vector.shape_cast %38 : vector<1x8x8x4xf32> to vector<8x8x4xf32>
    %40 = vector.shape_cast %39 : vector<8x8x4xf32> to vector<64x4xf32>
    %c3 = arith.constant 3 : index
    %c0_29 = arith.constant 0 : index
    %c0_30 = arith.constant 0 : index
    %41 = vector.load %arg6[%c3, %c0_29, %c0_30] : memref<8x4x128xf32, #tpu.memory_space<vmem>>, vector<1x4x128xf32>
    %42 = vector.shape_cast %41 : vector<1x4x128xf32> to vector<4x128xf32>
    %cst_31 = arith.constant dense<0.000000e+00> : vector<64x128xf32>
    %43 = tpu.matmul %40, %42, %cst_31 {dimension_numbers = #tpu.dot_dimension_numbers<[1], [0], [0], [1], [0, 0, 1, 1], [], []>} : vector<64x4xf32>, vector<4x128xf32>, vector<64x128xf32> -> vector<64x128xf32>
    %44 = arith.addf %35, %43 : vector<64x128xf32>
    %c0_i32_32 = arith.constant 0 : i32
    %45 = arith.addi %0, %c0_i32_32 : i32
    %c0_33 = arith.constant 0 : index
    %46 = arith.index_cast %45 : i32 to index
    %c1_34 = arith.constant 1 : index
    %c0_35 = arith.constant 0 : index
    %47 = vector.load %arg4[%c0_33, %46, %c1_34, %c0_35] : memref<1x9x9x4xf32, #tpu.memory_space<vmem>>, vector<1x8x8x4xf32>
    %48 = vector.shape_cast %47 : vector<1x8x8x4xf32> to vector<8x8x4xf32>
    %49 = vector.shape_cast %48 : vector<8x8x4xf32> to vector<64x4xf32>
    %c4 = arith.constant 4 : index
    %c0_36 = arith.constant 0 : index
    %c0_37 = arith.constant 0 : index
    %50 = vector.load %arg6[%c4, %c0_36, %c0_37] : memref<8x4x128xf32, #tpu.memory_space<vmem>>, vector<1x4x128xf32>
    %51 = vector.shape_cast %50 : vector<1x4x128xf32> to vector<4x128xf32>
    %cst_38 = arith.constant dense<0.000000e+00> : vector<64x128xf32>
    %52 = tpu.matmul %49, %51, %cst_38 {dimension_numbers = #tpu.dot_dimension_numbers<[1], [0], [0], [1], [0, 0, 1, 1], [], []>} : vector<64x4xf32>, vector<4x128xf32>, vector<64x128xf32> -> vector<64x128xf32>
    %53 = arith.addf %44, %52 : vector<64x128xf32>
    %c1_i32 = arith.constant 1 : i32
    %54 = arith.addi %0, %c1_i32 : i32
    %c0_39 = arith.constant 0 : index
    %55 = arith.index_cast %54 : i32 to index
    %c0_40 = arith.constant 0 : index
    %c0_41 = arith.constant 0 : index
    %56 = vector.load %arg2[%c0_39, %55, %c0_40, %c0_41] : memref<1x9x9x4xf32, #tpu.memory_space<vmem>>, vector<1x8x8x4xf32>
    %57 = vector.shape_cast %56 : vector<1x8x8x4xf32> to vector<8x8x4xf32>
    %58 = vector.shape_cast %57 : vector<8x8x4xf32> to vector<64x4xf32>
    %c5 = arith.constant 5 : index
    %c0_42 = arith.constant 0 : index
    %c0_43 = arith.constant 0 : index
    %59 = vector.load %arg6[%c5, %c0_42, %c0_43] : memref<8x4x128xf32, #tpu.memory_space<vmem>>, vector<1x4x128xf32>
    %60 = vector.shape_cast %59 : vector<1x4x128xf32> to vector<4x128xf32>
    %cst_44 = arith.constant dense<0.000000e+00> : vector<64x128xf32>
    %61 = tpu.matmul %58, %60, %cst_44 {dimension_numbers = #tpu.dot_dimension_numbers<[1], [0], [0], [1], [0, 0, 1, 1], [], []>} : vector<64x4xf32>, vector<4x128xf32>, vector<64x128xf32> -> vector<64x128xf32>
    %62 = arith.addf %53, %61 : vector<64x128xf32>
    %c1_i32_45 = arith.constant 1 : i32
    %63 = arith.addi %0, %c1_i32_45 : i32
    %c0_46 = arith.constant 0 : index
    %64 = arith.index_cast %63 : i32 to index
    %c0_47 = arith.constant 0 : index
    %c0_48 = arith.constant 0 : index
    %65 = vector.load %arg3[%c0_46, %64, %c0_47, %c0_48] : memref<1x9x9x4xf32, #tpu.memory_space<vmem>>, vector<1x8x8x4xf32>
    %66 = vector.shape_cast %65 : vector<1x8x8x4xf32> to vector<8x8x4xf32>
    %67 = vector.shape_cast %66 : vector<8x8x4xf32> to vector<64x4xf32>
    %c6 = arith.constant 6 : index
    %c0_49 = arith.constant 0 : index
    %c0_50 = arith.constant 0 : index
    %68 = vector.load %arg6[%c6, %c0_49, %c0_50] : memref<8x4x128xf32, #tpu.memory_space<vmem>>, vector<1x4x128xf32>
    %69 = vector.shape_cast %68 : vector<1x4x128xf32> to vector<4x128xf32>
    %cst_51 = arith.constant dense<0.000000e+00> : vector<64x128xf32>
    %70 = tpu.matmul %67, %69, %cst_51 {dimension_numbers = #tpu.dot_dimension_numbers<[1], [0], [0], [1], [0, 0, 1, 1], [], []>} : vector<64x4xf32>, vector<4x128xf32>, vector<64x128xf32> -> vector<64x128xf32>
    %71 = arith.addf %62, %70 : vector<64x128xf32>
    %c1_i32_52 = arith.constant 1 : i32
    %72 = arith.addi %0, %c1_i32_52 : i32
    %c0_53 = arith.constant 0 : index
    %73 = arith.index_cast %72 : i32 to index
    %c1_54 = arith.constant 1 : index
    %c0_55 = arith.constant 0 : index
    %74 = vector.load %arg2[%c0_53, %73, %c1_54, %c0_55] : memref<1x9x9x4xf32, #tpu.memory_space<vmem>>, vector<1x8x8x4xf32>
    %75 = vector.shape_cast %74 : vector<1x8x8x4xf32> to vector<8x8x4xf32>
    %76 = vector.shape_cast %75 : vector<8x8x4xf32> to vector<64x4xf32>
    %c7 = arith.constant 7 : index
    %c0_56 = arith.constant 0 : index
    %c0_57 = arith.constant 0 : index
    %77 = vector.load %arg6[%c7, %c0_56, %c0_57] : memref<8x4x128xf32, #tpu.memory_space<vmem>>, vector<1x4x128xf32>
    %78 = vector.shape_cast %77 : vector<1x4x128xf32> to vector<4x128xf32>
    %cst_58 = arith.constant dense<0.000000e+00> : vector<64x128xf32>
    %79 = tpu.matmul %76, %78, %cst_58 {dimension_numbers = #tpu.dot_dimension_numbers<[1], [0], [0], [1], [0, 0, 1, 1], [], []>} : vector<64x4xf32>, vector<4x128xf32>, vector<64x128xf32> -> vector<64x128xf32>
    %80 = arith.addf %71, %79 : vector<64x128xf32>
    %81 = vector.shape_cast %80 : vector<64x128xf32> to vector<1x8x8x128xf32>
    %c0_59 = arith.constant 0 : index
    %c0_60 = arith.constant 0 : index
    %c0_61 = arith.constant 0 : index
    %c0_62 = arith.constant 0 : index
    %82 = vector.load %arg8[%c0_59, %c0_60, %c0_61, %c0_62] : memref<1x8x8x128xf32, #tpu.memory_space<vmem>>, vector<1x8x8x128xf32>
    tpu.vector_store %arg8[%c0_59, %c0_60, %c0_61, %c0_62], %81 {strides = array<i32>} : memref<1x8x8x128xf32, #tpu.memory_space<vmem>>, vector<1x8x8x128xf32>,
    %83 = vector.shape_cast %8 : vector<64x128xf32> to vector<1x8x8x128xf32>
    %c0_63 = arith.constant 0 : index
    %c0_64 = arith.constant 0 : index
    %c0_65 = arith.constant 0 : index
    %c0_66 = arith.constant 0 : index
    %84 = vector.load %arg9[%c0_63, %c0_64, %c0_65, %c0_66] : memref<1x8x8x128xf32, #tpu.memory_space<vmem>>, vector<1x8x8x128xf32>
    tpu.vector_store %arg9[%c0_63, %c0_64, %c0_65, %c0_66], %83 {strides = array<i32>} : memref<1x8x8x128xf32, #tpu.memory_space<vmem>>, vector<1x8x8x128xf32>,
    %cst_67 = arith.constant dense<0.000000e+00> : vector<128xf32>
    %85 = vector.multi_reduction <add>, %80, %cst_67 [0] : vector<64x128xf32> to vector<128xf32>
    %86 = vector.shape_cast %85 : vector<128xf32> to vector<1x128xf32>
    %87 = arith.mulf %80, %80 : vector<64x128xf32>
    %cst_68 = arith.constant dense<0.000000e+00> : vector<128xf32>
    %88 = vector.multi_reduction <add>, %87, %cst_68 [0] : vector<64x128xf32> to vector<128xf32>
    %89 = vector.shape_cast %88 : vector<128xf32> to vector<1x128xf32>
    %cst_69 = arith.constant dense<0.000000e+00> : vector<128xf32>
    %90 = vector.multi_reduction <add>, %8, %cst_69 [0] : vector<64x128xf32> to vector<128xf32>
    %91 = vector.shape_cast %90 : vector<128xf32> to vector<1x128xf32>
    %92 = arith.mulf %8, %8 : vector<64x128xf32>
    %cst_70 = arith.constant dense<0.000000e+00> : vector<128xf32>
    %93 = vector.multi_reduction <add>, %92, %cst_70 [0] : vector<64x128xf32> to vector<128xf32>
    %94 = vector.shape_cast %93 : vector<128xf32> to vector<1x128xf32>
    %cst_71 = arith.constant 0.000000e+00 : f32
    %95 = vector.broadcast %cst_71 : f32 to vector<4x128xf32>
    %96 = tpu.concatenate %86, %89, %91, %94, %95 in 0 : vector<1x128xf32>, vector<1x128xf32>, vector<1x128xf32>, vector<1x128xf32>, vector<4x128xf32> -> vector<8x128xf32>
    %97 = vector.shape_cast %96 : vector<8x128xf32> to vector<1x1x8x128xf32>
    %c0_72 = arith.constant 0 : index
    %c0_73 = arith.constant 0 : index
    %c0_74 = arith.constant 0 : index
    %c0_75 = arith.constant 0 : index
    %98 = vector.load %arg10[%c0_72, %c0_73, %c0_74, %c0_75] : memref<1x1x8x128xf32, #tpu.memory_space<vmem>>, vector<1x1x8x128xf32>
    tpu.vector_store %arg10[%c0_72, %c0_73, %c0_74, %c0_75], %97 {strides = array<i32>} : memref<1x1x8x128xf32, #tpu.memory_space<vmem>>, vector<1x1x8x128xf32>,
    return
  }
  func.func @transform_0(%arg0: i32, %arg1: i32) -> (i32, i32, i32, i32) {
    %c0_i32 = arith.constant 0 : i32
    %c0_i32_0 = arith.constant 0 : i32
    %c0_i32_1 = arith.constant 0 : i32
    %c0_i32_2 = arith.constant 0 : i32
    return %arg0, %c0_i32, %c0_i32_0, %c0_i32_1 : i32, i32, i32, i32
  }
  func.func @transform_1(%arg0: i32, %arg1: i32) -> (i32, i32, i32, i32) {
    %c0_i32 = arith.constant 0 : i32
    %c0_i32_0 = arith.constant 0 : i32
    %c0_i32_1 = arith.constant 0 : i32
    %c0_i32_2 = arith.constant 0 : i32
    return %arg0, %c0_i32, %c0_i32_0, %c0_i32_1 : i32, i32, i32, i32
  }
  func.func @transform_2(%arg0: i32, %arg1: i32) -> (i32, i32, i32, i32) {
    %c0_i32 = arith.constant 0 : i32
    %c0_i32_0 = arith.constant 0 : i32
    %c0_i32_1 = arith.constant 0 : i32
    %c0_i32_2 = arith.constant 0 : i32
    return %arg0, %c0_i32, %c0_i32_0, %c0_i32_1 : i32, i32, i32, i32
  }
  func.func @transform_3(%arg0: i32, %arg1: i32) -> (i32, i32, i32, i32) {
    %c0_i32 = arith.constant 0 : i32
    %c0_i32_0 = arith.constant 0 : i32
    %c0_i32_1 = arith.constant 0 : i32
    %c0_i32_2 = arith.constant 0 : i32
    return %arg0, %c0_i32, %c0_i32_0, %c0_i32_1 : i32, i32, i32, i32
  }
  func.func @transform_4(%arg0: i32, %arg1: i32) -> (i32, i32, i32) {
    %c0_i32 = arith.constant 0 : i32
    %c0_i32_0 = arith.constant 0 : i32
    %c0_i32_1 = arith.constant 0 : i32
    %c0_i32_2 = arith.constant 0 : i32
    return %c0_i32, %c0_i32_0, %c0_i32_1 : i32, i32, i32
  }
  func.func @transform_5(%arg0: i32, %arg1: i32) -> (i32, i32) {
    %c0_i32 = arith.constant 0 : i32
    %c0_i32_0 = arith.constant 0 : i32
    %c0_i32_1 = arith.constant 0 : i32
    return %c0_i32, %c0_i32_0 : i32, i32
  }
  func.func @transform_6(%arg0: i32, %arg1: i32) -> (i32, i32, i32, i32) {
    %c0_i32 = arith.constant 0 : i32
    %c0_i32_0 = arith.constant 0 : i32
    %c0_i32_1 = arith.constant 0 : i32
    return %arg0, %arg1, %c0_i32, %c0_i32_0 : i32, i32, i32, i32
  }
  func.func @transform_7(%arg0: i32, %arg1: i32) -> (i32, i32, i32, i32) {
    %c0_i32 = arith.constant 0 : i32
    %c0_i32_0 = arith.constant 0 : i32
    %c0_i32_1 = arith.constant 0 : i32
    return %arg0, %arg1, %c0_i32, %c0_i32_0 : i32, i32, i32, i32
  }
  func.func @transform_8(%arg0: i32, %arg1: i32) -> (i32, i32, i32, i32) {
    %c0_i32 = arith.constant 0 : i32
    %c0_i32_0 = arith.constant 0 : i32
    %c0_i32_1 = arith.constant 0 : i32
    return %arg0, %arg1, %c0_i32, %c0_i32_0 : i32, i32, i32, i32
  }
}

module attributes {stable_mosaic.version = 11 : i64} {
  func.func @conv2_kernel(%arg0: i32, %arg1: i32, %arg2: memref<1x8x8x128xf32, #tpu.memory_space<vmem>>, %arg3: memref<1x128xf32, #tpu.memory_space<vmem>>, %arg4: memref<1x128xf32, #tpu.memory_space<vmem>>, %arg5: memref<9x128x128xf32, #tpu.memory_space<vmem>>, %arg6: memref<1x8x8x128xf32, #tpu.memory_space<vmem>>, %arg7: memref<1x1x8x128xf32, #tpu.memory_space<vmem>>, %arg8: memref<10x10x128xf32, #tpu.memory_space<vmem>>) attributes {dimension_semantics = [#tpu.dimension_semantics<parallel>, #tpu.dimension_semantics<parallel>], iteration_bounds = array<i64: 2, 1>, scalar_prefetch = 0 : i64, scratch_operands = 1 : i64, tpu.core_type = #tpu.core_type<tc>, window_params = [{transform_indices = @transform_0, window_bounds = array<i64: 1, 8, 8, 128>}, {pipeline_mode = #tpu.pipeline_mode<synchronous>, transform_indices = @transform_1, window_bounds = array<i64: 1, 128>}, {pipeline_mode = #tpu.pipeline_mode<synchronous>, transform_indices = @transform_2, window_bounds = array<i64: 1, 128>}, {pipeline_mode = #tpu.pipeline_mode<synchronous>, transform_indices = @transform_3, window_bounds = array<i64: 9, 128, 128>}, {transform_indices = @transform_4, window_bounds = array<i64: 1, 8, 8, 128>}, {transform_indices = @transform_5, window_bounds = array<i64: 1, 1, 8, 128>}]} {
    %c8_i32 = arith.constant 8 : i32
    %0 = arith.muli %arg1, %c8_i32 : i32
    %c0 = arith.constant 0 : index
    %c0_0 = arith.constant 0 : index
    %1 = vector.load %arg3[%c0, %c0_0] : memref<1x128xf32, #tpu.memory_space<vmem>>, vector<1x128xf32>
    %2 = vector.shape_cast %1 : vector<1x128xf32> to vector<1x1x128xf32>
    %c0_1 = arith.constant 0 : index
    %c0_2 = arith.constant 0 : index
    %3 = vector.load %arg4[%c0_1, %c0_2] : memref<1x128xf32, #tpu.memory_space<vmem>>, vector<1x128xf32>
    %4 = vector.shape_cast %3 : vector<1x128xf32> to vector<1x1x128xf32>
    %cst = arith.constant 0.000000e+00 : f32
    %5 = vector.broadcast %cst : f32 to vector<10x10x128xf32>
    %c0_3 = arith.constant 0 : index
    %c0_4 = arith.constant 0 : index
    %c0_5 = arith.constant 0 : index
    %6 = vector.load %arg8[%c0_3, %c0_4, %c0_5] : memref<10x10x128xf32, #tpu.memory_space<vmem>>, vector<10x10x128xf32>
    tpu.vector_store %arg8[%c0_3, %c0_4, %c0_5], %5 {strides = array<i32>} : memref<10x10x128xf32, #tpu.memory_space<vmem>>, vector<10x10x128xf32>,
    %c0_6 = arith.constant 0 : index
    %7 = arith.index_cast %0 : i32 to index
    %c0_7 = arith.constant 0 : index
    %c0_8 = arith.constant 0 : index
    %8 = vector.load %arg2[%c0_6, %7, %c0_7, %c0_8] : memref<1x8x8x128xf32, #tpu.memory_space<vmem>>, vector<1x8x8x128xf32>
    %9 = vector.shape_cast %8 : vector<1x8x8x128xf32> to vector<8x8x128xf32>
    %10 = vector.broadcast %2 : vector<1x1x128xf32> to vector<8x8x128xf32>
    %11 = arith.mulf %9, %10 : vector<8x8x128xf32>
    %12 = vector.broadcast %4 : vector<1x1x128xf32> to vector<8x8x128xf32>
    %13 = arith.addf %11, %12 : vector<8x8x128xf32>
    %cst_9 = arith.constant 0.000000e+00 : f32
    %14 = vector.broadcast %cst_9 : f32 to vector<8x8x128xf32>
    %15 = arith.maximumf %13, %14 : vector<8x8x128xf32>
    %c1 = arith.constant 1 : index
    %c1_10 = arith.constant 1 : index
    %c0_11 = arith.constant 0 : index
    %16 = vector.load %arg8[%c1, %c1_10, %c0_11] : memref<10x10x128xf32, #tpu.memory_space<vmem>>, vector<8x8x128xf32>
    tpu.vector_store %arg8[%c1, %c1_10, %c0_11], %15 {strides = array<i32>} : memref<10x10x128xf32, #tpu.memory_space<vmem>>, vector<8x8x128xf32>,
    %c0_i32 = arith.constant 0 : i32
    %17 = arith.cmpi sgt, %arg1, %c0_i32 : i32
    %18 = arith.extui %17 : i1 to i32
    %c0_i32_12 = arith.constant 0 : i32
    %19 = arith.cmpi ne, %18, %c0_i32_12 : i32
    scf.if %19 {
      %c1_i32 = arith.constant 1 : i32
      %89 = arith.subi %0, %c1_i32 : i32
      %c0_83 = arith.constant 0 : index
      %90 = arith.index_cast %89 : i32 to index
      %c0_84 = arith.constant 0 : index
      %c0_85 = arith.constant 0 : index
      %91 = vector.load %arg2[%c0_83, %90, %c0_84, %c0_85] : memref<1x8x8x128xf32, #tpu.memory_space<vmem>>, vector<1x1x8x128xf32>
      %92 = vector.shape_cast %91 : vector<1x1x8x128xf32> to vector<1x8x128xf32>
      %93 = vector.broadcast %2 : vector<1x1x128xf32> to vector<1x8x128xf32>
      %94 = arith.mulf %92, %93 : vector<1x8x128xf32>
      %95 = vector.broadcast %4 : vector<1x1x128xf32> to vector<1x8x128xf32>
      %96 = arith.addf %94, %95 : vector<1x8x128xf32>
      %cst_86 = arith.constant 0.000000e+00 : f32
      %97 = vector.broadcast %cst_86 : f32 to vector<1x8x128xf32>
      %98 = arith.maximumf %96, %97 : vector<1x8x128xf32>
      %c0_87 = arith.constant 0 : index
      %c1_88 = arith.constant 1 : index
      %c0_89 = arith.constant 0 : index
      %99 = vector.load %arg8[%c0_87, %c1_88, %c0_89] : memref<10x10x128xf32, #tpu.memory_space<vmem>>, vector<1x8x128xf32>
      tpu.vector_store %arg8[%c0_87, %c1_88, %c0_89], %98 {strides = array<i32>} : memref<10x10x128xf32, #tpu.memory_space<vmem>>, vector<1x8x128xf32>,
    } else {
    }
    %c0_i32_13 = arith.constant 0 : i32
    %20 = arith.cmpi slt, %arg1, %c0_i32_13 : i32
    %21 = arith.extui %20 : i1 to i32
    %c0_i32_14 = arith.constant 0 : i32
    %22 = arith.cmpi ne, %21, %c0_i32_14 : i32
    scf.if %22 {
      %c8_i32_83 = arith.constant 8 : i32
      %89 = arith.addi %0, %c8_i32_83 : i32
      %c0_84 = arith.constant 0 : index
      %90 = arith.index_cast %89 : i32 to index
      %c0_85 = arith.constant 0 : index
      %c0_86 = arith.constant 0 : index
      %91 = vector.load %arg2[%c0_84, %90, %c0_85, %c0_86] : memref<1x8x8x128xf32, #tpu.memory_space<vmem>>, vector<1x1x8x128xf32>
      %92 = vector.shape_cast %91 : vector<1x1x8x128xf32> to vector<1x8x128xf32>
      %93 = vector.broadcast %2 : vector<1x1x128xf32> to vector<1x8x128xf32>
      %94 = arith.mulf %92, %93 : vector<1x8x128xf32>
      %95 = vector.broadcast %4 : vector<1x1x128xf32> to vector<1x8x128xf32>
      %96 = arith.addf %94, %95 : vector<1x8x128xf32>
      %cst_87 = arith.constant 0.000000e+00 : f32
      %97 = vector.broadcast %cst_87 : f32 to vector<1x8x128xf32>
      %98 = arith.maximumf %96, %97 : vector<1x8x128xf32>
      %c9 = arith.constant 9 : index
      %c1_88 = arith.constant 1 : index
      %c0_89 = arith.constant 0 : index
      %99 = vector.load %arg8[%c9, %c1_88, %c0_89] : memref<10x10x128xf32, #tpu.memory_space<vmem>>, vector<1x8x128xf32>
      tpu.vector_store %arg8[%c9, %c1_88, %c0_89], %98 {strides = array<i32>} : memref<10x10x128xf32, #tpu.memory_space<vmem>>, vector<1x8x128xf32>,
    } else {
    }
    %cst_15 = arith.constant 0.000000e+00 : f32
    %23 = vector.broadcast %cst_15 : f32 to vector<64x128xf32>
    %c0_16 = arith.constant 0 : index
    %c0_17 = arith.constant 0 : index
    %c0_18 = arith.constant 0 : index
    %24 = vector.load %arg8[%c0_16, %c0_17, %c0_18] : memref<10x10x128xf32, #tpu.memory_space<vmem>>, vector<8x8x128xf32>
    %25 = vector.shape_cast %24 : vector<8x8x128xf32> to vector<64x128xf32>
    %c0_19 = arith.constant 0 : index
    %c0_20 = arith.constant 0 : index
    %c0_21 = arith.constant 0 : index
    %26 = vector.load %arg5[%c0_19, %c0_20, %c0_21] : memref<9x128x128xf32, #tpu.memory_space<vmem>>, vector<1x128x128xf32>
    %27 = vector.shape_cast %26 : vector<1x128x128xf32> to vector<128x128xf32>
    %cst_22 = arith.constant dense<0.000000e+00> : vector<64x128xf32>
    %28 = tpu.matmul %25, %27, %cst_22 {dimension_numbers = #tpu.dot_dimension_numbers<[1], [0], [0], [1], [0, 0, 1, 1], [], []>} : vector<64x128xf32>, vector<128x128xf32>, vector<64x128xf32> -> vector<64x128xf32>
    %29 = arith.addf %23, %28 : vector<64x128xf32>
    %c0_23 = arith.constant 0 : index
    %c1_24 = arith.constant 1 : index
    %c0_25 = arith.constant 0 : index
    %30 = vector.load %arg8[%c0_23, %c1_24, %c0_25] : memref<10x10x128xf32, #tpu.memory_space<vmem>>, vector<8x8x128xf32>
    %31 = vector.shape_cast %30 : vector<8x8x128xf32> to vector<64x128xf32>
    %c1_26 = arith.constant 1 : index
    %c0_27 = arith.constant 0 : index
    %c0_28 = arith.constant 0 : index
    %32 = vector.load %arg5[%c1_26, %c0_27, %c0_28] : memref<9x128x128xf32, #tpu.memory_space<vmem>>, vector<1x128x128xf32>
    %33 = vector.shape_cast %32 : vector<1x128x128xf32> to vector<128x128xf32>
    %cst_29 = arith.constant dense<0.000000e+00> : vector<64x128xf32>
    %34 = tpu.matmul %31, %33, %cst_29 {dimension_numbers = #tpu.dot_dimension_numbers<[1], [0], [0], [1], [0, 0, 1, 1], [], []>} : vector<64x128xf32>, vector<128x128xf32>, vector<64x128xf32> -> vector<64x128xf32>
    %35 = arith.addf %29, %34 : vector<64x128xf32>
    %c0_30 = arith.constant 0 : index
    %c2 = arith.constant 2 : index
    %c0_31 = arith.constant 0 : index
    %36 = vector.load %arg8[%c0_30, %c2, %c0_31] : memref<10x10x128xf32, #tpu.memory_space<vmem>>, vector<8x8x128xf32>
    %37 = vector.shape_cast %36 : vector<8x8x128xf32> to vector<64x128xf32>
    %c2_32 = arith.constant 2 : index
    %c0_33 = arith.constant 0 : index
    %c0_34 = arith.constant 0 : index
    %38 = vector.load %arg5[%c2_32, %c0_33, %c0_34] : memref<9x128x128xf32, #tpu.memory_space<vmem>>, vector<1x128x128xf32>
    %39 = vector.shape_cast %38 : vector<1x128x128xf32> to vector<128x128xf32>
    %cst_35 = arith.constant dense<0.000000e+00> : vector<64x128xf32>
    %40 = tpu.matmul %37, %39, %cst_35 {dimension_numbers = #tpu.dot_dimension_numbers<[1], [0], [0], [1], [0, 0, 1, 1], [], []>} : vector<64x128xf32>, vector<128x128xf32>, vector<64x128xf32> -> vector<64x128xf32>
    %41 = arith.addf %35, %40 : vector<64x128xf32>
    %c1_36 = arith.constant 1 : index
    %c0_37 = arith.constant 0 : index
    %c0_38 = arith.constant 0 : index
    %42 = vector.load %arg8[%c1_36, %c0_37, %c0_38] : memref<10x10x128xf32, #tpu.memory_space<vmem>>, vector<8x8x128xf32>
    %43 = vector.shape_cast %42 : vector<8x8x128xf32> to vector<64x128xf32>
    %c3 = arith.constant 3 : index
    %c0_39 = arith.constant 0 : index
    %c0_40 = arith.constant 0 : index
    %44 = vector.load %arg5[%c3, %c0_39, %c0_40] : memref<9x128x128xf32, #tpu.memory_space<vmem>>, vector<1x128x128xf32>
    %45 = vector.shape_cast %44 : vector<1x128x128xf32> to vector<128x128xf32>
    %cst_41 = arith.constant dense<0.000000e+00> : vector<64x128xf32>
    %46 = tpu.matmul %43, %45, %cst_41 {dimension_numbers = #tpu.dot_dimension_numbers<[1], [0], [0], [1], [0, 0, 1, 1], [], []>} : vector<64x128xf32>, vector<128x128xf32>, vector<64x128xf32> -> vector<64x128xf32>
    %47 = arith.addf %41, %46 : vector<64x128xf32>
    %c1_42 = arith.constant 1 : index
    %c1_43 = arith.constant 1 : index
    %c0_44 = arith.constant 0 : index
    %48 = vector.load %arg8[%c1_42, %c1_43, %c0_44] : memref<10x10x128xf32, #tpu.memory_space<vmem>>, vector<8x8x128xf32>
    %49 = vector.shape_cast %48 : vector<8x8x128xf32> to vector<64x128xf32>
    %c4 = arith.constant 4 : index
    %c0_45 = arith.constant 0 : index
    %c0_46 = arith.constant 0 : index
    %50 = vector.load %arg5[%c4, %c0_45, %c0_46] : memref<9x128x128xf32, #tpu.memory_space<vmem>>, vector<1x128x128xf32>
    %51 = vector.shape_cast %50 : vector<1x128x128xf32> to vector<128x128xf32>
    %cst_47 = arith.constant dense<0.000000e+00> : vector<64x128xf32>
    %52 = tpu.matmul %49, %51, %cst_47 {dimension_numbers = #tpu.dot_dimension_numbers<[1], [0], [0], [1], [0, 0, 1, 1], [], []>} : vector<64x128xf32>, vector<128x128xf32>, vector<64x128xf32> -> vector<64x128xf32>
    %53 = arith.addf %47, %52 : vector<64x128xf32>
    %c1_48 = arith.constant 1 : index
    %c2_49 = arith.constant 2 : index
    %c0_50 = arith.constant 0 : index
    %54 = vector.load %arg8[%c1_48, %c2_49, %c0_50] : memref<10x10x128xf32, #tpu.memory_space<vmem>>, vector<8x8x128xf32>
    %55 = vector.shape_cast %54 : vector<8x8x128xf32> to vector<64x128xf32>
    %c5 = arith.constant 5 : index
    %c0_51 = arith.constant 0 : index
    %c0_52 = arith.constant 0 : index
    %56 = vector.load %arg5[%c5, %c0_51, %c0_52] : memref<9x128x128xf32, #tpu.memory_space<vmem>>, vector<1x128x128xf32>
    %57 = vector.shape_cast %56 : vector<1x128x128xf32> to vector<128x128xf32>
    %cst_53 = arith.constant dense<0.000000e+00> : vector<64x128xf32>
    %58 = tpu.matmul %55, %57, %cst_53 {dimension_numbers = #tpu.dot_dimension_numbers<[1], [0], [0], [1], [0, 0, 1, 1], [], []>} : vector<64x128xf32>, vector<128x128xf32>, vector<64x128xf32> -> vector<64x128xf32>
    %59 = arith.addf %53, %58 : vector<64x128xf32>
    %c2_54 = arith.constant 2 : index
    %c0_55 = arith.constant 0 : index
    %c0_56 = arith.constant 0 : index
    %60 = vector.load %arg8[%c2_54, %c0_55, %c0_56] : memref<10x10x128xf32, #tpu.memory_space<vmem>>, vector<8x8x128xf32>
    %61 = vector.shape_cast %60 : vector<8x8x128xf32> to vector<64x128xf32>
    %c6 = arith.constant 6 : index
    %c0_57 = arith.constant 0 : index
    %c0_58 = arith.constant 0 : index
    %62 = vector.load %arg5[%c6, %c0_57, %c0_58] : memref<9x128x128xf32, #tpu.memory_space<vmem>>, vector<1x128x128xf32>
    %63 = vector.shape_cast %62 : vector<1x128x128xf32> to vector<128x128xf32>
    %cst_59 = arith.constant dense<0.000000e+00> : vector<64x128xf32>
    %64 = tpu.matmul %61, %63, %cst_59 {dimension_numbers = #tpu.dot_dimension_numbers<[1], [0], [0], [1], [0, 0, 1, 1], [], []>} : vector<64x128xf32>, vector<128x128xf32>, vector<64x128xf32> -> vector<64x128xf32>
    %65 = arith.addf %59, %64 : vector<64x128xf32>
    %c2_60 = arith.constant 2 : index
    %c1_61 = arith.constant 1 : index
    %c0_62 = arith.constant 0 : index
    %66 = vector.load %arg8[%c2_60, %c1_61, %c0_62] : memref<10x10x128xf32, #tpu.memory_space<vmem>>, vector<8x8x128xf32>
    %67 = vector.shape_cast %66 : vector<8x8x128xf32> to vector<64x128xf32>
    %c7 = arith.constant 7 : index
    %c0_63 = arith.constant 0 : index
    %c0_64 = arith.constant 0 : index
    %68 = vector.load %arg5[%c7, %c0_63, %c0_64] : memref<9x128x128xf32, #tpu.memory_space<vmem>>, vector<1x128x128xf32>
    %69 = vector.shape_cast %68 : vector<1x128x128xf32> to vector<128x128xf32>
    %cst_65 = arith.constant dense<0.000000e+00> : vector<64x128xf32>
    %70 = tpu.matmul %67, %69, %cst_65 {dimension_numbers = #tpu.dot_dimension_numbers<[1], [0], [0], [1], [0, 0, 1, 1], [], []>} : vector<64x128xf32>, vector<128x128xf32>, vector<64x128xf32> -> vector<64x128xf32>
    %71 = arith.addf %65, %70 : vector<64x128xf32>
    %c2_66 = arith.constant 2 : index
    %c2_67 = arith.constant 2 : index
    %c0_68 = arith.constant 0 : index
    %72 = vector.load %arg8[%c2_66, %c2_67, %c0_68] : memref<10x10x128xf32, #tpu.memory_space<vmem>>, vector<8x8x128xf32>
    %73 = vector.shape_cast %72 : vector<8x8x128xf32> to vector<64x128xf32>
    %c8 = arith.constant 8 : index
    %c0_69 = arith.constant 0 : index
    %c0_70 = arith.constant 0 : index
    %74 = vector.load %arg5[%c8, %c0_69, %c0_70] : memref<9x128x128xf32, #tpu.memory_space<vmem>>, vector<1x128x128xf32>
    %75 = vector.shape_cast %74 : vector<1x128x128xf32> to vector<128x128xf32>
    %cst_71 = arith.constant dense<0.000000e+00> : vector<64x128xf32>
    %76 = tpu.matmul %73, %75, %cst_71 {dimension_numbers = #tpu.dot_dimension_numbers<[1], [0], [0], [1], [0, 0, 1, 1], [], []>} : vector<64x128xf32>, vector<128x128xf32>, vector<64x128xf32> -> vector<64x128xf32>
    %77 = arith.addf %71, %76 : vector<64x128xf32>
    %78 = vector.shape_cast %77 : vector<64x128xf32> to vector<1x8x8x128xf32>
    %c0_72 = arith.constant 0 : index
    %c0_73 = arith.constant 0 : index
    %c0_74 = arith.constant 0 : index
    %c0_75 = arith.constant 0 : index
    %79 = vector.load %arg6[%c0_72, %c0_73, %c0_74, %c0_75] : memref<1x8x8x128xf32, #tpu.memory_space<vmem>>, vector<1x8x8x128xf32>
    tpu.vector_store %arg6[%c0_72, %c0_73, %c0_74, %c0_75], %78 {strides = array<i32>} : memref<1x8x8x128xf32, #tpu.memory_space<vmem>>, vector<1x8x8x128xf32>,
    %cst_76 = arith.constant dense<0.000000e+00> : vector<128xf32>
    %80 = vector.multi_reduction <add>, %77, %cst_76 [0] : vector<64x128xf32> to vector<128xf32>
    %81 = vector.shape_cast %80 : vector<128xf32> to vector<1x128xf32>
    %82 = arith.mulf %77, %77 : vector<64x128xf32>
    %cst_77 = arith.constant dense<0.000000e+00> : vector<128xf32>
    %83 = vector.multi_reduction <add>, %82, %cst_77 [0] : vector<64x128xf32> to vector<128xf32>
    %84 = vector.shape_cast %83 : vector<128xf32> to vector<1x128xf32>
    %cst_78 = arith.constant 0.000000e+00 : f32
    %85 = vector.broadcast %cst_78 : f32 to vector<6x128xf32>
    %86 = tpu.concatenate %81, %84, %85 in 0 : vector<1x128xf32>, vector<1x128xf32>, vector<6x128xf32> -> vector<8x128xf32>
    %87 = vector.shape_cast %86 : vector<8x128xf32> to vector<1x1x8x128xf32>
    %c0_79 = arith.constant 0 : index
    %c0_80 = arith.constant 0 : index
    %c0_81 = arith.constant 0 : index
    %c0_82 = arith.constant 0 : index
    %88 = vector.load %arg7[%c0_79, %c0_80, %c0_81, %c0_82] : memref<1x1x8x128xf32, #tpu.memory_space<vmem>>, vector<1x1x8x128xf32>
    tpu.vector_store %arg7[%c0_79, %c0_80, %c0_81, %c0_82], %87 {strides = array<i32>} : memref<1x1x8x128xf32, #tpu.memory_space<vmem>>, vector<1x1x8x128xf32>,
    return
  }
  func.func @transform_0(%arg0: i32, %arg1: i32) -> (i32, i32, i32, i32) {
    %c0_i32 = arith.constant 0 : i32
    %c0_i32_0 = arith.constant 0 : i32
    %c0_i32_1 = arith.constant 0 : i32
    %c0_i32_2 = arith.constant 0 : i32
    return %arg0, %c0_i32, %c0_i32_0, %c0_i32_1 : i32, i32, i32, i32
  }
  func.func @transform_1(%arg0: i32, %arg1: i32) -> (i32, i32) {
    %c0_i32 = arith.constant 0 : i32
    %c0_i32_0 = arith.constant 0 : i32
    %c0_i32_1 = arith.constant 0 : i32
    return %c0_i32, %c0_i32_0 : i32, i32
  }
  func.func @transform_2(%arg0: i32, %arg1: i32) -> (i32, i32) {
    %c0_i32 = arith.constant 0 : i32
    %c0_i32_0 = arith.constant 0 : i32
    %c0_i32_1 = arith.constant 0 : i32
    return %c0_i32, %c0_i32_0 : i32, i32
  }
  func.func @transform_3(%arg0: i32, %arg1: i32) -> (i32, i32, i32) {
    %c0_i32 = arith.constant 0 : i32
    %c0_i32_0 = arith.constant 0 : i32
    %c0_i32_1 = arith.constant 0 : i32
    %c0_i32_2 = arith.constant 0 : i32
    return %c0_i32, %c0_i32_0, %c0_i32_1 : i32, i32, i32
  }
  func.func @transform_4(%arg0: i32, %arg1: i32) -> (i32, i32, i32, i32) {
    %c0_i32 = arith.constant 0 : i32
    %c0_i32_0 = arith.constant 0 : i32
    %c0_i32_1 = arith.constant 0 : i32
    return %arg0, %arg1, %c0_i32, %c0_i32_0 : i32, i32, i32, i32
  }
  func.func @transform_5(%arg0: i32, %arg1: i32) -> (i32, i32, i32, i32) {
    %c0_i32 = arith.constant 0 : i32
    %c0_i32_0 = arith.constant 0 : i32
    %c0_i32_1 = arith.constant 0 : i32
    return %arg0, %arg1, %c0_i32, %c0_i32_0 : i32, i32, i32, i32
  }
}

module attributes {stable_mosaic.version = 11 : i64} {
  func.func @epilogue_kernel(%arg0: i32, %arg1: memref<128x128xf32, #tpu.memory_space<vmem>>, %arg2: memref<128x128xf32, #tpu.memory_space<vmem>>, %arg3: memref<1x128xf32, #tpu.memory_space<vmem>>, %arg4: memref<1x128xf32, #tpu.memory_space<vmem>>, %arg5: memref<1x128xf32, #tpu.memory_space<vmem>>, %arg6: memref<1x128xf32, #tpu.memory_space<vmem>>, %arg7: memref<128x128xf32, #tpu.memory_space<vmem>>) attributes {dimension_semantics = [#tpu.dimension_semantics<parallel>], iteration_bounds = array<i64: 1>, scalar_prefetch = 0 : i64, scratch_operands = 0 : i64, tpu.core_type = #tpu.core_type<tc>, window_params = [{transform_indices = @transform_0, window_bounds = array<i64: 128, 128>}, {transform_indices = @transform_1, window_bounds = array<i64: 128, 128>}, {pipeline_mode = #tpu.pipeline_mode<synchronous>, transform_indices = @transform_2, window_bounds = array<i64: 1, 128>}, {pipeline_mode = #tpu.pipeline_mode<synchronous>, transform_indices = @transform_3, window_bounds = array<i64: 1, 128>}, {pipeline_mode = #tpu.pipeline_mode<synchronous>, transform_indices = @transform_4, window_bounds = array<i64: 1, 128>}, {pipeline_mode = #tpu.pipeline_mode<synchronous>, transform_indices = @transform_5, window_bounds = array<i64: 1, 128>}, {transform_indices = @transform_6, window_bounds = array<i64: 128, 128>}]} {
    %c0 = arith.constant 0 : index
    %c0_0 = arith.constant 0 : index
    %0 = vector.load %arg1[%c0, %c0_0] : memref<128x128xf32, #tpu.memory_space<vmem>>, vector<128x128xf32>
    %c0_1 = arith.constant 0 : index
    %c0_2 = arith.constant 0 : index
    %1 = vector.load %arg3[%c0_1, %c0_2] : memref<1x128xf32, #tpu.memory_space<vmem>>, vector<1x128xf32>
    %2 = vector.broadcast %1 : vector<1x128xf32> to vector<128x128xf32>
    %3 = arith.mulf %0, %2 : vector<128x128xf32>
    %c0_3 = arith.constant 0 : index
    %c0_4 = arith.constant 0 : index
    %4 = vector.load %arg4[%c0_3, %c0_4] : memref<1x128xf32, #tpu.memory_space<vmem>>, vector<1x128xf32>
    %5 = vector.broadcast %4 : vector<1x128xf32> to vector<128x128xf32>
    %6 = arith.addf %3, %5 : vector<128x128xf32>
    %c0_5 = arith.constant 0 : index
    %c0_6 = arith.constant 0 : index
    %7 = vector.load %arg2[%c0_5, %c0_6] : memref<128x128xf32, #tpu.memory_space<vmem>>, vector<128x128xf32>
    %c0_7 = arith.constant 0 : index
    %c0_8 = arith.constant 0 : index
    %8 = vector.load %arg5[%c0_7, %c0_8] : memref<1x128xf32, #tpu.memory_space<vmem>>, vector<1x128xf32>
    %9 = vector.broadcast %8 : vector<1x128xf32> to vector<128x128xf32>
    %10 = arith.mulf %7, %9 : vector<128x128xf32>
    %11 = arith.addf %6, %10 : vector<128x128xf32>
    %c0_9 = arith.constant 0 : index
    %c0_10 = arith.constant 0 : index
    %12 = vector.load %arg6[%c0_9, %c0_10] : memref<1x128xf32, #tpu.memory_space<vmem>>, vector<1x128xf32>
    %13 = vector.broadcast %12 : vector<1x128xf32> to vector<128x128xf32>
    %14 = arith.addf %11, %13 : vector<128x128xf32>
    %cst = arith.constant 0.000000e+00 : f32
    %15 = vector.broadcast %cst : f32 to vector<128x128xf32>
    %16 = arith.maximumf %14, %15 : vector<128x128xf32>
    %c0_11 = arith.constant 0 : index
    %c0_12 = arith.constant 0 : index
    %17 = vector.load %arg7[%c0_11, %c0_12] : memref<128x128xf32, #tpu.memory_space<vmem>>, vector<128x128xf32>
    tpu.vector_store %arg7[%c0_11, %c0_12], %16 {strides = array<i32>} : memref<128x128xf32, #tpu.memory_space<vmem>>, vector<128x128xf32>,
    return
  }
  func.func @transform_0(%arg0: i32) -> (i32, i32) {
    %c0_i32 = arith.constant 0 : i32
    %c0_i32_0 = arith.constant 0 : i32
    return %arg0, %c0_i32 : i32, i32
  }
  func.func @transform_1(%arg0: i32) -> (i32, i32) {
    %c0_i32 = arith.constant 0 : i32
    %c0_i32_0 = arith.constant 0 : i32
    return %arg0, %c0_i32 : i32, i32
  }
  func.func @transform_2(%arg0: i32) -> (i32, i32) {
    %c0_i32 = arith.constant 0 : i32
    %c0_i32_0 = arith.constant 0 : i32
    %c0_i32_1 = arith.constant 0 : i32
    return %c0_i32, %c0_i32_0 : i32, i32
  }
  func.func @transform_3(%arg0: i32) -> (i32, i32) {
    %c0_i32 = arith.constant 0 : i32
    %c0_i32_0 = arith.constant 0 : i32
    %c0_i32_1 = arith.constant 0 : i32
    return %c0_i32, %c0_i32_0 : i32, i32
  }
  func.func @transform_4(%arg0: i32) -> (i32, i32) {
    %c0_i32 = arith.constant 0 : i32
    %c0_i32_0 = arith.constant 0 : i32
    %c0_i32_1 = arith.constant 0 : i32
    return %c0_i32, %c0_i32_0 : i32, i32
  }
  func.func @transform_5(%arg0: i32) -> (i32, i32) {
    %c0_i32 = arith.constant 0 : i32
    %c0_i32_0 = arith.constant 0 : i32
    %c0_i32_1 = arith.constant 0 : i32
    return %c0_i32, %c0_i32_0 : i32, i32
  }
  func.func @transform_6(%arg0: i32) -> (i32, i32) {
    %c0_i32 = arith.constant 0 : i32
    %c0_i32_0 = arith.constant 0 : i32
    return %arg0, %c0_i32 : i32, i32
  }
}

</mosaic_0001>

<llo_original>
// kernel: building_block_downsample.5
$region0: #{building_block_downsample.5}
  #allocation0 [shape = 'u32[]', space=smem, size = 0x4, offset = 0x4, fixed_abs, tag = 'smem constant byte address 0x4 - core index']
  #allocation1 [shape = 'u32[72,128]{1,0:T(1,128)}', space=vmem, size = 0x9000, scoped, tag = 'internal scratch']
  %s0 = inlined_call_operand.vmem [shape: f32[128,128], index: 0, kind: input, shape index: {}]
  %s1 = inlined_call_operand.vmem [shape: f32[128,128], index: 1, kind: input, shape index: {}]
  %s2 = inlined_call_operand.vmem [shape: f32[1,128], index: 2, kind: input, shape index: {}]
  %s3 = inlined_call_operand.vmem [shape: f32[1,128], index: 3, kind: input, shape index: {}]
  %s4 = inlined_call_operand.vmem [shape: f32[1,128], index: 4, kind: input, shape index: {}]
  %s5 = inlined_call_operand.vmem [shape: f32[1,128], index: 5, kind: input, shape index: {}]
  %s6 = inlined_call_operand.vmem [shape: f32[128,128], index: 6, kind: output, shape index: {}]
  %s7 = sld [smem:[#allocation0]]
  $region34: #{building_block_downsample.5} parent=0
    _
  %s9 = ssub.s32 1, %s7
  %s10 = scalar_select 0, %s9, %s7
  // Predicated region
  $region2: #{building_block_downsample.5} parent=0 // pred_check
    _
  $region3: #{building_block_downsample.5} parent=0 // pred_check_branch
    %12 = sbr.rel (0) target = $region5
  $region4: #{building_block_downsample.5} parent=0 // pred_region
    _
  $region5: #{building_block_downsample.5} parent=0 // pred_fallthru
    _
  // Predicated region
  $region6: #{building_block_downsample.5} parent=0 // pred_check
    _
  $region7: #{building_block_downsample.5} parent=0 // pred_check_branch
    %14 = sbr.rel (0) target = $region9
  $region8: #{building_block_downsample.5} parent=0 // pred_region
    _
  $region9: #{building_block_downsample.5} parent=0 // pred_fallthru
    _
  // Predicated region
  $region10: #{building_block_downsample.5} parent=0 // pred_check
    _
  $region11: #{building_block_downsample.5} parent=0 // pred_check_branch
    %16 = sbr.rel (0) target = $region13
  $region12: #{building_block_downsample.5} parent=0 // pred_region
    _
  $region13: #{building_block_downsample.5} parent=0 // pred_fallthru
    _
  // Predicated region
  $region14: #{building_block_downsample.5} parent=0 // pred_check
    _
  $region15: #{building_block_downsample.5} parent=0 // pred_check_branch
    %18 = sbr.rel (0) target = $region17
  $region16: #{building_block_downsample.5} parent=0 // pred_region
    _
  $region17: #{building_block_downsample.5} parent=0 // pred_fallthru
    _
  // Predicated region
  $region18: #{building_block_downsample.5} parent=0 // pred_check
    _
  $region19: #{building_block_downsample.5} parent=0 // pred_check_branch
    %20 = sbr.rel (0) target = $region21
  $region20: #{building_block_downsample.5} parent=0 // pred_region
    _
  $region21: #{building_block_downsample.5} parent=0 // pred_fallthru
    _
  // Predicated region
  $region22: #{building_block_downsample.5} parent=0 // pred_check
    _
  $region23: #{building_block_downsample.5} parent=0 // pred_check_branch
    %22 = sbr.rel (0) target = $region25
  $region24: #{building_block_downsample.5} parent=0 // pred_region
    _
  $region25: #{building_block_downsample.5} parent=0 // pred_fallthru
    _
  %v23 = vld [vmem:[%s0] sm:$0xff]
  %v24 = vld [vmem:[%s0 + $0x8] sm:$0xff]
  %v25 = vld [vmem:[%s0 + $0x10] sm:$0xff]
  %v26 = vld [vmem:[%s0 + $0x18] sm:$0xff]
  %v27 = vld [vmem:[%s0 + $0x20] sm:$0xff]
  %v28 = vld [vmem:[%s0 + $0x28] sm:$0xff]
  %v29 = vld [vmem:[%s0 + $0x30] sm:$0xff]
  %v30 = vld [vmem:[%s0 + $0x38] sm:$0xff]
  %v31 = vld [vmem:[%s0 + $0x40] sm:$0xff]
  %v32 = vld [vmem:[%s0 + $0x48] sm:$0xff]
  %v33 = vld [vmem:[%s0 + $0x50] sm:$0xff]
  %v34 = vld [vmem:[%s0 + $0x58] sm:$0xff]
  %v35 = vld [vmem:[%s0 + $0x60] sm:$0xff]
  %v36 = vld [vmem:[%s0 + $0x68] sm:$0xff]
  %v37 = vld [vmem:[%s0 + $0x70] sm:$0xff]
  %v38 = vld [vmem:[%s0 + $0x78] sm:$0xff]
  %v39 = vld [vmem:[%s2] sm:$0x1]
  %v41 = vperm.slane %v39, 0
  %v43 = vmul.f32 %v23, %v41
  %v44 = vmul.f32 %v24, %v41
  %v45 = vmul.f32 %v25, %v41
  %v46 = vmul.f32 %v26, %v41
  %v47 = vmul.f32 %v27, %v41
  %v48 = vmul.f32 %v28, %v41
  %v49 = vmul.f32 %v29, %v41
  %v50 = vmul.f32 %v30, %v41
  %v51 = vmul.f32 %v31, %v41
  %v52 = vmul.f32 %v32, %v41
  %v53 = vmul.f32 %v33, %v41
  %v54 = vmul.f32 %v34, %v41
  %v55 = vmul.f32 %v35, %v41
  %v56 = vmul.f32 %v36, %v41
  %v57 = vmul.f32 %v37, %v41
  %v58 = vmul.f32 %v38, %v41
  %v59 = vld [vmem:[%s3] sm:$0x1]
  %v61 = vperm.slane %v59, 0
  %v63 = vadd.f32 %v43, %v61
  %v64 = vadd.f32 %v44, %v61
  %v65 = vadd.f32 %v45, %v61
  %v66 = vadd.f32 %v46, %v61
  %v67 = vadd.f32 %v47, %v61
  %v68 = vadd.f32 %v48, %v61
  %v69 = vadd.f32 %v49, %v61
  %v70 = vadd.f32 %v50, %v61
  %v71 = vadd.f32 %v51, %v61
  %v72 = vadd.f32 %v52, %v61
  %v73 = vadd.f32 %v53, %v61
  %v74 = vadd.f32 %v54, %v61
  %v75 = vadd.f32 %v55, %v61
  %v76 = vadd.f32 %v56, %v61
  %v77 = vadd.f32 %v57, %v61
  %v78 = vadd.f32 %v58, %v61
  %v79 = vld [vmem:[%s1] sm:$0xff]
  %v80 = vld [vmem:[%s1 + $0x8] sm:$0xff]
  %v81 = vld [vmem:[%s1 + $0x10] sm:$0xff]
  %v82 = vld [vmem:[%s1 + $0x18] sm:$0xff]
  %v83 = vld [vmem:[%s1 + $0x20] sm:$0xff]
  %v84 = vld [vmem:[%s1 + $0x28] sm:$0xff]
  %v85 = vld [vmem:[%s1 + $0x30] sm:$0xff]
  %v86 = vld [vmem:[%s1 + $0x38] sm:$0xff]
  %v87 = vld [vmem:[%s1 + $0x40] sm:$0xff]
  %v88 = vld [vmem:[%s1 + $0x48] sm:$0xff]
  %v89 = vld [vmem:[%s1 + $0x50] sm:$0xff]
  %v90 = vld [vmem:[%s1 + $0x58] sm:$0xff]
  %v91 = vld [vmem:[%s1 + $0x60] sm:$0xff]
  %v92 = vld [vmem:[%s1 + $0x68] sm:$0xff]
  %v93 = vld [vmem:[%s1 + $0x70] sm:$0xff]
  %v94 = vld [vmem:[%s1 + $0x78] sm:$0xff]
  %v95 = vld [vmem:[%s4] sm:$0x1]
  %v97 = vperm.slane %v95, 0
  %v99 = vmul.f32 %v79, %v97
  %v100 = vmul.f32 %v80, %v97
  %v101 = vmul.f32 %v81, %v97
  %v102 = vmul.f32 %v82, %v97
  %v103 = vmul.f32 %v83, %v97
  %v104 = vmul.f32 %v84, %v97
  %v105 = vmul.f32 %v85, %v97
  %v106 = vmul.f32 %v86, %v97
  %v107 = vmul.f32 %v87, %v97
  %v108 = vmul.f32 %v88, %v97
  %v109 = vmul.f32 %v89, %v97
  %v110 = vmul.f32 %v90, %v97
  %v111 = vmul.f32 %v91, %v97
  %v112 = vmul.f32 %v92, %v97
  %v113 = vmul.f32 %v93, %v97
  %v114 = vmul.f32 %v94, %v97
  %v115 = vadd.f32 %v63, %v99
  %v116 = vadd.f32 %v64, %v100
  %v117 = vadd.f32 %v65, %v101
  %v118 = vadd.f32 %v66, %v102
  %v119 = vadd.f32 %v67, %v103
  %v120 = vadd.f32 %v68, %v104
  %v121 = vadd.f32 %v69, %v105
  %v122 = vadd.f32 %v70, %v106
  %v123 = vadd.f32 %v71, %v107
  %v124 = vadd.f32 %v72, %v108
  %v125 = vadd.f32 %v73, %v109
  %v126 = vadd.f32 %v74, %v110
  %v127 = vadd.f32 %v75, %v111
  %v128 = vadd.f32 %v76, %v112
  %v129 = vadd.f32 %v77, %v113
  %v130 = vadd.f32 %v78, %v114
  %v131 = vld [vmem:[%s5] sm:$0x1]
  %v133 = vperm.slane %v131, 0
  %v135 = vadd.f32 %v115, %v133
  %v136 = vadd.f32 %v116, %v133
  %v137 = vadd.f32 %v117, %v133
  %v138 = vadd.f32 %v118, %v133
  %v139 = vadd.f32 %v119, %v133
  %v140 = vadd.f32 %v120, %v133
  %v141 = vadd.f32 %v121, %v133
  %v142 = vadd.f32 %v122, %v133
  %v143 = vadd.f32 %v123, %v133
  %v144 = vadd.f32 %v124, %v133
  %v145 = vadd.f32 %v125, %v133
  %v146 = vadd.f32 %v126, %v133
  %v147 = vadd.f32 %v127, %v133
  %v148 = vadd.f32 %v128, %v133
  %v149 = vadd.f32 %v129, %v133
  %v150 = vadd.f32 %v130, %v133
  %v151 = vmax.f32 %v135, 0.0
  %v152 = vmax.f32 %v136, 0.0
  %v153 = vmax.f32 %v137, 0.0
  %v154 = vmax.f32 %v138, 0.0
  %v155 = vmax.f32 %v139, 0.0
  %v156 = vmax.f32 %v140, 0.0
  %v157 = vmax.f32 %v141, 0.0
  %v158 = vmax.f32 %v142, 0.0
  %v159 = vmax.f32 %v143, 0.0
  %v160 = vmax.f32 %v144, 0.0
  %v161 = vmax.f32 %v145, 0.0
  %v162 = vmax.f32 %v146, 0.0
  %v163 = vmax.f32 %v147, 0.0
  %v164 = vmax.f32 %v148, 0.0
  %v165 = vmax.f32 %v149, 0.0
  %v166 = vmax.f32 %v150, 0.0
  %167 = vst [vmem:[%s6] sm:$0xff] %v151
  %168 = vst [vmem:[%s6 + $0x8] sm:$0xff] %v152
  %169 = vst [vmem:[%s6 + $0x10] sm:$0xff] %v153
  %170 = vst [vmem:[%s6 + $0x18] sm:$0xff] %v154
  %171 = vst [vmem:[%s6 + $0x20] sm:$0xff] %v155
  %172 = vst [vmem:[%s6 + $0x28] sm:$0xff] %v156
  %173 = vst [vmem:[%s6 + $0x30] sm:$0xff] %v157
  %174 = vst [vmem:[%s6 + $0x38] sm:$0xff] %v158
  %175 = vst [vmem:[%s6 + $0x40] sm:$0xff] %v159
  %176 = vst [vmem:[%s6 + $0x48] sm:$0xff] %v160
  %177 = vst [vmem:[%s6 + $0x50] sm:$0xff] %v161
  %178 = vst [vmem:[%s6 + $0x58] sm:$0xff] %v162
  %179 = vst [vmem:[%s6 + $0x60] sm:$0xff] %v163
  %180 = vst [vmem:[%s6 + $0x68] sm:$0xff] %v164
  %181 = vst [vmem:[%s6 + $0x70] sm:$0xff] %v165
  %182 = vst [vmem:[%s6 + $0x78] sm:$0xff] %v166
  // Predicated region
  $region26: #{building_block_downsample.5} parent=0 // pred_check
    _
  $region27: #{building_block_downsample.5} parent=0 // pred_check_branch
    %184 = sbr.rel (0) target = $region29
  $region28: #{building_block_downsample.5} parent=0 // pred_region
    _
  $region29: #{building_block_downsample.5} parent=0 // pred_fallthru
    _
  // Predicated region
  $region30: #{building_block_downsample.5} parent=0 // pred_check
    _
  $region31: #{building_block_downsample.5} parent=0 // pred_check_branch
    %186 = sbr.rel (0) target = $region33
  $region32: #{building_block_downsample.5} parent=0 // pred_region
    _
  $region33: #{building_block_downsample.5} parent=0 // pred_fallthru
    _

// kernel: building_block_downsample.3
$region0: #{building_block_downsample.3}
  #allocation0 [shape = 'u32[]', space=smem, size = 0x4, offset = 0x4, fixed_abs, tag = 'smem constant byte address 0x4 - core index']
  #allocation1 [shape = 'u32[72,128]{1,0:T(1,128)}', space=vmem, size = 0x9000, scoped, tag = 'internal scratch']
  %s0 = inlined_call_operand.vmem [shape: f32[2,9,9,4], index: 0, kind: input, shape index: {}]
  %s1 = inlined_call_operand.vmem [shape: f32[2,9,9,4], index: 1, kind: input, shape index: {}]
  %s2 = inlined_call_operand.vmem [shape: f32[2,9,9,4], index: 2, kind: input, shape index: {}]
  %s3 = inlined_call_operand.vmem [shape: f32[2,9,9,4], index: 3, kind: input, shape index: {}]
  %s4 = inlined_call_operand.vmem [shape: f32[8,4,128], index: 4, kind: input, shape index: {}]
  %s5 = inlined_call_operand.vmem [shape: f32[4,256], index: 5, kind: input, shape index: {}]
  %s6 = inlined_call_operand.vmem [shape: f32[2,8,8,128], index: 6, kind: output, shape index: {0}]
  %s7 = inlined_call_operand.vmem [shape: f32[2,8,8,128], index: 7, kind: output, shape index: {1}]
  %s8 = inlined_call_operand.vmem [shape: f32[2,1,8,128], index: 8, kind: output, shape index: {2}]
  %9 = xla_tuple %s6, %s7, %s8
  %s10 = sld [smem:[#allocation0]]
  $region73: #{building_block_downsample.3} parent=0
    _
  %s12 = ssub.s32 1, %s10
  %s13 = scalar_select 0, %s12, %s10
  loop: start=0, step=1, limit=4
  $region2: #{building_block_downsample.3} parent=0 // loop_pre_header
    _
  $region3: #{building_block_downsample.3} parent=0 // loop_header
    %s15 = sphi 0, %s19
    %p16 = scmp.ge.s32.totalorder %s15, 4
    %s22 = sphi 0, %s34
    %s23 = sphi 0, %s30
    %s24 = sphi 0, %s22
    %s25 = sphi 0, %s23
    %s26 = sphi 0, %s24
    %s27 = sphi 0, %s25
    %s37 = sphi 0, %s39
    %s40 = sphi 0, %s37
    %s41 = sphi 0, %s40
    %s57 = sphi 0, %s41
    %s63 = sphi 0, %s65
    %s66 = sphi 0, %s63
    %s67 = sphi 0, %s66
    %s83 = sphi 0, %s67
    %s89 = sphi 0, %s91
    %s92 = sphi 0, %s89
    %s93 = sphi 0, %s92
    %s109 = sphi 0, %s93
    %s115 = sphi 0, %s117
    %s118 = sphi 0, %s115
    %s119 = sphi 0, %s118
    %s135 = sphi 0, %s119
    %s139 = sphi 0, %s139
    %s141 = sphi 0, %s139
    %s142 = sphi 0, %s141
    %s156 = sphi 0, %s142
    %s160 = sphi 0, %s160
    %s162 = sphi 0, %s160
    %s163 = sphi 0, %s162
    %s177 = sphi 0, %s163
    %s185 = sphi 0, %s187
    %s188 = sphi 0, %s185
    %s189 = sphi 0, %s188
    %s205 = sphi 0, %s189
    %s213 = sphi 0, %s215
    %s216 = sphi 0, %s213
    %s217 = sphi 0, %s216
    %s233 = sphi 0, %s217
    %s241 = sphi 0, %s243
    %s244 = sphi 0, %s241
    %s245 = sphi 0, %s244
    %s261 = sphi 0, %s245
  $region4: #{building_block_downsample.3} parent=0 // loop_header_branch
    %18 = sbr.rel (%p16) target = $region8
  $region5: #{building_block_downsample.3} parent=0 // loop_body
    %s20 = ssub.s32 %s15, 1
    %s21 = ssub.s32 %s15, 2
    %s28 = sadd.s32 1, %s23
    %p29 = scmp.ge.s32.totalorder %s28, 1
    %s30 = scalar_select %p29, 0, %s28
    %s31 = sadd.s32 1, %s22
    %s32 = scalar_select %p29, %s31, %s22
    %p33 = scmp.ge.s32.totalorder %s32, 2
    %s34 = scalar_select %p33, 0, %s32
    %s35 = ssub.s32 %s22, %s34
    %p36 = scmp.eq.s32.totalorder %s35, 0
    %s38 = sadd.s32 %s37, 1
    %s39 = scalar_select %p36, %s37, %s38
    %p42 = pneg %p36
    %p43 = scmp.eq.s32.totalorder %s15, 1
    %p44 = por %p42, %p43
    %p45 = scmp.ne.s32.totalorder %s37, %s40
    %p46 = scmp.eq.s32.totalorder %s15, 0
    %p47 = por %p45, %p46
    %p48 = scmp.ne.s32.totalorder %s37, %s40
    %p49 = scmp.eq.s32.totalorder %s20, 1
    %p50 = por %p48, %p49
    %p51 = scmp.ne.s32.totalorder %s40, %s41
    %p52 = scmp.eq.s32.totalorder %s20, 0
    %p53 = por %p51, %p52
    %p54 = scmp.ne.s32.totalorder %s40, %s41
    %p55 = scmp.eq.s32.totalorder %s21, 1
    %p56 = por %p54, %p55
    %p58 = scmp.ne.s32.totalorder %s41, %s57
    %p59 = scmp.eq.s32.totalorder %s21, 0
    %p60 = por %p58, %p59
    %s61 = ssub.s32 %s22, %s34
    %p62 = scmp.eq.s32.totalorder %s61, 0
    %s64 = sadd.s32 %s63, 1
    %s65 = scalar_select %p62, %s63, %s64
    %p68 = pneg %p62
    %p69 = scmp.eq.s32.totalorder %s15, 1
    %p70 = por %p68, %p69
    %p71 = scmp.ne.s32.totalorder %s63, %s66
    %p72 = scmp.eq.s32.totalorder %s15, 0
    %p73 = por %p71, %p72
    %p74 = scmp.ne.s32.totalorder %s63, %s66
    %p75 = scmp.eq.s32.totalorder %s20, 1
    %p76 = por %p74, %p75
    %p77 = scmp.ne.s32.totalorder %s66, %s67
    %p78 = scmp.eq.s32.totalorder %s20, 0
    %p79 = por %p77, %p78
    %p80 = scmp.ne.s32.totalorder %s66, %s67
    %p81 = scmp.eq.s32.totalorder %s21, 1
    %p82 = por %p80, %p81
    %p84 = scmp.ne.s32.totalorder %s67, %s83
    %p85 = scmp.eq.s32.totalorder %s21, 0
    %p86 = por %p84, %p85
    %s87 = ssub.s32 %s22, %s34
    %p88 = scmp.eq.s32.totalorder %s87, 0
    %s90 = sadd.s32 %s89, 1
    %s91 = scalar_select %p88, %s89, %s90
    %p94 = pneg %p88
    %p95 = scmp.eq.s32.totalorder %s15, 1
    %p96 = por %p94, %p95
    %p97 = scmp.ne.s32.totalorder %s89, %s92
    %p98 = scmp.eq.s32.totalorder %s15, 0
    %p99 = por %p97, %p98
    %p100 = scmp.ne.s32.totalorder %s89, %s92
    %p101 = scmp.eq.s32.totalorder %s20, 1
    %p102 = por %p100, %p101
    %p103 = scmp.ne.s32.totalorder %s92, %s93
    %p104 = scmp.eq.s32.totalorder %s20, 0
    %p105 = por %p103, %p104
    %p106 = scmp.ne.s32.totalorder %s92, %s93
    %p107 = scmp.eq.s32.totalorder %s21, 1
    %p108 = por %p106, %p107
    %p110 = scmp.ne.s32.totalorder %s93, %s109
    %p111 = scmp.eq.s32.totalorder %s21, 0
    %p112 = por %p110, %p111
    %s113 = ssub.s32 %s22, %s34
    %p114 = scmp.eq.s32.totalorder %s113, 0
    %s116 = sadd.s32 %s115, 1
    %s117 = scalar_select %p114, %s115, %s116
    %p120 = pneg %p114
    %p121 = scmp.eq.s32.totalorder %s15, 1
    %p122 = por %p120, %p121
    %p123 = scmp.ne.s32.totalorder %s115, %s118
    %p124 = scmp.eq.s32.totalorder %s15, 0
    %p125 = por %p123, %p124
    %p126 = scmp.ne.s32.totalorder %s115, %s118
    %p127 = scmp.eq.s32.totalorder %s20, 1
    %p128 = por %p126, %p127
    %p129 = scmp.ne.s32.totalorder %s118, %s119
    %p130 = scmp.eq.s32.totalorder %s20, 0
    %p131 = por %p129, %p130
    %p132 = scmp.ne.s32.totalorder %s118, %s119
    %p133 = scmp.eq.s32.totalorder %s21, 1
    %p134 = por %p132, %p133
    %p136 = scmp.ne.s32.totalorder %s119, %s135
    %p137 = scmp.eq.s32.totalorder %s21, 0
    %p138 = por %p136, %p137
    %s140 = sadd.s32 %s139, 1
    %p143 = scmp.eq.s32.totalorder %s15, 1
    %p144 = scmp.ne.s32.totalorder %s139, %s141
    %p145 = scmp.eq.s32.totalorder %s15, 0
    %p146 = por %p144, %p145
    %p147 = scmp.ne.s32.totalorder %s139, %s141
    %p148 = scmp.eq.s32.totalorder %s20, 1
    %p149 = por %p147, %p148
    %p150 = scmp.ne.s32.totalorder %s141, %s142
    %p151 = scmp.eq.s32.totalorder %s20, 0
    %p152 = por %p150, %p151
    %p153 = scmp.ne.s32.totalorder %s141, %s142
    %p154 = scmp.eq.s32.totalorder %s21, 1
    %p155 = por %p153, %p154
    %p157 = scmp.ne.s32.totalorder %s142, %s156
    %p158 = scmp.eq.s32.totalorder %s21, 0
    %p159 = por %p157, %p158
    %s161 = sadd.s32 %s160, 1
    %p164 = scmp.eq.s32.totalorder %s15, 1
    %p165 = scmp.ne.s32.totalorder %s160, %s162
    %p166 = scmp.eq.s32.totalorder %s15, 0
    %p167 = por %p165, %p166
    %p168 = scmp.ne.s32.totalorder %s160, %s162
    %p169 = scmp.eq.s32.totalorder %s20, 1
    %p170 = por %p168, %p169
    %p171 = scmp.ne.s32.totalorder %s162, %s163
    %p172 = scmp.eq.s32.totalorder %s20, 0
    %p173 = por %p171, %p172
    %p174 = scmp.ne.s32.totalorder %s162, %s163
    %p175 = scmp.eq.s32.totalorder %s21, 1
    %p176 = por %p174, %p175
    %p178 = scmp.ne.s32.totalorder %s163, %s177
    %p179 = scmp.eq.s32.totalorder %s21, 0
    %p180 = por %p178, %p179
    %s181 = ssub.s32 %s22, %s34
    %s182 = ssub.s32 %s23, %s30
    %s183 = sor.u32 %s181, %s182
    %p184 = scmp.eq.s32.totalorder %s183, 0
    %s186 = sadd.s32 %s185, 1
    %s187 = scalar_select %p184, %s185, %s186
    %p190 = pneg %p184
    %p191 = scmp.eq.s32.totalorder %s15, 1
    %p192 = por %p190, %p191
    %p193 = scmp.ne.s32.totalorder %s185, %s188
    %p194 = scmp.eq.s32.totalorder %s15, 0
    %p195 = por %p193, %p194
    %p196 = scmp.ne.s32.totalorder %s185, %s188
    %p197 = scmp.eq.s32.totalorder %s20, 1
    %p198 = por %p196, %p197
    %p199 = scmp.ne.s32.totalorder %s188, %s189
    %p200 = scmp.eq.s32.totalorder %s20, 0
    %p201 = por %p199, %p200
    %p202 = scmp.ne.s32.totalorder %s188, %s189
    %p203 = scmp.eq.s32.totalorder %s21, 1
    %p204 = por %p202, %p203
    %p206 = scmp.ne.s32.totalorder %s189, %s205
    %p207 = scmp.eq.s32.totalorder %s21, 0
    %p208 = por %p206, %p207
    %s209 = ssub.s32 %s22, %s34
    %s210 = ssub.s32 %s23, %s30
    %s211 = sor.u32 %s209, %s210
    %p212 = scmp.eq.s32.totalorder %s211, 0
    %s214 = sadd.s32 %s213, 1
    %s215 = scalar_select %p212, %s213, %s214
    %p218 = pneg %p212
    %p219 = scmp.eq.s32.totalorder %s15, 1
    %p220 = por %p218, %p219
    %p221 = scmp.ne.s32.totalorder %s213, %s216
    %p222 = scmp.eq.s32.totalorder %s15, 0
    %p223 = por %p221, %p222
    %p224 = scmp.ne.s32.totalorder %s213, %s216
    %p225 = scmp.eq.s32.totalorder %s20, 1
    %p226 = por %p224, %p225
    %p227 = scmp.ne.s32.totalorder %s216, %s217
    %p228 = scmp.eq.s32.totalorder %s20, 0
    %p229 = por %p227, %p228
    %p230 = scmp.ne.s32.totalorder %s216, %s217
    %p231 = scmp.eq.s32.totalorder %s21, 1
    %p232 = por %p230, %p231
    %p234 = scmp.ne.s32.totalorder %s217, %s233
    %p235 = scmp.eq.s32.totalorder %s21, 0
    %p236 = por %p234, %p235
    %s237 = ssub.s32 %s22, %s34
    %s238 = ssub.s32 %s23, %s30
    %s239 = sor.u32 %s237, %s238
    %p240 = scmp.eq.s32.totalorder %s239, 0
    %s242 = sadd.s32 %s241, 1
    %s243 = scalar_select %p240, %s241, %s242
    %p246 = pneg %p240
    %p247 = scmp.eq.s32.totalorder %s15, 1
    %p248 = por %p246, %p247
    %p249 = scmp.ne.s32.totalorder %s241, %s244
    %p250 = scmp.eq.s32.totalorder %s15, 0
    %p251 = por %p249, %p250
    %p252 = scmp.ne.s32.totalorder %s241, %s244
    %p253 = scmp.eq.s32.totalorder %s20, 1
    %p254 = por %p252, %p253
    %p255 = scmp.ne.s32.totalorder %s244, %s245
    %p256 = scmp.eq.s32.totalorder %s20, 0
    %p257 = por %p255, %p256
    %p258 = scmp.ne.s32.totalorder %s244, %s245
    %p259 = scmp.eq.s32.totalorder %s21, 1
    %p260 = por %p258, %p259
    %p262 = scmp.ne.s32.totalorder %s245, %s261
    %p263 = scmp.eq.s32.totalorder %s21, 0
    %p264 = por %p262, %p263
    %p265 = scmp.le.s32.totalorder 1, %s15
    %p266 = scmp.lt.s32.totalorder %s15, 3
    %p267 = pnand %p265, %p266
    %p268 = pneg %p267
    // Predicated region
    $region9: #{building_block_downsample.3} parent=5 // pred_check
      _
    $region10: #{building_block_downsample.3} parent=5 // pred_check_branch
      %270 = sbr.rel (%p267) target = $region12
    $region11: #{building_block_downsample.3} parent=5 // pred_region
      %s271 = ssub.s32 %s15, 1
      // Predicated region
      $region13: #{building_block_downsample.3} parent=11 // pred_check
        %p272 = pneg %p152
      $region14: #{building_block_downsample.3} parent=11 // pred_check_branch
        %274 = sbr.rel (%p272) target = $region16
      $region15: #{building_block_downsample.3} parent=11 // pred_region
        _
      $region16: #{building_block_downsample.3} parent=11 // pred_fallthru
        _
      // Predicated region
      $region17: #{building_block_downsample.3} parent=11 // pred_check
        %p275 = pneg %p173
      $region18: #{building_block_downsample.3} parent=11 // pred_check_branch
        %277 = sbr.rel (%p275) target = $region20
      $region19: #{building_block_downsample.3} parent=11 // pred_region
        _
      $region20: #{building_block_downsample.3} parent=11 // pred_fallthru
        _
    $region12: #{building_block_downsample.3} parent=5 // pred_fallthru
      _
    %p278 = scmp.lt.s32.totalorder %s15, 2
    // Predicated region
    $region21: #{building_block_downsample.3} parent=5 // pred_check
      %p279 = pneg %p278
    $region22: #{building_block_downsample.3} parent=5 // pred_check_branch
      %281 = sbr.rel (%p279) target = $region24
    $region23: #{building_block_downsample.3} parent=5 // pred_region
      // Predicated region
      $region25: #{building_block_downsample.3} parent=23 // pred_check
        %p282 = pneg %p47
      $region26: #{building_block_downsample.3} parent=23 // pred_check_branch
        %284 = sbr.rel (%p282) target = $region28
      $region27: #{building_block_downsample.3} parent=23 // pred_region
        %p285 = scmp.lt.s32.totalorder %s22, 1
        %s286 = scalar_select %p285, %s22, 1
        %s287 = smul.addr %s286, 18
        %s288 = smul.addr %s287, 8
        %s289 = scalar_lea.vmem %s0, %s288
      $region28: #{building_block_downsample.3} parent=23 // pred_fallthru
        _
      // Predicated region
      $region29: #{building_block_downsample.3} parent=23 // pred_check
        %p290 = pneg %p73
      $region30: #{building_block_downsample.3} parent=23 // pred_check_branch
        %292 = sbr.rel (%p290) target = $region32
      $region31: #{building_block_downsample.3} parent=23 // pred_region
        %p293 = scmp.lt.s32.totalorder %s22, 1
        %s294 = scalar_select %p293, %s22, 1
        %s295 = smul.addr %s294, 18
        %s296 = smul.addr %s295, 8
        %s297 = scalar_lea.vmem %s1, %s296
      $region32: #{building_block_downsample.3} parent=23 // pred_fallthru
        _
      // Predicated region
      $region33: #{building_block_downsample.3} parent=23 // pred_check
        %p298 = pneg %p99
      $region34: #{building_block_downsample.3} parent=23 // pred_check_branch
        %300 = sbr.rel (%p298) target = $region36
      $region35: #{building_block_downsample.3} parent=23 // pred_region
        %p301 = scmp.lt.s32.totalorder %s22, 1
        %s302 = scalar_select %p301, %s22, 1
        %s303 = smul.addr %s302, 18
        %s304 = smul.addr %s303, 8
        %s305 = scalar_lea.vmem %s2, %s304
      $region36: #{building_block_downsample.3} parent=23 // pred_fallthru
        _
      // Predicated region
      $region37: #{building_block_downsample.3} parent=23 // pred_check
        %p306 = pneg %p125
      $region38: #{building_block_downsample.3} parent=23 // pred_check_branch
        %308 = sbr.rel (%p306) target = $region40
      $region39: #{building_block_downsample.3} parent=23 // pred_region
        %p309 = scmp.lt.s32.totalorder %s22, 1
        %s310 = scalar_select %p309, %s22, 1
        %s311 = smul.addr %s310, 18
        %s312 = smul.addr %s311, 8
        %s313 = scalar_lea.vmem %s3, %s312
      $region40: #{building_block_downsample.3} parent=23 // pred_fallthru
        _
    $region24: #{building_block_downsample.3} parent=5 // pred_fallthru
      _
    %p314 = scmp.le.s32.totalorder 1, %s15
    %p315 = scmp.lt.s32.totalorder %s15, 3
    %p316 = pnand %p314, %p315
    %p317 = pneg %p316
    // Predicated region
    $region41: #{building_block_downsample.3} parent=5 // pred_check
      _
    $region42: #{building_block_downsample.3} parent=5 // pred_check_branch
      %319 = sbr.rel (%p316) target = $region44
    $region43: #{building_block_downsample.3} parent=5 // pred_region
      %s320 = ssub.s32 %s15, 1
      %p321 = scmp.lt.s32.totalorder %s24, 1
      %s322 = scalar_select %p321, %s24, 1
      %s323 = smul.addr %s322, 18
      %s324 = smul.addr %s323, 8
      %s325 = scalar_lea.vmem %s0, %s324
      %p326 = pneg %p53
      %p327 = pneg %p50
      %p328 = scmp.lt.s32.totalorder %s24, 1
      %s329 = scalar_select %p328, %s24, 1
      %s330 = smul.addr %s329, 18
      %s331 = smul.addr %s330, 8
      %s332 = scalar_lea.vmem %s1, %s331
      %p333 = pneg %p79
      %p334 = pneg %p76
      %p335 = scmp.lt.s32.totalorder %s24, 1
      %s336 = scalar_select %p335, %s24, 1
      %s337 = smul.addr %s336, 18
      %s338 = smul.addr %s337, 8
      %s339 = scalar_lea.vmem %s2, %s338
      %p340 = pneg %p105
      %p341 = pneg %p102
      %p342 = scmp.lt.s32.totalorder %s24, 1
      %s343 = scalar_select %p342, %s24, 1
      %s344 = smul.addr %s343, 18
      %s345 = smul.addr %s344, 8
      %s346 = scalar_lea.vmem %s3, %s345
      %p347 = pneg %p131
      %p348 = pneg %p128
      %p349 = pneg %p152
      %p350 = pneg %p149
      %p351 = pneg %p173
      %p352 = pneg %p170
      %p353 = pneg %p201
      %p354 = pneg %p198
      %s355 = smul.u32 8, %s25
      %p356 = scmp.lt.s32.totalorder %s24, 1
      %s357 = scalar_select %p356, %s24, 1
      %p358 = scmp.lt.s32.totalorder %s355, 7
      %s359 = scalar_select %p358, %s355, 7
      %s360 = smul.addr %s357, 8
      %s361 = sadd.s32 %s359, %s360
      %s362 = smul.addr %s361, 8
      %s363 = scalar_lea.vmem %s6, %s362
      %p364 = pneg %p229
      %p365 = pneg %p226
      %s366 = smul.u32 8, %s25
      %p367 = scmp.lt.s32.totalorder %s24, 1
      %s368 = scalar_select %p367, %s24, 1
      %p369 = scmp.lt.s32.totalorder %s366, 7
      %s370 = scalar_select %p369, %s366, 7
      %s371 = smul.addr %s368, 8
      %s372 = sadd.s32 %s370, %s371
      %s373 = smul.addr %s372, 8
      %s374 = scalar_lea.vmem %s7, %s373
      %p375 = pneg %p257
      %p376 = pneg %p254
      %p377 = scmp.lt.s32.totalorder %s24, 1
      %s378 = scalar_select %p377, %s24, 1
      %p379 = scmp.lt.s32.totalorder %s25, 0
      %s380 = scalar_select %p379, %s25, 0
      %s381 = sadd.s32 %s380, %s378
      %s382 = smul.addr %s381, 8
      %s383 = scalar_lea.vmem %s8, %s382
      %p384 = scmp.lt.s32.totalorder %s24, 1
      %s385 = scalar_select %p384, %s24, 1
      %s386 = smul.addr %s385, 18
      %s387 = smul.addr %s386, 8
      %s388 = scalar_lea.vmem %s0, %s387
      %p389 = scmp.lt.s32.totalorder %s24, 1
      %s390 = scalar_select %p389, %s24, 1
      %s391 = smul.addr %s390, 18
      %s392 = smul.addr %s391, 8
      %s393 = scalar_lea.vmem %s1, %s392
      %p394 = scmp.lt.s32.totalorder %s24, 1
      %s395 = scalar_select %p394, %s24, 1
      %s396 = smul.addr %s395, 18
      %s397 = smul.addr %s396, 8
      %s398 = scalar_lea.vmem %s2, %s397
      %p399 = scmp.lt.s32.totalorder %s24, 1
      %s400 = scalar_select %p399, %s24, 1
      %s401 = smul.addr %s400, 18
      %s402 = smul.addr %s401, 8
      %s403 = scalar_lea.vmem %s3, %s402
      %s404 = smul.u32 8, %s25
      %p405 = scmp.lt.s32.totalorder %s24, 1
      %s406 = scalar_select %p405, %s24, 1
      %p407 = scmp.lt.s32.totalorder %s404, 7
      %s408 = scalar_select %p407, %s404, 7
      %s409 = smul.addr %s406, 8
      %s410 = sadd.s32 %s408, %s409
      %s411 = smul.addr %s410, 8
      %s412 = scalar_lea.vmem %s6, %s411
      %s413 = smul.u32 8, %s25
      %s414 = smul.u32 8, %s25
      %p415 = scmp.lt.s32.totalorder %s24, 1
      %s416 = scalar_select %p415, %s24, 1
      %p417 = scmp.lt.s32.totalorder %s414, 7
      %s418 = scalar_select %p417, %s414, 7
      %s419 = smul.addr %s416, 8
      %s420 = sadd.s32 %s418, %s419
      %s421 = smul.addr %s420, 8
      %s422 = scalar_lea.vmem %s7, %s421
      %s423 = smul.u32 8, %s25
      %p424 = scmp.lt.s32.totalorder %s24, 1
      %s425 = scalar_select %p424, %s24, 1
      %p426 = scmp.lt.s32.totalorder %s25, 0
      %s427 = scalar_select %p426, %s25, 0
      %s428 = sadd.s32 %s427, %s425
      %s429 = smul.addr %s428, 8
      %s430 = scalar_lea.vmem %s8, %s429
      %s431 = smul.u32 %s25, 8
      %s432 = smul.u32 %s431, 16
      %s433 = scalar_lea.vmem %s403, %s432
      %v434 = vld [vmem:[%s433] sm:$0xff]
      %v435 = vld [vmem:[%s433 + $0x10] sm:$0xff]
      %v436 = vld [vmem:[%s433 + $0x20] sm:$0xff]
      %v437 = vld [vmem:[%s433 + $0x30] sm:$0xff]
      %v438 = vld [vmem:[%s433 + $0x40] sm:$0xff]
      %v439 = vld [vmem:[%s433 + $0x50] sm:$0xff]
      %v440 = vld [vmem:[%s433 + $0x60] sm:$0xff]
      %v441 = vld [vmem:[%s433 + $0x70] sm:$0xff]
      %v442 = vld [vmem:[%s5] sm:$0xff]
      %444 = vst [vmem:[#allocation1] ss:$2 sm:$0xff] %v442
      %v445 = vld.sshfl [vmem:[#allocation1] sm:$0xff pattern:$0x75316420]
      %v446 = vld.sshfl [vmem:[#allocation1 + $0x8] sm:$0xff pattern:$0x75316420]
      %vm447 = vcmask 31744
      %v449 = vsel %vm447, %v434, 0
      %v452 = vsel %vm447, %v435, 0
      %v455 = vsel %vm447, %v436, 0
      %v458 = vsel %vm447, %v437, 0
      %v461 = vsel %vm447, %v438, 0
      %v464 = vsel %vm447, %v439, 0
      %v467 = vsel %vm447, %v440, 0
      %v470 = vsel %vm447, %v441, 0
      %vm472 = vcmask 1043456
      %v473 = vsel %vm472, %v445, 0
      %v475 = vsel %vm472, %v446, 0
      %477 = vmatpush.msra.mxu0 0.0
      %478 = vmatpush.msra.mxu0 0.0
      %479 = vmatpush.msra.mxu0 0.0
      %480 = vmatpush.msra.mxu0 0.0
      %481 = vmatpush.msra.mxu0 0.0
      %482 = vmatpush.msra.mxu0 0.0
      %483 = vmatpush.msra.mxu0 0.0
      %484 = vmatpush.msra.mxu0 0.0
      %485 = vmatpush.msra.mxu0 0.0
      %486 = vmatpush.msra.mxu0 0.0
      %487 = vmatpush.msra.mxu0 0.0
      %488 = vmatpush.msra.mxu0 0.0
      %489 = vmatpush.msra.mxu0 0.0
      %490 = vmatpush.msra.mxu0 0.0
      %491 = vmatpush.msra.mxu0 0.0
      %492 = vmatpush.msra.mxu0 %v473
      %493 = vmatmul.f32.gmra.mxu0 %v449
      %v494 = vpop.f32.mrf.mxu0
      %v495 = vadd.f32 0.0, %v494
      %496 = vmatmul.f32.gmra.mxu0 %v452
      %v497 = vpop.f32.mrf.mxu0
      %v498 = vadd.f32 0.0, %v497
      %499 = vmatmul.f32.gmra.mxu0 %v455
      %v500 = vpop.f32.mrf.mxu0
      %v501 = vadd.f32 0.0, %v500
      %502 = vmatmul.f32.gmra.mxu0 %v458
      %v503 = vpop.f32.mrf.mxu0
      %v504 = vadd.f32 0.0, %v503
      %505 = vmatmul.f32.gmra.mxu0 %v461
      %v506 = vpop.f32.mrf.mxu0
      %v507 = vadd.f32 0.0, %v506
      %508 = vmatmul.f32.gmra.mxu0 %v464
      %v509 = vpop.f32.mrf.mxu0
      %v510 = vadd.f32 0.0, %v509
      %511 = vmatmul.f32.gmra.mxu0 %v467
      %v512 = vpop.f32.mrf.mxu0
      %v513 = vadd.f32 0.0, %v512
      %514 = vmatmul.f32.gmra.mxu0 %v470
      %v515 = vpop.f32.mrf.mxu0
      %v516 = vadd.f32 0.0, %v515
      %517 = vdwg.mxu0
      %518 = vmatpush.msra.mxu0 0.0
      %519 = vmatpush.msra.mxu0 0.0
      %520 = vmatpush.msra.mxu0 0.0
      %521 = vmatpush.msra.mxu0 0.0
      %522 = vmatpush.msra.mxu0 0.0
      %523 = vmatpush.msra.mxu0 0.0
      %524 = vmatpush.msra.mxu0 0.0
      %525 = vmatpush.msra.mxu0 0.0
      %526 = vmatpush.msra.mxu0 0.0
      %527 = vmatpush.msra.mxu0 0.0
      %528 = vmatpush.msra.mxu0 0.0
      %529 = vmatpush.msra.mxu0 0.0
      %530 = vmatpush.msra.mxu0 0.0
      %531 = vmatpush.msra.mxu0 0.0
      %532 = vmatpush.msra.mxu0 0.0
      %533 = vmatpush.msra.mxu0 %v475
      %534 = vmatmul.f32.gmra.mxu0 %v449
      %v535 = vpop.f32.mrf.mxu0
      %v536 = vadd.f32 0.0, %v535
      %537 = vmatmul.f32.gmra.mxu0 %v452
      %v538 = vpop.f32.mrf.mxu0
      %v539 = vadd.f32 0.0, %v538
      %540 = vmatmul.f32.gmra.mxu0 %v455
      %v541 = vpop.f32.mrf.mxu0
      %v542 = vadd.f32 0.0, %v541
      %543 = vmatmul.f32.gmra.mxu0 %v458
      %v544 = vpop.f32.mrf.mxu0
      %v545 = vadd.f32 0.0, %v544
      %546 = vmatmul.f32.gmra.mxu0 %v461
      %v547 = vpop.f32.mrf.mxu0
      %v548 = vadd.f32 0.0, %v547
      %549 = vmatmul.f32.gmra.mxu0 %v464
      %v550 = vpop.f32.mrf.mxu0
      %v551 = vadd.f32 0.0, %v550
      %552 = vmatmul.f32.gmra.mxu0 %v467
      %v553 = vpop.f32.mrf.mxu0
      %v554 = vadd.f32 0.0, %v553
      %555 = vmatmul.f32.gmra.mxu0 %v470
      %v556 = vpop.f32.mrf.mxu0
      %v557 = vadd.f32 0.0, %v556
      %558 = vdwg.mxu0
      %s559 = scalar_lea.vmem %s388, %s432
      %v560 = vld [vmem:[%s559] sm:$0xff]
      %v561 = vld [vmem:[%s559 + $0x10] sm:$0xff]
      %v562 = vld [vmem:[%s559 + $0x20] sm:$0xff]
      %v563 = vld [vmem:[%s559 + $0x30] sm:$0xff]
      %v564 = vld [vmem:[%s559 + $0x40] sm:$0xff]
      %v565 = vld [vmem:[%s559 + $0x50] sm:$0xff]
      %v566 = vld [vmem:[%s559 + $0x60] sm:$0xff]
      %v567 = vld [vmem:[%s559 + $0x70] sm:$0xff]
      %v568 = vld [vmem:[%s4] sm:$0xf]
      %v570 = vsel %vm447, %v560, 0
      %v573 = vsel %vm447, %v561, 0
      %v576 = vsel %vm447, %v562, 0
      %v579 = vsel %vm447, %v563, 0
      %v582 = vsel %vm447, %v564, 0
      %v585 = vsel %vm447, %v565, 0
      %v588 = vsel %vm447, %v566, 0
      %v591 = vsel %vm447, %v567, 0
      %v594 = vsel %vm472, %v568, 0
      %596 = vmatpush.msra.mxu0 0.0
      %597 = vmatpush.msra.mxu0 0.0
      %598 = vmatpush.msra.mxu0 0.0
      %599 = vmatpush.msra.mxu0 0.0
      %600 = vmatpush.msra.mxu0 0.0
      %601 = vmatpush.msra.mxu0 0.0
      %602 = vmatpush.msra.mxu0 0.0
      %603 = vmatpush.msra.mxu0 0.0
      %604 = vmatpush.msra.mxu0 0.0
      %605 = vmatpush.msra.mxu0 0.0
      %606 = vmatpush.msra.mxu0 0.0
      %607 = vmatpush.msra.mxu0 0.0
      %608 = vmatpush.msra.mxu0 0.0
      %609 = vmatpush.msra.mxu0 0.0
      %610 = vmatpush.msra.mxu0 0.0
      %611 = vmatpush.msra.mxu0 %v594
      %612 = vmatmul.f32.gmra.mxu0 %v570
      %v613 = vpop.f32.mrf.mxu0
      %v614 = vadd.f32 0.0, %v613
      %615 = vmatmul.f32.gmra.mxu0 %v573
      %v616 = vpop.f32.mrf.mxu0
      %v617 = vadd.f32 0.0, %v616
      %618 = vmatmul.f32.gmra.mxu0 %v576
      %v619 = vpop.f32.mrf.mxu0
      %v620 = vadd.f32 0.0, %v619
      %621 = vmatmul.f32.gmra.mxu0 %v579
      %v622 = vpop.f32.mrf.mxu0
      %v623 = vadd.f32 0.0, %v622
      %624 = vmatmul.f32.gmra.mxu0 %v582
      %v625 = vpop.f32.mrf.mxu0
      %v626 = vadd.f32 0.0, %v625
      %627 = vmatmul.f32.gmra.mxu0 %v585
      %v628 = vpop.f32.mrf.mxu0
      %v629 = vadd.f32 0.0, %v628
      %630 = vmatmul.f32.gmra.mxu0 %v588
      %v631 = vpop.f32.mrf.mxu0
      %v632 = vadd.f32 0.0, %v631
      %633 = vmatmul.f32.gmra.mxu0 %v591
      %v634 = vpop.f32.mrf.mxu0
      %v635 = vadd.f32 0.0, %v634
      %636 = vdwg.mxu0
      %v637 = vadd.f32 %v495, %v614
      %v638 = vadd.f32 %v498, %v617
      %v639 = vadd.f32 %v501, %v620
      %v640 = vadd.f32 %v504, %v623
      %v641 = vadd.f32 %v507, %v626
      %v642 = vadd.f32 %v510, %v629
      %v643 = vadd.f32 %v513, %v632
      %v644 = vadd.f32 %v516, %v635
      %s645 = scalar_lea.vmem %s393, %s432
      %v646 = vld [vmem:[%s645] sm:$0xff]
      %v647 = vld [vmem:[%s645 + $0x10] sm:$0xff]
      %v648 = vld [vmem:[%s645 + $0x20] sm:$0xff]
      %v649 = vld [vmem:[%s645 + $0x30] sm:$0xff]
      %v650 = vld [vmem:[%s645 + $0x40] sm:$0xff]
      %v651 = vld [vmem:[%s645 + $0x50] sm:$0xff]
      %v652 = vld [vmem:[%s645 + $0x60] sm:$0xff]
      %v653 = vld [vmem:[%s645 + $0x70] sm:$0xff]
      %s654 = scalar_lea.vmem %s4, 4
      %v655 = vld [vmem:[%s654] sm:$0xf]
      %v657 = vsel %vm447, %v646, 0
      %v660 = vsel %vm447, %v647, 0
      %v663 = vsel %vm447, %v648, 0
      %v666 = vsel %vm447, %v649, 0
      %v669 = vsel %vm447, %v650, 0
      %v672 = vsel %vm447, %v651, 0
      %v675 = vsel %vm447, %v652, 0
      %v678 = vsel %vm447, %v653, 0
      %v681 = vsel %vm472, %v655, 0
      %683 = vmatpush.msra.mxu0 0.0
      %684 = vmatpush.msra.mxu0 0.0
      %685 = vmatpush.msra.mxu0 0.0
      %686 = vmatpush.msra.mxu0 0.0
      %687 = vmatpush.msra.mxu0 0.0
      %688 = vmatpush.msra.mxu0 0.0
      %689 = vmatpush.msra.mxu0 0.0
      %690 = vmatpush.msra.mxu0 0.0
      %691 = vmatpush.msra.mxu0 0.0
      %692 = vmatpush.msra.mxu0 0.0
      %693 = vmatpush.msra.mxu0 0.0
      %694 = vmatpush.msra.mxu0 0.0
      %695 = vmatpush.msra.mxu0 0.0
      %696 = vmatpush.msra.mxu0 0.0
      %697 = vmatpush.msra.mxu0 0.0
      %698 = vmatpush.msra.mxu0 %v681
      %699 = vmatmul.f32.gmra.mxu0 %v657
      %v700 = vpop.f32.mrf.mxu0
      %v701 = vadd.f32 0.0, %v700
      %702 = vmatmul.f32.gmra.mxu0 %v660
      %v703 = vpop.f32.mrf.mxu0
      %v704 = vadd.f32 0.0, %v703
      %705 = vmatmul.f32.gmra.mxu0 %v663
      %v706 = vpop.f32.mrf.mxu0
      %v707 = vadd.f32 0.0, %v706
      %708 = vmatmul.f32.gmra.mxu0 %v666
      %v709 = vpop.f32.mrf.mxu0
      %v710 = vadd.f32 0.0, %v709
      %711 = vmatmul.f32.gmra.mxu0 %v669
      %v712 = vpop.f32.mrf.mxu0
      %v713 = vadd.f32 0.0, %v712
      %714 = vmatmul.f32.gmra.mxu0 %v672
      %v715 = vpop.f32.mrf.mxu0
      %v716 = vadd.f32 0.0, %v715
      %717 = vmatmul.f32.gmra.mxu0 %v675
      %v718 = vpop.f32.mrf.mxu0
      %v719 = vadd.f32 0.0, %v718
      %720 = vmatmul.f32.gmra.mxu0 %v678
      %v721 = vpop.f32.mrf.mxu0
      %v722 = vadd.f32 0.0, %v721
      %723 = vdwg.mxu0
      %v724 = vadd.f32 %v637, %v701
      %v725 = vadd.f32 %v638, %v704
      %v726 = vadd.f32 %v639, %v707
      %v727 = vadd.f32 %v640, %v710
      %v728 = vadd.f32 %v641, %v713
      %v729 = vadd.f32 %v642, %v716
      %v730 = vadd.f32 %v643, %v719
      %v731 = vadd.f32 %v644, %v722
      %v732 = vld [vmem:[%s559 + $0x1] sm:$0xff]
      %v733 = vld [vmem:[%s559 + $0x11] sm:$0xff]
      %v734 = vld [vmem:[%s559 + $0x21] sm:$0xff]
      %v735 = vld [vmem:[%s559 + $0x31] sm:$0xff]
      %v736 = vld [vmem:[%s559 + $0x41] sm:$0xff]
      %v737 = vld [vmem:[%s559 + $0x51] sm:$0xff]
      %v738 = vld [vmem:[%s559 + $0x61] sm:$0xff]
      %v739 = vld [vmem:[%s559 + $0x71] sm:$0xff]
      %s740 = scalar_lea.vmem %s4, 8
      %v741 = vld [vmem:[%s740] sm:$0xf]
      %v743 = vsel %vm447, %v732, 0
      %v746 = vsel %vm447, %v733, 0
      %v749 = vsel %vm447, %v734, 0
      %v752 = vsel %vm447, %v735, 0
      %v755 = vsel %vm447, %v736, 0
      %v758 = vsel %vm447, %v737, 0
      %v761 = vsel %vm447, %v738, 0
      %v764 = vsel %vm447, %v739, 0
      %v767 = vsel %vm472, %v741, 0
      %769 = vmatpush.msra.mxu0 0.0
      %770 = vmatpush.msra.mxu0 0.0
      %771 = vmatpush.msra.mxu0 0.0
      %772 = vmatpush.msra.mxu0 0.0
      %773 = vmatpush.msra.mxu0 0.0
      %774 = vmatpush.msra.mxu0 0.0
      %775 = vmatpush.msra.mxu0 0.0
      %776 = vmatpush.msra.mxu0 0.0
      %777 = vmatpush.msra.mxu0 0.0
      %778 = vmatpush.msra.mxu0 0.0
      %779 = vmatpush.msra.mxu0 0.0
      %780 = vmatpush.msra.mxu0 0.0
      %781 = vmatpush.msra.mxu0 0.0
      %782 = vmatpush.msra.mxu0 0.0
      %783 = vmatpush.msra.mxu0 0.0
      %784 = vmatpush.msra.mxu0 %v767
      %785 = vmatmul.f32.gmra.mxu0 %v743
      %v786 = vpop.f32.mrf.mxu0
      %v787 = vadd.f32 0.0, %v786
      %788 = vmatmul.f32.gmra.mxu0 %v746
      %v789 = vpop.f32.mrf.mxu0
      %v790 = vadd.f32 0.0, %v789
      %791 = vmatmul.f32.gmra.mxu0 %v749
      %v792 = vpop.f32.mrf.mxu0
      %v793 = vadd.f32 0.0, %v792
      %794 = vmatmul.f32.gmra.mxu0 %v752
      %v795 = vpop.f32.mrf.mxu0
      %v796 = vadd.f32 0.0, %v795
      %797 = vmatmul.f32.gmra.mxu0 %v755
      %v798 = vpop.f32.mrf.mxu0
      %v799 = vadd.f32 0.0, %v798
      %800 = vmatmul.f32.gmra.mxu0 %v758
      %v801 = vpop.f32.mrf.mxu0
      %v802 = vadd.f32 0.0, %v801
      %803 = vmatmul.f32.gmra.mxu0 %v761
      %v804 = vpop.f32.mrf.mxu0
      %v805 = vadd.f32 0.0, %v804
      %806 = vmatmul.f32.gmra.mxu0 %v764
      %v807 = vpop.f32.mrf.mxu0
      %v808 = vadd.f32 0.0, %v807
      %809 = vdwg.mxu0
      %v810 = vadd.f32 %v724, %v787
      %v811 = vadd.f32 %v725, %v790
      %v812 = vadd.f32 %v726, %v793
      %v813 = vadd.f32 %v727, %v796
      %v814 = vadd.f32 %v728, %v799
      %v815 = vadd.f32 %v729, %v802
      %v816 = vadd.f32 %v730, %v805
      %v817 = vadd.f32 %v731, %v808
      %s818 = scalar_lea.vmem %s398, %s432
      %v819 = vld [vmem:[%s818] sm:$0xff]
      %v820 = vld [vmem:[%s818 + $0x10] sm:$0xff]
      %v821 = vld [vmem:[%s818 + $0x20] sm:$0xff]
      %v822 = vld [vmem:[%s818 + $0x30] sm:$0xff]
      %v823 = vld [vmem:[%s818 + $0x40] sm:$0xff]
      %v824 = vld [vmem:[%s818 + $0x50] sm:$0xff]
      %v825 = vld [vmem:[%s818 + $0x60] sm:$0xff]
      %v826 = vld [vmem:[%s818 + $0x70] sm:$0xff]
      %s827 = scalar_lea.vmem %s4, 12
      %v828 = vld [vmem:[%s827] sm:$0xf]
      %v830 = vsel %vm447, %v819, 0
      %v833 = vsel %vm447, %v820, 0
      %v836 = vsel %vm447, %v821, 0
      %v839 = vsel %vm447, %v822, 0
      %v842 = vsel %vm447, %v823, 0
      %v845 = vsel %vm447, %v824, 0
      %v848 = vsel %vm447, %v825, 0
      %v851 = vsel %vm447, %v826, 0
      %v854 = vsel %vm472, %v828, 0
      %856 = vmatpush.msra.mxu0 0.0
      %857 = vmatpush.msra.mxu0 0.0
      %858 = vmatpush.msra.mxu0 0.0
      %859 = vmatpush.msra.mxu0 0.0
      %860 = vmatpush.msra.mxu0 0.0
      %861 = vmatpush.msra.mxu0 0.0
      %862 = vmatpush.msra.mxu0 0.0
      %863 = vmatpush.msra.mxu0 0.0
      %864 = vmatpush.msra.mxu0 0.0
      %865 = vmatpush.msra.mxu0 0.0
      %866 = vmatpush.msra.mxu0 0.0
      %867 = vmatpush.msra.mxu0 0.0
      %868 = vmatpush.msra.mxu0 0.0
      %869 = vmatpush.msra.mxu0 0.0
      %870 = vmatpush.msra.mxu0 0.0
      %871 = vmatpush.msra.mxu0 %v854
      %872 = vmatmul.f32.gmra.mxu0 %v830
      %v873 = vpop.f32.mrf.mxu0
      %v874 = vadd.f32 0.0, %v873
      %875 = vmatmul.f32.gmra.mxu0 %v833
      %v876 = vpop.f32.mrf.mxu0
      %v877 = vadd.f32 0.0, %v876
      %878 = vmatmul.f32.gmra.mxu0 %v836
      %v879 = vpop.f32.mrf.mxu0
      %v880 = vadd.f32 0.0, %v879
      %881 = vmatmul.f32.gmra.mxu0 %v839
      %v882 = vpop.f32.mrf.mxu0
      %v883 = vadd.f32 0.0, %v882
      %884 = vmatmul.f32.gmra.mxu0 %v842
      %v885 = vpop.f32.mrf.mxu0
      %v886 = vadd.f32 0.0, %v885
      %887 = vmatmul.f32.gmra.mxu0 %v845
      %v888 = vpop.f32.mrf.mxu0
      %v889 = vadd.f32 0.0, %v888
      %890 = vmatmul.f32.gmra.mxu0 %v848
      %v891 = vpop.f32.mrf.mxu0
      %v892 = vadd.f32 0.0, %v891
      %893 = vmatmul.f32.gmra.mxu0 %v851
      %v894 = vpop.f32.mrf.mxu0
      %v895 = vadd.f32 0.0, %v894
      %896 = vdwg.mxu0
      %v897 = vadd.f32 %v810, %v874
      %v898 = vadd.f32 %v811, %v877
      %v899 = vadd.f32 %v812, %v880
      %v900 = vadd.f32 %v813, %v883
      %v901 = vadd.f32 %v814, %v886
      %v902 = vadd.f32 %v815, %v889
      %v903 = vadd.f32 %v816, %v892
      %v904 = vadd.f32 %v817, %v895
      %v905 = vld [vmem:[%s818 + $0x1] sm:$0xff]
      %v906 = vld [vmem:[%s818 + $0x11] sm:$0xff]
      %v907 = vld [vmem:[%s818 + $0x21] sm:$0xff]
      %v908 = vld [vmem:[%s818 + $0x31] sm:$0xff]
      %v909 = vld [vmem:[%s818 + $0x41] sm:$0xff]
      %v910 = vld [vmem:[%s818 + $0x51] sm:$0xff]
      %v911 = vld [vmem:[%s818 + $0x61] sm:$0xff]
      %v912 = vld [vmem:[%s818 + $0x71] sm:$0xff]
      %s913 = scalar_lea.vmem %s4, 16
      %v914 = vld [vmem:[%s913] sm:$0xf]
      %v916 = vsel %vm447, %v905, 0
      %v919 = vsel %vm447, %v906, 0
      %v922 = vsel %vm447, %v907, 0
      %v925 = vsel %vm447, %v908, 0
      %v928 = vsel %vm447, %v909, 0
      %v931 = vsel %vm447, %v910, 0
      %v934 = vsel %vm447, %v911, 0
      %v937 = vsel %vm447, %v912, 0
      %v940 = vsel %vm472, %v914, 0
      %942 = vmatpush.msra.mxu0 0.0
      %943 = vmatpush.msra.mxu0 0.0
      %944 = vmatpush.msra.mxu0 0.0
      %945 = vmatpush.msra.mxu0 0.0
      %946 = vmatpush.msra.mxu0 0.0
      %947 = vmatpush.msra.mxu0 0.0
      %948 = vmatpush.msra.mxu0 0.0
      %949 = vmatpush.msra.mxu0 0.0
      %950 = vmatpush.msra.mxu0 0.0
      %951 = vmatpush.msra.mxu0 0.0
      %952 = vmatpush.msra.mxu0 0.0
      %953 = vmatpush.msra.mxu0 0.0
      %954 = vmatpush.msra.mxu0 0.0
      %955 = vmatpush.msra.mxu0 0.0
      %956 = vmatpush.msra.mxu0 0.0
      %957 = vmatpush.msra.mxu0 %v940
      %958 = vmatmul.f32.gmra.mxu0 %v916
      %v959 = vpop.f32.mrf.mxu0
      %v960 = vadd.f32 0.0, %v959
      %961 = vmatmul.f32.gmra.mxu0 %v919
      %v962 = vpop.f32.mrf.mxu0
      %v963 = vadd.f32 0.0, %v962
      %964 = vmatmul.f32.gmra.mxu0 %v922
      %v965 = vpop.f32.mrf.mxu0
      %v966 = vadd.f32 0.0, %v965
      %967 = vmatmul.f32.gmra.mxu0 %v925
      %v968 = vpop.f32.mrf.mxu0
      %v969 = vadd.f32 0.0, %v968
      %970 = vmatmul.f32.gmra.mxu0 %v928
      %v971 = vpop.f32.mrf.mxu0
      %v972 = vadd.f32 0.0, %v971
      %973 = vmatmul.f32.gmra.mxu0 %v931
      %v974 = vpop.f32.mrf.mxu0
      %v975 = vadd.f32 0.0, %v974
      %976 = vmatmul.f32.gmra.mxu0 %v934
      %v977 = vpop.f32.mrf.mxu0
      %v978 = vadd.f32 0.0, %v977
      %979 = vmatmul.f32.gmra.mxu0 %v937
      %v980 = vpop.f32.mrf.mxu0
      %v981 = vadd.f32 0.0, %v980
      %982 = vdwg.mxu0
      %v983 = vadd.f32 %v897, %v960
      %v984 = vadd.f32 %v898, %v963
      %v985 = vadd.f32 %v899, %v966
      %v986 = vadd.f32 %v900, %v969
      %v987 = vadd.f32 %v901, %v972
      %v988 = vadd.f32 %v902, %v975
      %v989 = vadd.f32 %v903, %v978
      %v990 = vadd.f32 %v904, %v981
      %s991 = sadd.s32 %s431, 1
      %s992 = smul.u32 %s991, 16
      %s993 = scalar_lea.vmem %s388, %s992
      %v994 = vld [vmem:[%s993] sm:$0xff]
      %v995 = vld [vmem:[%s993 + $0x10] sm:$0xff]
      %v996 = vld [vmem:[%s993 + $0x20] sm:$0xff]
      %v997 = vld [vmem:[%s993 + $0x30] sm:$0xff]
      %v998 = vld [vmem:[%s993 + $0x40] sm:$0xff]
      %v999 = vld [vmem:[%s993 + $0x50] sm:$0xff]
      %v1000 = vld [vmem:[%s993 + $0x60] sm:$0xff]
      %v1001 = vld [vmem:[%s993 + $0x70] sm:$0xff]
      %s1002 = scalar_lea.vmem %s4, 20
      %v1003 = vld [vmem:[%s1002] sm:$0xf]
      %v1005 = vsel %vm447, %v994, 0
      %v1008 = vsel %vm447, %v995, 0
      %v1011 = vsel %vm447, %v996, 0
      %v1014 = vsel %vm447, %v997, 0
      %v1017 = vsel %vm447, %v998, 0
      %v1020 = vsel %vm447, %v999, 0
      %v1023 = vsel %vm447, %v1000, 0
      %v1026 = vsel %vm447, %v1001, 0
      %v1029 = vsel %vm472, %v1003, 0
      %1031 = vmatpush.msra.mxu0 0.0
      %1032 = vmatpush.msra.mxu0 0.0
      %1033 = vmatpush.msra.mxu0 0.0
      %1034 = vmatpush.msra.mxu0 0.0
      %1035 = vmatpush.msra.mxu0 0.0
      %1036 = vmatpush.msra.mxu0 0.0
      %1037 = vmatpush.msra.mxu0 0.0
      %1038 = vmatpush.msra.mxu0 0.0
      %1039 = vmatpush.msra.mxu0 0.0
      %1040 = vmatpush.msra.mxu0 0.0
      %1041 = vmatpush.msra.mxu0 0.0
      %1042 = vmatpush.msra.mxu0 0.0
      %1043 = vmatpush.msra.mxu0 0.0
      %1044 = vmatpush.msra.mxu0 0.0
      %1045 = vmatpush.msra.mxu0 0.0
      %1046 = vmatpush.msra.mxu0 %v1029
      %1047 = vmatmul.f32.gmra.mxu0 %v1005
      %v1048 = vpop.f32.mrf.mxu0
      %v1049 = vadd.f32 0.0, %v1048
      %1050 = vmatmul.f32.gmra.mxu0 %v1008
      %v1051 = vpop.f32.mrf.mxu0
      %v1052 = vadd.f32 0.0, %v1051
      %1053 = vmatmul.f32.gmra.mxu0 %v1011
      %v1054 = vpop.f32.mrf.mxu0
      %v1055 = vadd.f32 0.0, %v1054
      %1056 = vmatmul.f32.gmra.mxu0 %v1014
      %v1057 = vpop.f32.mrf.mxu0
      %v1058 = vadd.f32 0.0, %v1057
      %1059 = vmatmul.f32.gmra.mxu0 %v1017
      %v1060 = vpop.f32.mrf.mxu0
      %v1061 = vadd.f32 0.0, %v1060
      %1062 = vmatmul.f32.gmra.mxu0 %v1020
      %v1063 = vpop.f32.mrf.mxu0
      %v1064 = vadd.f32 0.0, %v1063
      %1065 = vmatmul.f32.gmra.mxu0 %v1023
      %v1066 = vpop.f32.mrf.mxu0
      %v1067 = vadd.f32 0.0, %v1066
      %1068 = vmatmul.f32.gmra.mxu0 %v1026
      %v1069 = vpop.f32.mrf.mxu0
      %v1070 = vadd.f32 0.0, %v1069
      %1071 = vdwg.mxu0
      %v1072 = vadd.f32 %v983, %v1049
      %v1073 = vadd.f32 %v984, %v1052
      %v1074 = vadd.f32 %v985, %v1055
      %v1075 = vadd.f32 %v986, %v1058
      %v1076 = vadd.f32 %v987, %v1061
      %v1077 = vadd.f32 %v988, %v1064
      %v1078 = vadd.f32 %v989, %v1067
      %v1079 = vadd.f32 %v990, %v1070
      %s1080 = scalar_lea.vmem %s393, %s992
      %v1081 = vld [vmem:[%s1080] sm:$0xff]
      %v1082 = vld [vmem:[%s1080 + $0x10] sm:$0xff]
      %v1083 = vld [vmem:[%s1080 + $0x20] sm:$0xff]
      %v1084 = vld [vmem:[%s1080 + $0x30] sm:$0xff]
      %v1085 = vld [vmem:[%s1080 + $0x40] sm:$0xff]
      %v1086 = vld [vmem:[%s1080 + $0x50] sm:$0xff]
      %v1087 = vld [vmem:[%s1080 + $0x60] sm:$0xff]
      %v1088 = vld [vmem:[%s1080 + $0x70] sm:$0xff]
      %s1089 = scalar_lea.vmem %s4, 24
      %v1090 = vld [vmem:[%s1089] sm:$0xf]
      %v1092 = vsel %vm447, %v1081, 0
      %v1095 = vsel %vm447, %v1082, 0
      %v1098 = vsel %vm447, %v1083, 0
      %v1101 = vsel %vm447, %v1084, 0
      %v1104 = vsel %vm447, %v1085, 0
      %v1107 = vsel %vm447, %v1086, 0
      %v1110 = vsel %vm447, %v1087, 0
      %v1113 = vsel %vm447, %v1088, 0
      %v1116 = vsel %vm472, %v1090, 0
      %1118 = vmatpush.msra.mxu0 0.0
      %1119 = vmatpush.msra.mxu0 0.0
      %1120 = vmatpush.msra.mxu0 0.0
      %1121 = vmatpush.msra.mxu0 0.0
      %1122 = vmatpush.msra.mxu0 0.0
      %1123 = vmatpush.msra.mxu0 0.0
      %1124 = vmatpush.msra.mxu0 0.0
      %1125 = vmatpush.msra.mxu0 0.0
      %1126 = vmatpush.msra.mxu0 0.0
      %1127 = vmatpush.msra.mxu0 0.0
      %1128 = vmatpush.msra.mxu0 0.0
      %1129 = vmatpush.msra.mxu0 0.0
      %1130 = vmatpush.msra.mxu0 0.0
      %1131 = vmatpush.msra.mxu0 0.0
      %1132 = vmatpush.msra.mxu0 0.0
      %1133 = vmatpush.msra.mxu0 %v1116
      %1134 = vmatmul.f32.gmra.mxu0 %v1092
      %v1135 = vpop.f32.mrf.mxu0
      %v1136 = vadd.f32 0.0, %v1135
      %1137 = vmatmul.f32.gmra.mxu0 %v1095
      %v1138 = vpop.f32.mrf.mxu0
      %v1139 = vadd.f32 0.0, %v1138
      %1140 = vmatmul.f32.gmra.mxu0 %v1098
      %v1141 = vpop.f32.mrf.mxu0
      %v1142 = vadd.f32 0.0, %v1141
      %1143 = vmatmul.f32.gmra.mxu0 %v1101
      %v1144 = vpop.f32.mrf.mxu0
      %v1145 = vadd.f32 0.0, %v1144
      %1146 = vmatmul.f32.gmra.mxu0 %v1104
      %v1147 = vpop.f32.mrf.mxu0
      %v1148 = vadd.f32 0.0, %v1147
      %1149 = vmatmul.f32.gmra.mxu0 %v1107
      %v1150 = vpop.f32.mrf.mxu0
      %v1151 = vadd.f32 0.0, %v1150
      %1152 = vmatmul.f32.gmra.mxu0 %v1110
      %v1153 = vpop.f32.mrf.mxu0
      %v1154 = vadd.f32 0.0, %v1153
      %1155 = vmatmul.f32.gmra.mxu0 %v1113
      %v1156 = vpop.f32.mrf.mxu0
      %v1157 = vadd.f32 0.0, %v1156
      %1158 = vdwg.mxu0
      %v1159 = vadd.f32 %v1072, %v1136
      %v1160 = vadd.f32 %v1073, %v1139
      %v1161 = vadd.f32 %v1074, %v1142
      %v1162 = vadd.f32 %v1075, %v1145
      %v1163 = vadd.f32 %v1076, %v1148
      %v1164 = vadd.f32 %v1077, %v1151
      %v1165 = vadd.f32 %v1078, %v1154
      %v1166 = vadd.f32 %v1079, %v1157
      %v1167 = vld [vmem:[%s993 + $0x1] sm:$0xff]
      %v1168 = vld [vmem:[%s993 + $0x11] sm:$0xff]
      %v1169 = vld [vmem:[%s993 + $0x21] sm:$0xff]
      %v1170 = vld [vmem:[%s993 + $0x31] sm:$0xff]
      %v1171 = vld [vmem:[%s993 + $0x41] sm:$0xff]
      %v1172 = vld [vmem:[%s993 + $0x51] sm:$0xff]
      %v1173 = vld [vmem:[%s993 + $0x61] sm:$0xff]
      %v1174 = vld [vmem:[%s993 + $0x71] sm:$0xff]
      %s1175 = scalar_lea.vmem %s4, 28
      %v1176 = vld [vmem:[%s1175] sm:$0xf]
      %v1178 = vsel %vm447, %v1167, 0
      %v1181 = vsel %vm447, %v1168, 0
      %v1184 = vsel %vm447, %v1169, 0
      %v1187 = vsel %vm447, %v1170, 0
      %v1190 = vsel %vm447, %v1171, 0
      %v1193 = vsel %vm447, %v1172, 0
      %v1196 = vsel %vm447, %v1173, 0
      %v1199 = vsel %vm447, %v1174, 0
      %v1202 = vsel %vm472, %v1176, 0
      %1204 = vmatpush.msra.mxu0 0.0
      %1205 = vmatpush.msra.mxu0 0.0
      %1206 = vmatpush.msra.mxu0 0.0
      %1207 = vmatpush.msra.mxu0 0.0
      %1208 = vmatpush.msra.mxu0 0.0
      %1209 = vmatpush.msra.mxu0 0.0
      %1210 = vmatpush.msra.mxu0 0.0
      %1211 = vmatpush.msra.mxu0 0.0
      %1212 = vmatpush.msra.mxu0 0.0
      %1213 = vmatpush.msra.mxu0 0.0
      %1214 = vmatpush.msra.mxu0 0.0
      %1215 = vmatpush.msra.mxu0 0.0
      %1216 = vmatpush.msra.mxu0 0.0
      %1217 = vmatpush.msra.mxu0 0.0
      %1218 = vmatpush.msra.mxu0 0.0
      %1219 = vmatpush.msra.mxu0 %v1202
      %1220 = vmatmul.f32.gmra.mxu0 %v1178
      %v1221 = vpop.f32.mrf.mxu0
      %v1222 = vadd.f32 0.0, %v1221
      %1223 = vmatmul.f32.gmra.mxu0 %v1181
      %v1224 = vpop.f32.mrf.mxu0
      %v1225 = vadd.f32 0.0, %v1224
      %1226 = vmatmul.f32.gmra.mxu0 %v1184
      %v1227 = vpop.f32.mrf.mxu0
      %v1228 = vadd.f32 0.0, %v1227
      %1229 = vmatmul.f32.gmra.mxu0 %v1187
      %v1230 = vpop.f32.mrf.mxu0
      %v1231 = vadd.f32 0.0, %v1230
      %1232 = vmatmul.f32.gmra.mxu0 %v1190
      %v1233 = vpop.f32.mrf.mxu0
      %v1234 = vadd.f32 0.0, %v1233
      %1235 = vmatmul.f32.gmra.mxu0 %v1193
      %v1236 = vpop.f32.mrf.mxu0
      %v1237 = vadd.f32 0.0, %v1236
      %1238 = vmatmul.f32.gmra.mxu0 %v1196
      %v1239 = vpop.f32.mrf.mxu0
      %v1240 = vadd.f32 0.0, %v1239
      %1241 = vmatmul.f32.gmra.mxu0 %v1199
      %v1242 = vpop.f32.mrf.mxu0
      %v1243 = vadd.f32 0.0, %v1242
      %1244 = vdwg.mxu0
      %v1245 = vadd.f32 %v1159, %v1222
      %v1246 = vadd.f32 %v1160, %v1225
      %v1247 = vadd.f32 %v1161, %v1228
      %v1248 = vadd.f32 %v1162, %v1231
      %v1249 = vadd.f32 %v1163, %v1234
      %v1250 = vadd.f32 %v1164, %v1237
      %v1251 = vadd.f32 %v1165, %v1240
      %v1252 = vadd.f32 %v1166, %v1243
      %1253 = vst [vmem:[%s412] sm:$0xff] %v1245
      %1254 = vst [vmem:[%s412 + $0x8] sm:$0xff] %v1246
      %1255 = vst [vmem:[%s412 + $0x10] sm:$0xff] %v1247
      %1256 = vst [vmem:[%s412 + $0x18] sm:$0xff] %v1248
      %1257 = vst [vmem:[%s412 + $0x20] sm:$0xff] %v1249
      %1258 = vst [vmem:[%s412 + $0x28] sm:$0xff] %v1250
      %1259 = vst [vmem:[%s412 + $0x30] sm:$0xff] %v1251
      %1260 = vst [vmem:[%s412 + $0x38] sm:$0xff] %v1252
      %1261 = vst [vmem:[%s422] sm:$0xff] %v536
      %1262 = vst [vmem:[%s422 + $0x8] sm:$0xff] %v539
      %1263 = vst [vmem:[%s422 + $0x10] sm:$0xff] %v542
      %1264 = vst [vmem:[%s422 + $0x18] sm:$0xff] %v545
      %1265 = vst [vmem:[%s422 + $0x20] sm:$0xff] %v548
      %1266 = vst [vmem:[%s422 + $0x28] sm:$0xff] %v551
      %1267 = vst [vmem:[%s422 + $0x30] sm:$0xff] %v554
      %1268 = vst [vmem:[%s422 + $0x38] sm:$0xff] %v557
      %v1269 = vadd.f32 %v1245, %v1246
      %v1270 = vadd.f32 %v1269, %v1247
      %v1271 = vadd.f32 %v1270, %v1248
      %v1272 = vadd.f32 %v1271, %v1249
      %v1273 = vadd.f32 %v1272, %v1250
      %v1274 = vadd.f32 %v1273, %v1251
      %v1275 = vadd.f32 %v1274, %v1252
      %v1276 = vrot.slane %v1275, 4
      %v1277 = vadd.f32 %v1275, %v1276
      %v1278 = vrot.slane %v1277, 2
      %v1279 = vadd.f32 %v1277, %v1278
      %v1280 = vrot.slane %v1279, 1
      %v1281 = vadd.f32 %v1279, %v1280
      %v1282 = vmul.f32 %v1245, %v1245
      %v1283 = vmul.f32 %v1246, %v1246
      %v1284 = vmul.f32 %v1247, %v1247
      %v1285 = vmul.f32 %v1248, %v1248
      %v1286 = vmul.f32 %v1249, %v1249
      %v1287 = vmul.f32 %v1250, %v1250
      %v1288 = vmul.f32 %v1251, %v1251
      %v1289 = vmul.f32 %v1252, %v1252
      %v1290 = vadd.f32 %v1282, %v1283
      %v1291 = vadd.f32 %v1290, %v1284
      %v1292 = vadd.f32 %v1291, %v1285
      %v1293 = vadd.f32 %v1292, %v1286
      %v1294 = vadd.f32 %v1293, %v1287
      %v1295 = vadd.f32 %v1294, %v1288
      %v1296 = vadd.f32 %v1295, %v1289
      %v1297 = vrot.slane %v1296, 4
      %v1298 = vadd.f32 %v1296, %v1297
      %v1299 = vrot.slane %v1298, 2
      %v1300 = vadd.f32 %v1298, %v1299
      %v1301 = vrot.slane %v1300, 1
      %v1302 = vadd.f32 %v1300, %v1301
      %v1303 = vadd.f32 %v536, %v539
      %v1304 = vadd.f32 %v1303, %v542
      %v1305 = vadd.f32 %v1304, %v545
      %v1306 = vadd.f32 %v1305, %v548
      %v1307 = vadd.f32 %v1306, %v551
      %v1308 = vadd.f32 %v1307, %v554
      %v1309 = vadd.f32 %v1308, %v557
      %v1310 = vrot.slane %v1309, 4
      %v1311 = vadd.f32 %v1309, %v1310
      %v1312 = vrot.slane %v1311, 2
      %v1313 = vadd.f32 %v1311, %v1312
      %v1314 = vrot.slane %v1313, 1
      %v1315 = vadd.f32 %v1313, %v1314
      %v1316 = vmul.f32 %v536, %v536
      %v1317 = vmul.f32 %v539, %v539
      %v1318 = vmul.f32 %v542, %v542
      %v1319 = vmul.f32 %v545, %v545
      %v1320 = vmul.f32 %v548, %v548
      %v1321 = vmul.f32 %v551, %v551
      %v1322 = vmul.f32 %v554, %v554
      %v1323 = vmul.f32 %v557, %v557
      %v1324 = vadd.f32 %v1316, %v1317
      %v1325 = vadd.f32 %v1324, %v1318
      %v1326 = vadd.f32 %v1325, %v1319
      %v1327 = vadd.f32 %v1326, %v1320
      %v1328 = vadd.f32 %v1327, %v1321
      %v1329 = vadd.f32 %v1328, %v1322
      %v1330 = vadd.f32 %v1329, %v1323
      %v1331 = vrot.slane %v1330, 4
      %v1332 = vadd.f32 %v1330, %v1331
      %v1333 = vrot.slane %v1332, 2
      %v1334 = vadd.f32 %v1332, %v1333
      %v1335 = vrot.slane %v1334, 1
      %v1336 = vadd.f32 %v1334, %v1335
      %vm1337 = vcmask 1040384
      %v1338 = vsel %vm1337, %v1281, %v1302
      %vm1339 = vcmask 1041408
      %v1340 = vsel %vm1339, %v1338, %v1315
      %vm1341 = vcmask 1042432
      %v1342 = vsel %vm1341, %v1340, %v1336
      %v1343 = vsel %vm472, %v1342, 0.0
      %1344 = vst [vmem:[%s430] sm:$0xff] %v1343
      %s1345 = smul.u32 8, %s25
      %p1346 = scmp.lt.s32.totalorder %s24, 1
      %s1347 = scalar_select %p1346, %s24, 1
      %p1348 = scmp.lt.s32.totalorder %s1345, 7
      %s1349 = scalar_select %p1348, %s1345, 7
      %s1350 = smul.addr %s1347, 8
      %s1351 = sadd.s32 %s1349, %s1350
      %s1352 = smul.addr %s1351, 8
      %s1353 = scalar_lea.vmem %s6, %s1352
      %s1354 = smul.u32 8, %s25
      %p1355 = scmp.lt.s32.totalorder %s24, 1
      %s1356 = scalar_select %p1355, %s24, 1
      %p1357 = scmp.lt.s32.totalorder %s1354, 7
      %s1358 = scalar_select %p1357, %s1354, 7
      %s1359 = smul.addr %s1356, 8
      %s1360 = sadd.s32 %s1358, %s1359
      %s1361 = smul.addr %s1360, 8
      %s1362 = scalar_lea.vmem %s7, %s1361
      %p1363 = scmp.lt.s32.totalorder %s24, 1
      %s1364 = scalar_select %p1363, %s24, 1
      %p1365 = scmp.lt.s32.totalorder %s25, 0
      %s1366 = scalar_select %p1365, %s25, 0
      %s1367 = sadd.s32 %s1366, %s1364
      %s1368 = smul.addr %s1367, 8
      %s1369 = scalar_lea.vmem %s8, %s1368
      // Predicated region
      $region45: #{building_block_downsample.3} parent=43 // pred_check
        %p1370 = pneg %p198
      $region46: #{building_block_downsample.3} parent=43 // pred_check_branch
        %1372 = sbr.rel (%p1370) target = $region48
      $region47: #{building_block_downsample.3} parent=43 // pred_region
        %s1373 = smul.u32 8, %s25
      $region48: #{building_block_downsample.3} parent=43 // pred_fallthru
        _
      // Predicated region
      $region49: #{building_block_downsample.3} parent=43 // pred_check
        %p1374 = pneg %p226
      $region50: #{building_block_downsample.3} parent=43 // pred_check_branch
        %1376 = sbr.rel (%p1374) target = $region52
      $region51: #{building_block_downsample.3} parent=43 // pred_region
        %s1377 = smul.u32 8, %s25
      $region52: #{building_block_downsample.3} parent=43 // pred_fallthru
        _
      // Predicated region
      $region53: #{building_block_downsample.3} parent=43 // pred_check
        %p1378 = pneg %p254
      $region54: #{building_block_downsample.3} parent=43 // pred_check_branch
        %1380 = sbr.rel (%p1378) target = $region56
      $region55: #{building_block_downsample.3} parent=43 // pred_region
        _
      $region56: #{building_block_downsample.3} parent=43 // pred_fallthru
        _
    $region44: #{building_block_downsample.3} parent=5 // pred_fallthru
      _
    %p1381 = scmp.le.s32.totalorder 2, %s15
    // Predicated region
    $region57: #{building_block_downsample.3} parent=5 // pred_check
      %p1382 = pneg %p1381
    $region58: #{building_block_downsample.3} parent=5 // pred_check_branch
      %1384 = sbr.rel (%p1382) target = $region60
    $region59: #{building_block_downsample.3} parent=5 // pred_region
      %s1385 = ssub.s32 %s15, 2
      // Predicated region
      $region61: #{building_block_downsample.3} parent=59 // pred_check
        %p1386 = pneg %p204
      $region62: #{building_block_downsample.3} parent=59 // pred_check_branch
        %1388 = sbr.rel (%p1386) target = $region64
      $region63: #{building_block_downsample.3} parent=59 // pred_region
        %s1389 = smul.u32 8, %s27
        %p1390 = scmp.lt.s32.totalorder %s26, 1
        %s1391 = scalar_select %p1390, %s26, 1
        %p1392 = scmp.lt.s32.totalorder %s1389, 7
        %s1393 = scalar_select %p1392, %s1389, 7
        %s1394 = smul.addr %s1391, 8
        %s1395 = sadd.s32 %s1393, %s1394
        %s1396 = smul.addr %s1395, 8
        %s1397 = scalar_lea.vmem %s6, %s1396
      $region64: #{building_block_downsample.3} parent=59 // pred_fallthru
        _
      // Predicated region
      $region65: #{building_block_downsample.3} parent=59 // pred_check
        %p1398 = pneg %p232
      $region66: #{building_block_downsample.3} parent=59 // pred_check_branch
        %1400 = sbr.rel (%p1398) target = $region68
      $region67: #{building_block_downsample.3} parent=59 // pred_region
        %s1401 = smul.u32 8, %s27
        %p1402 = scmp.lt.s32.totalorder %s26, 1
        %s1403 = scalar_select %p1402, %s26, 1
        %p1404 = scmp.lt.s32.totalorder %s1401, 7
        %s1405 = scalar_select %p1404, %s1401, 7
        %s1406 = smul.addr %s1403, 8
        %s1407 = sadd.s32 %s1405, %s1406
        %s1408 = smul.addr %s1407, 8
        %s1409 = scalar_lea.vmem %s7, %s1408
      $region68: #{building_block_downsample.3} parent=59 // pred_fallthru
        _
      // Predicated region
      $region69: #{building_block_downsample.3} parent=59 // pred_check
        %p1410 = pneg %p260
      $region70: #{building_block_downsample.3} parent=59 // pred_check_branch
        %1412 = sbr.rel (%p1410) target = $region72
      $region71: #{building_block_downsample.3} parent=59 // pred_region
        %p1413 = scmp.lt.s32.totalorder %s26, 1
        %s1414 = scalar_select %p1413, %s26, 1
        %p1415 = scmp.lt.s32.totalorder %s27, 0
        %s1416 = scalar_select %p1415, %s27, 0
        %s1417 = sadd.s32 %s1416, %s1414
        %s1418 = smul.addr %s1417, 8
        %s1419 = scalar_lea.vmem %s8, %s1418
      $region72: #{building_block_downsample.3} parent=59 // pred_fallthru
        _
    $region60: #{building_block_downsample.3} parent=5 // pred_fallthru
      _
  $region6: #{building_block_downsample.3} parent=0 // loop_footer
    %s19 = sadd.s32 1, %s15
  $region7: #{building_block_downsample.3} parent=0 // loop_footer_branch
    %14 = sbr.rel target = $region3
  $region8: #{building_block_downsample.3} parent=0 // loop_exit
    _

// kernel: building_block_downsample.4
$region0: #{building_block_downsample.4}
  #allocation0 [shape = 'u32[]', space=smem, size = 0x4, offset = 0x4, fixed_abs, tag = 'smem constant byte address 0x4 - core index']
  #allocation1 [shape = 'u32[72,128]{1,0:T(1,128)}', space=vmem, size = 0x9000, scoped, tag = 'internal scratch']
  #allocation2 [shape = 'f32[10,10,128]{2,1,0:T(8,128)}', space=vmem, size = 0x14000, scoped, tag = 'scratch operand']
  %s0 = inlined_call_operand.vmem [shape: f32[2,8,8,128], index: 0, kind: input, shape index: {}]
  %s1 = inlined_call_operand.vmem [shape: f32[1,128], index: 1, kind: input, shape index: {}]
  %s2 = inlined_call_operand.vmem [shape: f32[1,128], index: 2, kind: input, shape index: {}]
  %s3 = inlined_call_operand.vmem [shape: f32[9,128,128], index: 3, kind: input, shape index: {}]
  %s4 = inlined_call_operand.vmem [shape: f32[2,8,8,128], index: 4, kind: output, shape index: {0}]
  %s5 = inlined_call_operand.vmem [shape: f32[2,1,8,128], index: 5, kind: output, shape index: {1}]
  %6 = xla_tuple %s4, %s5
  %s7 = sld [smem:[#allocation0]]
  $region65: #{building_block_downsample.4} parent=0
    _
  %s9 = ssub.s32 1, %s7
  %s10 = scalar_select 0, %s9, %s7
  loop: start=0, step=1, limit=4
  $region2: #{building_block_downsample.4} parent=0 // loop_pre_header
    _
  $region3: #{building_block_downsample.4} parent=0 // loop_header
    %s12 = sphi 0, %s16
    %p13 = scmp.ge.s32.totalorder %s12, 4
    %s19 = sphi 0, %s31
    %s20 = sphi 0, %s27
    %s21 = sphi 0, %s19
    %s22 = sphi 0, %s20
    %s23 = sphi 0, %s21
    %s24 = sphi 0, %s22
    %s34 = sphi 0, %s36
    %s37 = sphi 0, %s34
    %s38 = sphi 0, %s37
    %s54 = sphi 0, %s38
    %s58 = sphi 0, %s58
    %s60 = sphi 0, %s58
    %s61 = sphi 0, %s60
    %s75 = sphi 0, %s61
    %s79 = sphi 0, %s79
    %s81 = sphi 0, %s79
    %s82 = sphi 0, %s81
    %s96 = sphi 0, %s82
    %s100 = sphi 0, %s100
    %s102 = sphi 0, %s100
    %s103 = sphi 0, %s102
    %s117 = sphi 0, %s103
    %s125 = sphi 0, %s127
    %s128 = sphi 0, %s125
    %s129 = sphi 0, %s128
    %s145 = sphi 0, %s129
    %s153 = sphi 0, %s155
    %s156 = sphi 0, %s153
    %s157 = sphi 0, %s156
    %s173 = sphi 0, %s157
  $region4: #{building_block_downsample.4} parent=0 // loop_header_branch
    %15 = sbr.rel (%p13) target = $region8
  $region5: #{building_block_downsample.4} parent=0 // loop_body
    %s17 = ssub.s32 %s12, 1
    %s18 = ssub.s32 %s12, 2
    %s25 = sadd.s32 1, %s20
    %p26 = scmp.ge.s32.totalorder %s25, 1
    %s27 = scalar_select %p26, 0, %s25
    %s28 = sadd.s32 1, %s19
    %s29 = scalar_select %p26, %s28, %s19
    %p30 = scmp.ge.s32.totalorder %s29, 2
    %s31 = scalar_select %p30, 0, %s29
    %s32 = ssub.s32 %s19, %s31
    %p33 = scmp.eq.s32.totalorder %s32, 0
    %s35 = sadd.s32 %s34, 1
    %s36 = scalar_select %p33, %s34, %s35
    %p39 = pneg %p33
    %p40 = scmp.eq.s32.totalorder %s12, 1
    %p41 = por %p39, %p40
    %p42 = scmp.ne.s32.totalorder %s34, %s37
    %p43 = scmp.eq.s32.totalorder %s12, 0
    %p44 = por %p42, %p43
    %p45 = scmp.ne.s32.totalorder %s34, %s37
    %p46 = scmp.eq.s32.totalorder %s17, 1
    %p47 = por %p45, %p46
    %p48 = scmp.ne.s32.totalorder %s37, %s38
    %p49 = scmp.eq.s32.totalorder %s17, 0
    %p50 = por %p48, %p49
    %p51 = scmp.ne.s32.totalorder %s37, %s38
    %p52 = scmp.eq.s32.totalorder %s18, 1
    %p53 = por %p51, %p52
    %p55 = scmp.ne.s32.totalorder %s38, %s54
    %p56 = scmp.eq.s32.totalorder %s18, 0
    %p57 = por %p55, %p56
    %s59 = sadd.s32 %s58, 1
    %p62 = scmp.eq.s32.totalorder %s12, 1
    %p63 = scmp.ne.s32.totalorder %s58, %s60
    %p64 = scmp.eq.s32.totalorder %s12, 0
    %p65 = por %p63, %p64
    %p66 = scmp.ne.s32.totalorder %s58, %s60
    %p67 = scmp.eq.s32.totalorder %s17, 1
    %p68 = por %p66, %p67
    %p69 = scmp.ne.s32.totalorder %s60, %s61
    %p70 = scmp.eq.s32.totalorder %s17, 0
    %p71 = por %p69, %p70
    %p72 = scmp.ne.s32.totalorder %s60, %s61
    %p73 = scmp.eq.s32.totalorder %s18, 1
    %p74 = por %p72, %p73
    %p76 = scmp.ne.s32.totalorder %s61, %s75
    %p77 = scmp.eq.s32.totalorder %s18, 0
    %p78 = por %p76, %p77
    %s80 = sadd.s32 %s79, 1
    %p83 = scmp.eq.s32.totalorder %s12, 1
    %p84 = scmp.ne.s32.totalorder %s79, %s81
    %p85 = scmp.eq.s32.totalorder %s12, 0
    %p86 = por %p84, %p85
    %p87 = scmp.ne.s32.totalorder %s79, %s81
    %p88 = scmp.eq.s32.totalorder %s17, 1
    %p89 = por %p87, %p88
    %p90 = scmp.ne.s32.totalorder %s81, %s82
    %p91 = scmp.eq.s32.totalorder %s17, 0
    %p92 = por %p90, %p91
    %p93 = scmp.ne.s32.totalorder %s81, %s82
    %p94 = scmp.eq.s32.totalorder %s18, 1
    %p95 = por %p93, %p94
    %p97 = scmp.ne.s32.totalorder %s82, %s96
    %p98 = scmp.eq.s32.totalorder %s18, 0
    %p99 = por %p97, %p98
    %s101 = sadd.s32 %s100, 1
    %p104 = scmp.eq.s32.totalorder %s12, 1
    %p105 = scmp.ne.s32.totalorder %s100, %s102
    %p106 = scmp.eq.s32.totalorder %s12, 0
    %p107 = por %p105, %p106
    %p108 = scmp.ne.s32.totalorder %s100, %s102
    %p109 = scmp.eq.s32.totalorder %s17, 1
    %p110 = por %p108, %p109
    %p111 = scmp.ne.s32.totalorder %s102, %s103
    %p112 = scmp.eq.s32.totalorder %s17, 0
    %p113 = por %p111, %p112
    %p114 = scmp.ne.s32.totalorder %s102, %s103
    %p115 = scmp.eq.s32.totalorder %s18, 1
    %p116 = por %p114, %p115
    %p118 = scmp.ne.s32.totalorder %s103, %s117
    %p119 = scmp.eq.s32.totalorder %s18, 0
    %p120 = por %p118, %p119
    %s121 = ssub.s32 %s19, %s31
    %s122 = ssub.s32 %s20, %s27
    %s123 = sor.u32 %s121, %s122
    %p124 = scmp.eq.s32.totalorder %s123, 0
    %s126 = sadd.s32 %s125, 1
    %s127 = scalar_select %p124, %s125, %s126
    %p130 = pneg %p124
    %p131 = scmp.eq.s32.totalorder %s12, 1
    %p132 = por %p130, %p131
    %p133 = scmp.ne.s32.totalorder %s125, %s128
    %p134 = scmp.eq.s32.totalorder %s12, 0
    %p135 = por %p133, %p134
    %p136 = scmp.ne.s32.totalorder %s125, %s128
    %p137 = scmp.eq.s32.totalorder %s17, 1
    %p138 = por %p136, %p137
    %p139 = scmp.ne.s32.totalorder %s128, %s129
    %p140 = scmp.eq.s32.totalorder %s17, 0
    %p141 = por %p139, %p140
    %p142 = scmp.ne.s32.totalorder %s128, %s129
    %p143 = scmp.eq.s32.totalorder %s18, 1
    %p144 = por %p142, %p143
    %p146 = scmp.ne.s32.totalorder %s129, %s145
    %p147 = scmp.eq.s32.totalorder %s18, 0
    %p148 = por %p146, %p147
    %s149 = ssub.s32 %s19, %s31
    %s150 = ssub.s32 %s20, %s27
    %s151 = sor.u32 %s149, %s150
    %p152 = scmp.eq.s32.totalorder %s151, 0
    %s154 = sadd.s32 %s153, 1
    %s155 = scalar_select %p152, %s153, %s154
    %p158 = pneg %p152
    %p159 = scmp.eq.s32.totalorder %s12, 1
    %p160 = por %p158, %p159
    %p161 = scmp.ne.s32.totalorder %s153, %s156
    %p162 = scmp.eq.s32.totalorder %s12, 0
    %p163 = por %p161, %p162
    %p164 = scmp.ne.s32.totalorder %s153, %s156
    %p165 = scmp.eq.s32.totalorder %s17, 1
    %p166 = por %p164, %p165
    %p167 = scmp.ne.s32.totalorder %s156, %s157
    %p168 = scmp.eq.s32.totalorder %s17, 0
    %p169 = por %p167, %p168
    %p170 = scmp.ne.s32.totalorder %s156, %s157
    %p171 = scmp.eq.s32.totalorder %s18, 1
    %p172 = por %p170, %p171
    %p174 = scmp.ne.s32.totalorder %s157, %s173
    %p175 = scmp.eq.s32.totalorder %s18, 0
    %p176 = por %p174, %p175
    %p177 = scmp.le.s32.totalorder 1, %s12
    %p178 = scmp.lt.s32.totalorder %s12, 3
    %p179 = pnand %p177, %p178
    %p180 = pneg %p179
    // Predicated region
    $region9: #{building_block_downsample.4} parent=5 // pred_check
      _
    $region10: #{building_block_downsample.4} parent=5 // pred_check_branch
      %182 = sbr.rel (%p179) target = $region12
    $region11: #{building_block_downsample.4} parent=5 // pred_region
      %s183 = ssub.s32 %s12, 1
      // Predicated region
      $region13: #{building_block_downsample.4} parent=11 // pred_check
        %p184 = pneg %p71
      $region14: #{building_block_downsample.4} parent=11 // pred_check_branch
        %186 = sbr.rel (%p184) target = $region16
      $region15: #{building_block_downsample.4} parent=11 // pred_region
        _
      $region16: #{building_block_downsample.4} parent=11 // pred_fallthru
        _
      // Predicated region
      $region17: #{building_block_downsample.4} parent=11 // pred_check
        %p187 = pneg %p92
      $region18: #{building_block_downsample.4} parent=11 // pred_check_branch
        %189 = sbr.rel (%p187) target = $region20
      $region19: #{building_block_downsample.4} parent=11 // pred_region
        _
      $region20: #{building_block_downsample.4} parent=11 // pred_fallthru
        _
      // Predicated region
      $region21: #{building_block_downsample.4} parent=11 // pred_check
        %p190 = pneg %p113
      $region22: #{building_block_downsample.4} parent=11 // pred_check_branch
        %192 = sbr.rel (%p190) target = $region24
      $region23: #{building_block_downsample.4} parent=11 // pred_region
        _
      $region24: #{building_block_downsample.4} parent=11 // pred_fallthru
        _
    $region12: #{building_block_downsample.4} parent=5 // pred_fallthru
      _
    %p193 = scmp.lt.s32.totalorder %s12, 2
    // Predicated region
    $region25: #{building_block_downsample.4} parent=5 // pred_check
      %p194 = pneg %p193
    $region26: #{building_block_downsample.4} parent=5 // pred_check_branch
      %196 = sbr.rel (%p194) target = $region28
    $region27: #{building_block_downsample.4} parent=5 // pred_region
      // Predicated region
      $region29: #{building_block_downsample.4} parent=27 // pred_check
        %p197 = pneg %p44
      $region30: #{building_block_downsample.4} parent=27 // pred_check_branch
        %199 = sbr.rel (%p197) target = $region32
      $region31: #{building_block_downsample.4} parent=27 // pred_region
        %p200 = scmp.lt.s32.totalorder %s19, 1
        %s201 = scalar_select %p200, %s19, 1
        %s202 = smul.addr %s201, 8
        %s203 = smul.addr %s202, 8
        %s204 = scalar_lea.vmem %s0, %s203
      $region32: #{building_block_downsample.4} parent=27 // pred_fallthru
        _
    $region28: #{building_block_downsample.4} parent=5 // pred_fallthru
      _
    %p205 = scmp.le.s32.totalorder 1, %s12
    %p206 = scmp.lt.s32.totalorder %s12, 3
    %p207 = pnand %p205, %p206
    %p208 = pneg %p207
    // Predicated region
    $region33: #{building_block_downsample.4} parent=5 // pred_check
      _
    $region34: #{building_block_downsample.4} parent=5 // pred_check_branch
      %210 = sbr.rel (%p207) target = $region36
    $region35: #{building_block_downsample.4} parent=5 // pred_region
      %s211 = ssub.s32 %s12, 1
      %p212 = scmp.lt.s32.totalorder %s21, 1
      %s213 = scalar_select %p212, %s21, 1
      %s214 = smul.addr %s213, 8
      %s215 = smul.addr %s214, 8
      %s216 = scalar_lea.vmem %s0, %s215
      %p217 = pneg %p50
      %p218 = pneg %p47
      %p219 = pneg %p71
      %p220 = pneg %p68
      %p221 = pneg %p92
      %p222 = pneg %p89
      %p223 = pneg %p113
      %p224 = pneg %p110
      %p225 = pneg %p141
      %p226 = pneg %p138
      %s227 = smul.u32 8, %s22
      %p228 = scmp.lt.s32.totalorder %s21, 1
      %s229 = scalar_select %p228, %s21, 1
      %p230 = scmp.lt.s32.totalorder %s227, 7
      %s231 = scalar_select %p230, %s227, 7
      %s232 = smul.addr %s229, 8
      %s233 = sadd.s32 %s231, %s232
      %s234 = smul.addr %s233, 8
      %s235 = scalar_lea.vmem %s4, %s234
      %p236 = pneg %p169
      %p237 = pneg %p166
      %p238 = scmp.lt.s32.totalorder %s21, 1
      %s239 = scalar_select %p238, %s21, 1
      %p240 = scmp.lt.s32.totalorder %s22, 0
      %s241 = scalar_select %p240, %s22, 0
      %s242 = sadd.s32 %s241, %s239
      %s243 = smul.addr %s242, 8
      %s244 = scalar_lea.vmem %s5, %s243
      %p245 = scmp.lt.s32.totalorder %s21, 1
      %s246 = scalar_select %p245, %s21, 1
      %s247 = smul.addr %s246, 8
      %s248 = smul.addr %s247, 8
      %s249 = scalar_lea.vmem %s0, %s248
      %s250 = smul.u32 8, %s22
      %p251 = scmp.lt.s32.totalorder %s21, 1
      %s252 = scalar_select %p251, %s21, 1
      %p253 = scmp.lt.s32.totalorder %s250, 7
      %s254 = scalar_select %p253, %s250, 7
      %s255 = smul.addr %s252, 8
      %s256 = sadd.s32 %s254, %s255
      %s257 = smul.addr %s256, 8
      %s258 = scalar_lea.vmem %s4, %s257
      %s259 = smul.u32 8, %s22
      %p260 = scmp.lt.s32.totalorder %s21, 1
      %s261 = scalar_select %p260, %s21, 1
      %p262 = scmp.lt.s32.totalorder %s22, 0
      %s263 = scalar_select %p262, %s22, 0
      %s264 = sadd.s32 %s263, %s261
      %s265 = smul.addr %s264, 8
      %s266 = scalar_lea.vmem %s5, %s265
      %s267 = smul.u32 %s22, 8
      %v268 = vld [vmem:[%s1] sm:$0x1]
      %v269 = vld [vmem:[%s2] sm:$0x1]
      %270 = vst [vmem:[#allocation2] sm:$0xff] 0.0
      %271 = vst [vmem:[#allocation2 + $0x8] sm:$0x3] 0.0
      %272 = vst [vmem:[#allocation2 + $0x10] sm:$0xff] 0.0
      %273 = vst [vmem:[#allocation2 + $0x18] sm:$0x3] 0.0
      %274 = vst [vmem:[#allocation2 + $0x20] sm:$0xff] 0.0
      %275 = vst [vmem:[#allocation2 + $0x28] sm:$0x3] 0.0
      %276 = vst [vmem:[#allocation2 + $0x30] sm:$0xff] 0.0
      %277 = vst [vmem:[#allocation2 + $0x38] sm:$0x3] 0.0
      %278 = vst [vmem:[#allocation2 + $0x40] sm:$0xff] 0.0
      %279 = vst [vmem:[#allocation2 + $0x48] sm:$0x3] 0.0
      %280 = vst [vmem:[#allocation2 + $0x50] sm:$0xff] 0.0
      %281 = vst [vmem:[#allocation2 + $0x58] sm:$0x3] 0.0
      %282 = vst [vmem:[#allocation2 + $0x60] sm:$0xff] 0.0
      %283 = vst [vmem:[#allocation2 + $0x68] sm:$0x3] 0.0
      %284 = vst [vmem:[#allocation2 + $0x70] sm:$0xff] 0.0
      %285 = vst [vmem:[#allocation2 + $0x78] sm:$0x3] 0.0
      %286 = vst [vmem:[#allocation2 + $0x80] sm:$0xff] 0.0
      %287 = vst [vmem:[#allocation2 + $0x88] sm:$0x3] 0.0
      %288 = vst [vmem:[#allocation2 + $0x90] sm:$0xff] 0.0
      %289 = vst [vmem:[#allocation2 + $0x98] sm:$0x3] 0.0
      %s290 = smul.u32 %s267, 8
      %s291 = scalar_lea.vmem %s249, %s290
      %v292 = vld [vmem:[%s291] sm:$0xff]
      %v293 = vld [vmem:[%s291 + $0x8] sm:$0xff]
      %v294 = vld [vmem:[%s291 + $0x10] sm:$0xff]
      %v295 = vld [vmem:[%s291 + $0x18] sm:$0xff]
      %v296 = vld [vmem:[%s291 + $0x20] sm:$0xff]
      %v297 = vld [vmem:[%s291 + $0x28] sm:$0xff]
      %v298 = vld [vmem:[%s291 + $0x30] sm:$0xff]
      %v299 = vld [vmem:[%s291 + $0x38] sm:$0xff]
      %v301 = vperm.slane %v268, 0
      %v303 = vmul.f32 %v292, %v301
      %v304 = vmul.f32 %v293, %v301
      %v305 = vmul.f32 %v294, %v301
      %v306 = vmul.f32 %v295, %v301
      %v307 = vmul.f32 %v296, %v301
      %v308 = vmul.f32 %v297, %v301
      %v309 = vmul.f32 %v298, %v301
      %v310 = vmul.f32 %v299, %v301
      %v312 = vperm.slane %v269, 0
      %v314 = vadd.f32 %v303, %v312
      %v315 = vadd.f32 %v304, %v312
      %v316 = vadd.f32 %v305, %v312
      %v317 = vadd.f32 %v306, %v312
      %v318 = vadd.f32 %v307, %v312
      %v319 = vadd.f32 %v308, %v312
      %v320 = vadd.f32 %v309, %v312
      %v321 = vadd.f32 %v310, %v312
      %v322 = vmax.f32 %v314, 0.0
      %v323 = vmax.f32 %v315, 0.0
      %v324 = vmax.f32 %v316, 0.0
      %v325 = vmax.f32 %v317, 0.0
      %v326 = vmax.f32 %v318, 0.0
      %v327 = vmax.f32 %v319, 0.0
      %v328 = vmax.f32 %v320, 0.0
      %v329 = vmax.f32 %v321, 0.0
      %s330 = scalar_lea.vmem [#allocation2], 16
      %331 = vst [vmem:[%s330 + $0x1] sm:$0xff] %v322
      %332 = vst [vmem:[%s330 + $0x11] sm:$0xff] %v323
      %333 = vst [vmem:[%s330 + $0x21] sm:$0xff] %v324
      %334 = vst [vmem:[%s330 + $0x31] sm:$0xff] %v325
      %335 = vst [vmem:[%s330 + $0x41] sm:$0xff] %v326
      %336 = vst [vmem:[%s330 + $0x51] sm:$0xff] %v327
      %337 = vst [vmem:[%s330 + $0x61] sm:$0xff] %v328
      %338 = vst [vmem:[%s330 + $0x71] sm:$0xff] %v329
      %p339 = scmp.gt.s32.totalorder %s22, 0
      // Predicated region
      $region37: #{building_block_downsample.4} parent=35 // pred_check
        %p340 = pneg %p339
      $region38: #{building_block_downsample.4} parent=35 // pred_check_branch
        %342 = sbr.rel (%p340) target = $region40
      $region39: #{building_block_downsample.4} parent=35 // pred_region
        %s343 = ssub.s32 %s267, 1
        %s344 = smul.u32 %s343, 8
        %s345 = scalar_lea.vmem %s249, %s344
        %v346 = vld [vmem:[%s345] sm:$0xff]
        %v347 = vmul.f32 %v346, %v301
        %v348 = vadd.f32 %v347, %v312
        %v349 = vmax.f32 %v348, 0.0
        %350 = vst [vmem:[#allocation2 + $0x1] sm:$0xff] %v349
      $region40: #{building_block_downsample.4} parent=35 // pred_fallthru
        _
      %p351 = scmp.lt.s32.totalorder %s22, 0
      // Predicated region
      $region41: #{building_block_downsample.4} parent=35 // pred_check
        %p352 = pneg %p351
      $region42: #{building_block_downsample.4} parent=35 // pred_check_branch
        %354 = sbr.rel (%p352) target = $region44
      $region43: #{building_block_downsample.4} parent=35 // pred_region
        %s355 = sadd.s32 %s267, 8
        %s356 = smul.u32 %s355, 8
        %s357 = scalar_lea.vmem %s249, %s356
        %v358 = vld [vmem:[%s357] sm:$0xff]
        %v359 = vmul.f32 %v358, %v301
        %v360 = vadd.f32 %v359, %v312
        %v361 = vmax.f32 %v360, 0.0
        %s362 = scalar_lea.vmem [#allocation2], 144
        %363 = vst [vmem:[%s362 + $0x1] sm:$0xff] %v361
      $region44: #{building_block_downsample.4} parent=35 // pred_fallthru
        _
      %v364 = vld [vmem:[#allocation2] sm:$0xff]
      %v365 = vld [vmem:[#allocation2 + $0x10] sm:$0xff]
      %v366 = vld [vmem:[#allocation2 + $0x20] sm:$0xff]
      %v367 = vld [vmem:[#allocation2 + $0x30] sm:$0xff]
      %v368 = vld [vmem:[#allocation2 + $0x40] sm:$0xff]
      %v369 = vld [vmem:[#allocation2 + $0x50] sm:$0xff]
      %v370 = vld [vmem:[#allocation2 + $0x60] sm:$0xff]
      %v371 = vld [vmem:[#allocation2 + $0x70] sm:$0xff]
      %v372 = vld [vmem:[%s3] sm:$0xff]
      %v373 = vld [vmem:[%s3 + $0x8] sm:$0xff]
      %v374 = vld [vmem:[%s3 + $0x10] sm:$0xff]
      %v375 = vld [vmem:[%s3 + $0x18] sm:$0xff]
      %v376 = vld [vmem:[%s3 + $0x20] sm:$0xff]
      %v377 = vld [vmem:[%s3 + $0x28] sm:$0xff]
      %v378 = vld [vmem:[%s3 + $0x30] sm:$0xff]
      %v379 = vld [vmem:[%s3 + $0x38] sm:$0xff]
      %v380 = vld [vmem:[%s3 + $0x40] sm:$0xff]
      %v381 = vld [vmem:[%s3 + $0x48] sm:$0xff]
      %v382 = vld [vmem:[%s3 + $0x50] sm:$0xff]
      %v383 = vld [vmem:[%s3 + $0x58] sm:$0xff]
      %v384 = vld [vmem:[%s3 + $0x60] sm:$0xff]
      %v385 = vld [vmem:[%s3 + $0x68] sm:$0xff]
      %v386 = vld [vmem:[%s3 + $0x70] sm:$0xff]
      %v387 = vld [vmem:[%s3 + $0x78] sm:$0xff]
      %v388 = vld [vmem:[#allocation2 + $0x1] sm:$0xff]
      %v389 = vld [vmem:[#allocation2 + $0x11] sm:$0xff]
      %v390 = vld [vmem:[#allocation2 + $0x21] sm:$0xff]
      %v391 = vld [vmem:[#allocation2 + $0x31] sm:$0xff]
      %v392 = vld [vmem:[#allocation2 + $0x41] sm:$0xff]
      %v393 = vld [vmem:[#allocation2 + $0x51] sm:$0xff]
      %v394 = vld [vmem:[#allocation2 + $0x61] sm:$0xff]
      %v395 = vld [vmem:[#allocation2 + $0x71] sm:$0xff]
      %s396 = scalar_lea.vmem %s3, 128
      %v397 = vld [vmem:[%s396] sm:$0xff]
      %v398 = vld [vmem:[%s396 + $0x8] sm:$0xff]
      %v399 = vld [vmem:[%s396 + $0x10] sm:$0xff]
      %v400 = vld [vmem:[%s396 + $0x18] sm:$0xff]
      %v401 = vld [vmem:[%s396 + $0x20] sm:$0xff]
      %v402 = vld [vmem:[%s396 + $0x28] sm:$0xff]
      %v403 = vld [vmem:[%s396 + $0x30] sm:$0xff]
      %v404 = vld [vmem:[%s396 + $0x38] sm:$0xff]
      %v405 = vld [vmem:[%s396 + $0x40] sm:$0xff]
      %v406 = vld [vmem:[%s396 + $0x48] sm:$0xff]
      %v407 = vld [vmem:[%s396 + $0x50] sm:$0xff]
      %v408 = vld [vmem:[%s396 + $0x58] sm:$0xff]
      %v409 = vld [vmem:[%s396 + $0x60] sm:$0xff]
      %v410 = vld [vmem:[%s396 + $0x68] sm:$0xff]
      %v411 = vld [vmem:[%s396 + $0x70] sm:$0xff]
      %v412 = vld [vmem:[%s396 + $0x78] sm:$0xff]
      %413 = vmatpush.msra.mxu0 %v412
      %414 = vmatpush.msra.mxu0 %v411
      %415 = vmatpush.msra.mxu0 %v410
      %416 = vmatpush.msra.mxu0 %v409
      %417 = vmatpush.msra.mxu0 %v408
      %418 = vmatpush.msra.mxu0 %v407
      %419 = vmatpush.msra.mxu0 %v406
      %420 = vmatpush.msra.mxu0 %v405
      %421 = vmatpush.msra.mxu0 %v404
      %422 = vmatpush.msra.mxu0 %v403
      %423 = vmatpush.msra.mxu0 %v402
      %424 = vmatpush.msra.mxu0 %v401
      %425 = vmatpush.msra.mxu0 %v400
      %426 = vmatpush.msra.mxu0 %v399
      %427 = vmatpush.msra.mxu0 %v398
      %428 = vmatpush.msra.mxu0 %v397
      %429 = vmatmul.f32.gmra.mxu0 %v388
      %v430 = vpop.f32.mrf.mxu0
      %v431 = vadd.f32 0.0, %v430
      %432 = vmatmul.f32.gmra.mxu0 %v389
      %v433 = vpop.f32.mrf.mxu0
      %v434 = vadd.f32 0.0, %v433
      %435 = vmatmul.f32.gmra.mxu0 %v390
      %v436 = vpop.f32.mrf.mxu0
      %v437 = vadd.f32 0.0, %v436
      %438 = vmatmul.f32.gmra.mxu0 %v391
      %v439 = vpop.f32.mrf.mxu0
      %v440 = vadd.f32 0.0, %v439
      %441 = vmatmul.f32.gmra.mxu0 %v392
      %v442 = vpop.f32.mrf.mxu0
      %v443 = vadd.f32 0.0, %v442
      %444 = vmatmul.f32.gmra.mxu0 %v393
      %v445 = vpop.f32.mrf.mxu0
      %v446 = vadd.f32 0.0, %v445
      %447 = vmatmul.f32.gmra.mxu0 %v394
      %v448 = vpop.f32.mrf.mxu0
      %v449 = vadd.f32 0.0, %v448
      %450 = vmatmul.f32.gmra.mxu0 %v395
      %v451 = vpop.f32.mrf.mxu0
      %v452 = vadd.f32 0.0, %v451
      %453 = vdwg.mxu0
      %454 = vmatpush.msra.mxu0 %v387
      %455 = vmatpush.msra.mxu0 %v386
      %456 = vmatpush.msra.mxu0 %v385
      %457 = vmatpush.msra.mxu0 %v384
      %458 = vmatpush.msra.mxu0 %v383
      %459 = vmatpush.msra.mxu0 %v382
      %460 = vmatpush.msra.mxu0 %v381
      %461 = vmatpush.msra.mxu0 %v380
      %462 = vmatpush.msra.mxu0 %v379
      %463 = vmatpush.msra.mxu0 %v378
      %464 = vmatpush.msra.mxu0 %v377
      %465 = vmatpush.msra.mxu0 %v376
      %466 = vmatpush.msra.mxu0 %v375
      %467 = vmatpush.msra.mxu0 %v374
      %468 = vmatpush.msra.mxu0 %v373
      %469 = vmatpush.msra.mxu0 %v372
      %470 = vmatmul.f32.gmra.mxu0 %v364
      %v471 = vpop.f32.mrf.mxu0
      %v472 = vadd.f32 %v431, %v471
      %473 = vmatmul.f32.gmra.mxu0 %v365
      %v474 = vpop.f32.mrf.mxu0
      %v475 = vadd.f32 %v434, %v474
      %476 = vmatmul.f32.gmra.mxu0 %v366
      %v477 = vpop.f32.mrf.mxu0
      %v478 = vadd.f32 %v437, %v477
      %479 = vmatmul.f32.gmra.mxu0 %v367
      %v480 = vpop.f32.mrf.mxu0
      %v481 = vadd.f32 %v440, %v480
      %482 = vmatmul.f32.gmra.mxu0 %v368
      %v483 = vpop.f32.mrf.mxu0
      %v484 = vadd.f32 %v443, %v483
      %485 = vmatmul.f32.gmra.mxu0 %v369
      %v486 = vpop.f32.mrf.mxu0
      %v487 = vadd.f32 %v446, %v486
      %488 = vmatmul.f32.gmra.mxu0 %v370
      %v489 = vpop.f32.mrf.mxu0
      %v490 = vadd.f32 %v449, %v489
      %491 = vmatmul.f32.gmra.mxu0 %v371
      %v492 = vpop.f32.mrf.mxu0
      %v493 = vadd.f32 %v452, %v492
      %494 = vdwg.mxu0
      %v495 = vld [vmem:[#allocation2 + $0x2] sm:$0xff]
      %v496 = vld [vmem:[#allocation2 + $0x12] sm:$0xff]
      %v497 = vld [vmem:[#allocation2 + $0x22] sm:$0xff]
      %v498 = vld [vmem:[#allocation2 + $0x32] sm:$0xff]
      %v499 = vld [vmem:[#allocation2 + $0x42] sm:$0xff]
      %v500 = vld [vmem:[#allocation2 + $0x52] sm:$0xff]
      %v501 = vld [vmem:[#allocation2 + $0x62] sm:$0xff]
      %v502 = vld [vmem:[#allocation2 + $0x72] sm:$0xff]
      %s503 = scalar_lea.vmem %s3, 256
      %v504 = vld [vmem:[%s503] sm:$0xff]
      %v505 = vld [vmem:[%s503 + $0x8] sm:$0xff]
      %v506 = vld [vmem:[%s503 + $0x10] sm:$0xff]
      %v507 = vld [vmem:[%s503 + $0x18] sm:$0xff]
      %v508 = vld [vmem:[%s503 + $0x20] sm:$0xff]
      %v509 = vld [vmem:[%s503 + $0x28] sm:$0xff]
      %v510 = vld [vmem:[%s503 + $0x30] sm:$0xff]
      %v511 = vld [vmem:[%s503 + $0x38] sm:$0xff]
      %v512 = vld [vmem:[%s503 + $0x40] sm:$0xff]
      %v513 = vld [vmem:[%s503 + $0x48] sm:$0xff]
      %v514 = vld [vmem:[%s503 + $0x50] sm:$0xff]
      %v515 = vld [vmem:[%s503 + $0x58] sm:$0xff]
      %v516 = vld [vmem:[%s503 + $0x60] sm:$0xff]
      %v517 = vld [vmem:[%s503 + $0x68] sm:$0xff]
      %v518 = vld [vmem:[%s503 + $0x70] sm:$0xff]
      %v519 = vld [vmem:[%s503 + $0x78] sm:$0xff]
      %520 = vmatpush.msra.mxu0 %v519
      %521 = vmatpush.msra.mxu0 %v518
      %522 = vmatpush.msra.mxu0 %v517
      %523 = vmatpush.msra.mxu0 %v516
      %524 = vmatpush.msra.mxu0 %v515
      %525 = vmatpush.msra.mxu0 %v514
      %526 = vmatpush.msra.mxu0 %v513
      %527 = vmatpush.msra.mxu0 %v512
      %528 = vmatpush.msra.mxu0 %v511
      %529 = vmatpush.msra.mxu0 %v510
      %530 = vmatpush.msra.mxu0 %v509
      %531 = vmatpush.msra.mxu0 %v508
      %532 = vmatpush.msra.mxu0 %v507
      %533 = vmatpush.msra.mxu0 %v506
      %534 = vmatpush.msra.mxu0 %v505
      %535 = vmatpush.msra.mxu0 %v504
      %536 = vmatmul.f32.gmra.mxu0 %v495
      %v537 = vpop.f32.mrf.mxu0
      %v538 = vadd.f32 0.0, %v537
      %539 = vmatmul.f32.gmra.mxu0 %v496
      %v540 = vpop.f32.mrf.mxu0
      %v541 = vadd.f32 0.0, %v540
      %542 = vmatmul.f32.gmra.mxu0 %v497
      %v543 = vpop.f32.mrf.mxu0
      %v544 = vadd.f32 0.0, %v543
      %545 = vmatmul.f32.gmra.mxu0 %v498
      %v546 = vpop.f32.mrf.mxu0
      %v547 = vadd.f32 0.0, %v546
      %548 = vmatmul.f32.gmra.mxu0 %v499
      %v549 = vpop.f32.mrf.mxu0
      %v550 = vadd.f32 0.0, %v549
      %551 = vmatmul.f32.gmra.mxu0 %v500
      %v552 = vpop.f32.mrf.mxu0
      %v553 = vadd.f32 0.0, %v552
      %554 = vmatmul.f32.gmra.mxu0 %v501
      %v555 = vpop.f32.mrf.mxu0
      %v556 = vadd.f32 0.0, %v555
      %557 = vmatmul.f32.gmra.mxu0 %v502
      %v558 = vpop.f32.mrf.mxu0
      %v559 = vadd.f32 0.0, %v558
      %560 = vdwg.mxu0
      %v561 = vadd.f32 %v472, %v538
      %v562 = vadd.f32 %v475, %v541
      %v563 = vadd.f32 %v478, %v544
      %v564 = vadd.f32 %v481, %v547
      %v565 = vadd.f32 %v484, %v550
      %v566 = vadd.f32 %v487, %v553
      %v567 = vadd.f32 %v490, %v556
      %v568 = vadd.f32 %v493, %v559
      %v569 = vld [vmem:[%s330] sm:$0xff]
      %v570 = vld [vmem:[%s330 + $0x10] sm:$0xff]
      %v571 = vld [vmem:[%s330 + $0x20] sm:$0xff]
      %v572 = vld [vmem:[%s330 + $0x30] sm:$0xff]
      %v573 = vld [vmem:[%s330 + $0x40] sm:$0xff]
      %v574 = vld [vmem:[%s330 + $0x50] sm:$0xff]
      %v575 = vld [vmem:[%s330 + $0x60] sm:$0xff]
      %v576 = vld [vmem:[%s330 + $0x70] sm:$0xff]
      %s577 = scalar_lea.vmem %s3, 384
      %v578 = vld [vmem:[%s577] sm:$0xff]
      %v579 = vld [vmem:[%s577 + $0x8] sm:$0xff]
      %v580 = vld [vmem:[%s577 + $0x10] sm:$0xff]
      %v581 = vld [vmem:[%s577 + $0x18] sm:$0xff]
      %v582 = vld [vmem:[%s577 + $0x20] sm:$0xff]
      %v583 = vld [vmem:[%s577 + $0x28] sm:$0xff]
      %v584 = vld [vmem:[%s577 + $0x30] sm:$0xff]
      %v585 = vld [vmem:[%s577 + $0x38] sm:$0xff]
      %v586 = vld [vmem:[%s577 + $0x40] sm:$0xff]
      %v587 = vld [vmem:[%s577 + $0x48] sm:$0xff]
      %v588 = vld [vmem:[%s577 + $0x50] sm:$0xff]
      %v589 = vld [vmem:[%s577 + $0x58] sm:$0xff]
      %v590 = vld [vmem:[%s577 + $0x60] sm:$0xff]
      %v591 = vld [vmem:[%s577 + $0x68] sm:$0xff]
      %v592 = vld [vmem:[%s577 + $0x70] sm:$0xff]
      %v593 = vld [vmem:[%s577 + $0x78] sm:$0xff]
      %594 = vmatpush.msra.mxu0 %v593
      %595 = vmatpush.msra.mxu0 %v592
      %596 = vmatpush.msra.mxu0 %v591
      %597 = vmatpush.msra.mxu0 %v590
      %598 = vmatpush.msra.mxu0 %v589
      %599 = vmatpush.msra.mxu0 %v588
      %600 = vmatpush.msra.mxu0 %v587
      %601 = vmatpush.msra.mxu0 %v586
      %602 = vmatpush.msra.mxu0 %v585
      %603 = vmatpush.msra.mxu0 %v584
      %604 = vmatpush.msra.mxu0 %v583
      %605 = vmatpush.msra.mxu0 %v582
      %606 = vmatpush.msra.mxu0 %v581
      %607 = vmatpush.msra.mxu0 %v580
      %608 = vmatpush.msra.mxu0 %v579
      %609 = vmatpush.msra.mxu0 %v578
      %610 = vmatmul.f32.gmra.mxu0 %v569
      %v611 = vpop.f32.mrf.mxu0
      %v612 = vadd.f32 0.0, %v611
      %613 = vmatmul.f32.gmra.mxu0 %v570
      %v614 = vpop.f32.mrf.mxu0
      %v615 = vadd.f32 0.0, %v614
      %616 = vmatmul.f32.gmra.mxu0 %v571
      %v617 = vpop.f32.mrf.mxu0
      %v618 = vadd.f32 0.0, %v617
      %619 = vmatmul.f32.gmra.mxu0 %v572
      %v620 = vpop.f32.mrf.mxu0
      %v621 = vadd.f32 0.0, %v620
      %622 = vmatmul.f32.gmra.mxu0 %v573
      %v623 = vpop.f32.mrf.mxu0
      %v624 = vadd.f32 0.0, %v623
      %625 = vmatmul.f32.gmra.mxu0 %v574
      %v626 = vpop.f32.mrf.mxu0
      %v627 = vadd.f32 0.0, %v626
      %628 = vmatmul.f32.gmra.mxu0 %v575
      %v629 = vpop.f32.mrf.mxu0
      %v630 = vadd.f32 0.0, %v629
      %631 = vmatmul.f32.gmra.mxu0 %v576
      %v632 = vpop.f32.mrf.mxu0
      %v633 = vadd.f32 0.0, %v632
      %634 = vdwg.mxu0
      %v635 = vadd.f32 %v561, %v612
      %v636 = vadd.f32 %v562, %v615
      %v637 = vadd.f32 %v563, %v618
      %v638 = vadd.f32 %v564, %v621
      %v639 = vadd.f32 %v565, %v624
      %v640 = vadd.f32 %v566, %v627
      %v641 = vadd.f32 %v567, %v630
      %v642 = vadd.f32 %v568, %v633
      %v643 = vld [vmem:[%s330 + $0x1] sm:$0xff]
      %v644 = vld [vmem:[%s330 + $0x11] sm:$0xff]
      %v645 = vld [vmem:[%s330 + $0x21] sm:$0xff]
      %v646 = vld [vmem:[%s330 + $0x31] sm:$0xff]
      %v647 = vld [vmem:[%s330 + $0x41] sm:$0xff]
      %v648 = vld [vmem:[%s330 + $0x51] sm:$0xff]
      %v649 = vld [vmem:[%s330 + $0x61] sm:$0xff]
      %v650 = vld [vmem:[%s330 + $0x71] sm:$0xff]
      %s651 = scalar_lea.vmem %s3, 512
      %v652 = vld [vmem:[%s651] sm:$0xff]
      %v653 = vld [vmem:[%s651 + $0x8] sm:$0xff]
      %v654 = vld [vmem:[%s651 + $0x10] sm:$0xff]
      %v655 = vld [vmem:[%s651 + $0x18] sm:$0xff]
      %v656 = vld [vmem:[%s651 + $0x20] sm:$0xff]
      %v657 = vld [vmem:[%s651 + $0x28] sm:$0xff]
      %v658 = vld [vmem:[%s651 + $0x30] sm:$0xff]
      %v659 = vld [vmem:[%s651 + $0x38] sm:$0xff]
      %v660 = vld [vmem:[%s651 + $0x40] sm:$0xff]
      %v661 = vld [vmem:[%s651 + $0x48] sm:$0xff]
      %v662 = vld [vmem:[%s651 + $0x50] sm:$0xff]
      %v663 = vld [vmem:[%s651 + $0x58] sm:$0xff]
      %v664 = vld [vmem:[%s651 + $0x60] sm:$0xff]
      %v665 = vld [vmem:[%s651 + $0x68] sm:$0xff]
      %v666 = vld [vmem:[%s651 + $0x70] sm:$0xff]
      %v667 = vld [vmem:[%s651 + $0x78] sm:$0xff]
      %668 = vmatpush.msra.mxu0 %v667
      %669 = vmatpush.msra.mxu0 %v666
      %670 = vmatpush.msra.mxu0 %v665
      %671 = vmatpush.msra.mxu0 %v664
      %672 = vmatpush.msra.mxu0 %v663
      %673 = vmatpush.msra.mxu0 %v662
      %674 = vmatpush.msra.mxu0 %v661
      %675 = vmatpush.msra.mxu0 %v660
      %676 = vmatpush.msra.mxu0 %v659
      %677 = vmatpush.msra.mxu0 %v658
      %678 = vmatpush.msra.mxu0 %v657
      %679 = vmatpush.msra.mxu0 %v656
      %680 = vmatpush.msra.mxu0 %v655
      %681 = vmatpush.msra.mxu0 %v654
      %682 = vmatpush.msra.mxu0 %v653
      %683 = vmatpush.msra.mxu0 %v652
      %684 = vmatmul.f32.gmra.mxu0 %v643
      %v685 = vpop.f32.mrf.mxu0
      %v686 = vadd.f32 0.0, %v685
      %687 = vmatmul.f32.gmra.mxu0 %v644
      %v688 = vpop.f32.mrf.mxu0
      %v689 = vadd.f32 0.0, %v688
      %690 = vmatmul.f32.gmra.mxu0 %v645
      %v691 = vpop.f32.mrf.mxu0
      %v692 = vadd.f32 0.0, %v691
      %693 = vmatmul.f32.gmra.mxu0 %v646
      %v694 = vpop.f32.mrf.mxu0
      %v695 = vadd.f32 0.0, %v694
      %696 = vmatmul.f32.gmra.mxu0 %v647
      %v697 = vpop.f32.mrf.mxu0
      %v698 = vadd.f32 0.0, %v697
      %699 = vmatmul.f32.gmra.mxu0 %v648
      %v700 = vpop.f32.mrf.mxu0
      %v701 = vadd.f32 0.0, %v700
      %702 = vmatmul.f32.gmra.mxu0 %v649
      %v703 = vpop.f32.mrf.mxu0
      %v704 = vadd.f32 0.0, %v703
      %705 = vmatmul.f32.gmra.mxu0 %v650
      %v706 = vpop.f32.mrf.mxu0
      %v707 = vadd.f32 0.0, %v706
      %708 = vdwg.mxu0
      %v709 = vadd.f32 %v635, %v686
      %v710 = vadd.f32 %v636, %v689
      %v711 = vadd.f32 %v637, %v692
      %v712 = vadd.f32 %v638, %v695
      %v713 = vadd.f32 %v639, %v698
      %v714 = vadd.f32 %v640, %v701
      %v715 = vadd.f32 %v641, %v704
      %v716 = vadd.f32 %v642, %v707
      %v717 = vld [vmem:[%s330 + $0x2] sm:$0xff]
      %v718 = vld [vmem:[%s330 + $0x12] sm:$0xff]
      %v719 = vld [vmem:[%s330 + $0x22] sm:$0xff]
      %v720 = vld [vmem:[%s330 + $0x32] sm:$0xff]
      %v721 = vld [vmem:[%s330 + $0x42] sm:$0xff]
      %v722 = vld [vmem:[%s330 + $0x52] sm:$0xff]
      %v723 = vld [vmem:[%s330 + $0x62] sm:$0xff]
      %v724 = vld [vmem:[%s330 + $0x72] sm:$0xff]
      %s725 = scalar_lea.vmem %s3, 640
      %v726 = vld [vmem:[%s725] sm:$0xff]
      %v727 = vld [vmem:[%s725 + $0x8] sm:$0xff]
      %v728 = vld [vmem:[%s725 + $0x10] sm:$0xff]
      %v729 = vld [vmem:[%s725 + $0x18] sm:$0xff]
      %v730 = vld [vmem:[%s725 + $0x20] sm:$0xff]
      %v731 = vld [vmem:[%s725 + $0x28] sm:$0xff]
      %v732 = vld [vmem:[%s725 + $0x30] sm:$0xff]
      %v733 = vld [vmem:[%s725 + $0x38] sm:$0xff]
      %v734 = vld [vmem:[%s725 + $0x40] sm:$0xff]
      %v735 = vld [vmem:[%s725 + $0x48] sm:$0xff]
      %v736 = vld [vmem:[%s725 + $0x50] sm:$0xff]
      %v737 = vld [vmem:[%s725 + $0x58] sm:$0xff]
      %v738 = vld [vmem:[%s725 + $0x60] sm:$0xff]
      %v739 = vld [vmem:[%s725 + $0x68] sm:$0xff]
      %v740 = vld [vmem:[%s725 + $0x70] sm:$0xff]
      %v741 = vld [vmem:[%s725 + $0x78] sm:$0xff]
      %742 = vmatpush.msra.mxu0 %v741
      %743 = vmatpush.msra.mxu0 %v740
      %744 = vmatpush.msra.mxu0 %v739
      %745 = vmatpush.msra.mxu0 %v738
      %746 = vmatpush.msra.mxu0 %v737
      %747 = vmatpush.msra.mxu0 %v736
      %748 = vmatpush.msra.mxu0 %v735
      %749 = vmatpush.msra.mxu0 %v734
      %750 = vmatpush.msra.mxu0 %v733
      %751 = vmatpush.msra.mxu0 %v732
      %752 = vmatpush.msra.mxu0 %v731
      %753 = vmatpush.msra.mxu0 %v730
      %754 = vmatpush.msra.mxu0 %v729
      %755 = vmatpush.msra.mxu0 %v728
      %756 = vmatpush.msra.mxu0 %v727
      %757 = vmatpush.msra.mxu0 %v726
      %758 = vmatmul.f32.gmra.mxu0 %v717
      %v759 = vpop.f32.mrf.mxu0
      %v760 = vadd.f32 0.0, %v759
      %761 = vmatmul.f32.gmra.mxu0 %v718
      %v762 = vpop.f32.mrf.mxu0
      %v763 = vadd.f32 0.0, %v762
      %764 = vmatmul.f32.gmra.mxu0 %v719
      %v765 = vpop.f32.mrf.mxu0
      %v766 = vadd.f32 0.0, %v765
      %767 = vmatmul.f32.gmra.mxu0 %v720
      %v768 = vpop.f32.mrf.mxu0
      %v769 = vadd.f32 0.0, %v768
      %770 = vmatmul.f32.gmra.mxu0 %v721
      %v771 = vpop.f32.mrf.mxu0
      %v772 = vadd.f32 0.0, %v771
      %773 = vmatmul.f32.gmra.mxu0 %v722
      %v774 = vpop.f32.mrf.mxu0
      %v775 = vadd.f32 0.0, %v774
      %776 = vmatmul.f32.gmra.mxu0 %v723
      %v777 = vpop.f32.mrf.mxu0
      %v778 = vadd.f32 0.0, %v777
      %779 = vmatmul.f32.gmra.mxu0 %v724
      %v780 = vpop.f32.mrf.mxu0
      %v781 = vadd.f32 0.0, %v780
      %782 = vdwg.mxu0
      %v783 = vadd.f32 %v709, %v760
      %v784 = vadd.f32 %v710, %v763
      %v785 = vadd.f32 %v711, %v766
      %v786 = vadd.f32 %v712, %v769
      %v787 = vadd.f32 %v713, %v772
      %v788 = vadd.f32 %v714, %v775
      %v789 = vadd.f32 %v715, %v778
      %v790 = vadd.f32 %v716, %v781
      %s791 = scalar_lea.vmem [#allocation2], 32
      %v792 = vld [vmem:[%s791] sm:$0xff]
      %v793 = vld [vmem:[%s791 + $0x10] sm:$0xff]
      %v794 = vld [vmem:[%s791 + $0x20] sm:$0xff]
      %v795 = vld [vmem:[%s791 + $0x30] sm:$0xff]
      %v796 = vld [vmem:[%s791 + $0x40] sm:$0xff]
      %v797 = vld [vmem:[%s791 + $0x50] sm:$0xff]
      %v798 = vld [vmem:[%s791 + $0x60] sm:$0xff]
      %v799 = vld [vmem:[%s791 + $0x70] sm:$0xff]
      %s800 = scalar_lea.vmem %s3, 768
      %v801 = vld [vmem:[%s800] sm:$0xff]
      %v802 = vld [vmem:[%s800 + $0x8] sm:$0xff]
      %v803 = vld [vmem:[%s800 + $0x10] sm:$0xff]
      %v804 = vld [vmem:[%s800 + $0x18] sm:$0xff]
      %v805 = vld [vmem:[%s800 + $0x20] sm:$0xff]
      %v806 = vld [vmem:[%s800 + $0x28] sm:$0xff]
      %v807 = vld [vmem:[%s800 + $0x30] sm:$0xff]
      %v808 = vld [vmem:[%s800 + $0x38] sm:$0xff]
      %v809 = vld [vmem:[%s800 + $0x40] sm:$0xff]
      %v810 = vld [vmem:[%s800 + $0x48] sm:$0xff]
      %v811 = vld [vmem:[%s800 + $0x50] sm:$0xff]
      %v812 = vld [vmem:[%s800 + $0x58] sm:$0xff]
      %v813 = vld [vmem:[%s800 + $0x60] sm:$0xff]
      %v814 = vld [vmem:[%s800 + $0x68] sm:$0xff]
      %v815 = vld [vmem:[%s800 + $0x70] sm:$0xff]
      %v816 = vld [vmem:[%s800 + $0x78] sm:$0xff]
      %817 = vmatpush.msra.mxu0 %v816
      %818 = vmatpush.msra.mxu0 %v815
      %819 = vmatpush.msra.mxu0 %v814
      %820 = vmatpush.msra.mxu0 %v813
      %821 = vmatpush.msra.mxu0 %v812
      %822 = vmatpush.msra.mxu0 %v811
      %823 = vmatpush.msra.mxu0 %v810
      %824 = vmatpush.msra.mxu0 %v809
      %825 = vmatpush.msra.mxu0 %v808
      %826 = vmatpush.msra.mxu0 %v807
      %827 = vmatpush.msra.mxu0 %v806
      %828 = vmatpush.msra.mxu0 %v805
      %829 = vmatpush.msra.mxu0 %v804
      %830 = vmatpush.msra.mxu0 %v803
      %831 = vmatpush.msra.mxu0 %v802
      %832 = vmatpush.msra.mxu0 %v801
      %833 = vmatmul.f32.gmra.mxu0 %v792
      %v834 = vpop.f32.mrf.mxu0
      %v835 = vadd.f32 0.0, %v834
      %836 = vmatmul.f32.gmra.mxu0 %v793
      %v837 = vpop.f32.mrf.mxu0
      %v838 = vadd.f32 0.0, %v837
      %839 = vmatmul.f32.gmra.mxu0 %v794
      %v840 = vpop.f32.mrf.mxu0
      %v841 = vadd.f32 0.0, %v840
      %842 = vmatmul.f32.gmra.mxu0 %v795
      %v843 = vpop.f32.mrf.mxu0
      %v844 = vadd.f32 0.0, %v843
      %845 = vmatmul.f32.gmra.mxu0 %v796
      %v846 = vpop.f32.mrf.mxu0
      %v847 = vadd.f32 0.0, %v846
      %848 = vmatmul.f32.gmra.mxu0 %v797
      %v849 = vpop.f32.mrf.mxu0
      %v850 = vadd.f32 0.0, %v849
      %851 = vmatmul.f32.gmra.mxu0 %v798
      %v852 = vpop.f32.mrf.mxu0
      %v853 = vadd.f32 0.0, %v852
      %854 = vmatmul.f32.gmra.mxu0 %v799
      %v855 = vpop.f32.mrf.mxu0
      %v856 = vadd.f32 0.0, %v855
      %857 = vdwg.mxu0
      %v858 = vadd.f32 %v783, %v835
      %v859 = vadd.f32 %v784, %v838
      %v860 = vadd.f32 %v785, %v841
      %v861 = vadd.f32 %v786, %v844
      %v862 = vadd.f32 %v787, %v847
      %v863 = vadd.f32 %v788, %v850
      %v864 = vadd.f32 %v789, %v853
      %v865 = vadd.f32 %v790, %v856
      %v866 = vld [vmem:[%s791 + $0x1] sm:$0xff]
      %v867 = vld [vmem:[%s791 + $0x11] sm:$0xff]
      %v868 = vld [vmem:[%s791 + $0x21] sm:$0xff]
      %v869 = vld [vmem:[%s791 + $0x31] sm:$0xff]
      %v870 = vld [vmem:[%s791 + $0x41] sm:$0xff]
      %v871 = vld [vmem:[%s791 + $0x51] sm:$0xff]
      %v872 = vld [vmem:[%s791 + $0x61] sm:$0xff]
      %v873 = vld [vmem:[%s791 + $0x71] sm:$0xff]
      %s874 = scalar_lea.vmem %s3, 896
      %v875 = vld [vmem:[%s874] sm:$0xff]
      %v876 = vld [vmem:[%s874 + $0x8] sm:$0xff]
      %v877 = vld [vmem:[%s874 + $0x10] sm:$0xff]
      %v878 = vld [vmem:[%s874 + $0x18] sm:$0xff]
      %v879 = vld [vmem:[%s874 + $0x20] sm:$0xff]
      %v880 = vld [vmem:[%s874 + $0x28] sm:$0xff]
      %v881 = vld [vmem:[%s874 + $0x30] sm:$0xff]
      %v882 = vld [vmem:[%s874 + $0x38] sm:$0xff]
      %v883 = vld [vmem:[%s874 + $0x40] sm:$0xff]
      %v884 = vld [vmem:[%s874 + $0x48] sm:$0xff]
      %v885 = vld [vmem:[%s874 + $0x50] sm:$0xff]
      %v886 = vld [vmem:[%s874 + $0x58] sm:$0xff]
      %v887 = vld [vmem:[%s874 + $0x60] sm:$0xff]
      %v888 = vld [vmem:[%s874 + $0x68] sm:$0xff]
      %v889 = vld [vmem:[%s874 + $0x70] sm:$0xff]
      %v890 = vld [vmem:[%s874 + $0x78] sm:$0xff]
      %891 = vmatpush.msra.mxu0 %v890
      %892 = vmatpush.msra.mxu0 %v889
      %893 = vmatpush.msra.mxu0 %v888
      %894 = vmatpush.msra.mxu0 %v887
      %895 = vmatpush.msra.mxu0 %v886
      %896 = vmatpush.msra.mxu0 %v885
      %897 = vmatpush.msra.mxu0 %v884
      %898 = vmatpush.msra.mxu0 %v883
      %899 = vmatpush.msra.mxu0 %v882
      %900 = vmatpush.msra.mxu0 %v881
      %901 = vmatpush.msra.mxu0 %v880
      %902 = vmatpush.msra.mxu0 %v879
      %903 = vmatpush.msra.mxu0 %v878
      %904 = vmatpush.msra.mxu0 %v877
      %905 = vmatpush.msra.mxu0 %v876
      %906 = vmatpush.msra.mxu0 %v875
      %907 = vmatmul.f32.gmra.mxu0 %v866
      %v908 = vpop.f32.mrf.mxu0
      %v909 = vadd.f32 0.0, %v908
      %910 = vmatmul.f32.gmra.mxu0 %v867
      %v911 = vpop.f32.mrf.mxu0
      %v912 = vadd.f32 0.0, %v911
      %913 = vmatmul.f32.gmra.mxu0 %v868
      %v914 = vpop.f32.mrf.mxu0
      %v915 = vadd.f32 0.0, %v914
      %916 = vmatmul.f32.gmra.mxu0 %v869
      %v917 = vpop.f32.mrf.mxu0
      %v918 = vadd.f32 0.0, %v917
      %919 = vmatmul.f32.gmra.mxu0 %v870
      %v920 = vpop.f32.mrf.mxu0
      %v921 = vadd.f32 0.0, %v920
      %922 = vmatmul.f32.gmra.mxu0 %v871
      %v923 = vpop.f32.mrf.mxu0
      %v924 = vadd.f32 0.0, %v923
      %925 = vmatmul.f32.gmra.mxu0 %v872
      %v926 = vpop.f32.mrf.mxu0
      %v927 = vadd.f32 0.0, %v926
      %928 = vmatmul.f32.gmra.mxu0 %v873
      %v929 = vpop.f32.mrf.mxu0
      %v930 = vadd.f32 0.0, %v929
      %931 = vdwg.mxu0
      %v932 = vadd.f32 %v858, %v909
      %v933 = vadd.f32 %v859, %v912
      %v934 = vadd.f32 %v860, %v915
      %v935 = vadd.f32 %v861, %v918
      %v936 = vadd.f32 %v862, %v921
      %v937 = vadd.f32 %v863, %v924
      %v938 = vadd.f32 %v864, %v927
      %v939 = vadd.f32 %v865, %v930
      %v940 = vld [vmem:[%s791 + $0x2] sm:$0xff]
      %v941 = vld [vmem:[%s791 + $0x12] sm:$0xff]
      %v942 = vld [vmem:[%s791 + $0x22] sm:$0xff]
      %v943 = vld [vmem:[%s791 + $0x32] sm:$0xff]
      %v944 = vld [vmem:[%s791 + $0x42] sm:$0xff]
      %v945 = vld [vmem:[%s791 + $0x52] sm:$0xff]
      %v946 = vld [vmem:[%s791 + $0x62] sm:$0xff]
      %v947 = vld [vmem:[%s791 + $0x72] sm:$0xff]
      %s948 = scalar_lea.vmem %s3, 1024
      %v949 = vld [vmem:[%s948] sm:$0xff]
      %v950 = vld [vmem:[%s948 + $0x8] sm:$0xff]
      %v951 = vld [vmem:[%s948 + $0x10] sm:$0xff]
      %v952 = vld [vmem:[%s948 + $0x18] sm:$0xff]
      %v953 = vld [vmem:[%s948 + $0x20] sm:$0xff]
      %v954 = vld [vmem:[%s948 + $0x28] sm:$0xff]
      %v955 = vld [vmem:[%s948 + $0x30] sm:$0xff]
      %v956 = vld [vmem:[%s948 + $0x38] sm:$0xff]
      %v957 = vld [vmem:[%s948 + $0x40] sm:$0xff]
      %v958 = vld [vmem:[%s948 + $0x48] sm:$0xff]
      %v959 = vld [vmem:[%s948 + $0x50] sm:$0xff]
      %v960 = vld [vmem:[%s948 + $0x58] sm:$0xff]
      %v961 = vld [vmem:[%s948 + $0x60] sm:$0xff]
      %v962 = vld [vmem:[%s948 + $0x68] sm:$0xff]
      %v963 = vld [vmem:[%s948 + $0x70] sm:$0xff]
      %v964 = vld [vmem:[%s948 + $0x78] sm:$0xff]
      %965 = vmatpush.msra.mxu0 %v964
      %966 = vmatpush.msra.mxu0 %v963
      %967 = vmatpush.msra.mxu0 %v962
      %968 = vmatpush.msra.mxu0 %v961
      %969 = vmatpush.msra.mxu0 %v960
      %970 = vmatpush.msra.mxu0 %v959
      %971 = vmatpush.msra.mxu0 %v958
      %972 = vmatpush.msra.mxu0 %v957
      %973 = vmatpush.msra.mxu0 %v956
      %974 = vmatpush.msra.mxu0 %v955
      %975 = vmatpush.msra.mxu0 %v954
      %976 = vmatpush.msra.mxu0 %v953
      %977 = vmatpush.msra.mxu0 %v952
      %978 = vmatpush.msra.mxu0 %v951
      %979 = vmatpush.msra.mxu0 %v950
      %980 = vmatpush.msra.mxu0 %v949
      %981 = vmatmul.f32.gmra.mxu0 %v940
      %v982 = vpop.f32.mrf.mxu0
      %v983 = vadd.f32 0.0, %v982
      %984 = vmatmul.f32.gmra.mxu0 %v941
      %v985 = vpop.f32.mrf.mxu0
      %v986 = vadd.f32 0.0, %v985
      %987 = vmatmul.f32.gmra.mxu0 %v942
      %v988 = vpop.f32.mrf.mxu0
      %v989 = vadd.f32 0.0, %v988
      %990 = vmatmul.f32.gmra.mxu0 %v943
      %v991 = vpop.f32.mrf.mxu0
      %v992 = vadd.f32 0.0, %v991
      %993 = vmatmul.f32.gmra.mxu0 %v944
      %v994 = vpop.f32.mrf.mxu0
      %v995 = vadd.f32 0.0, %v994
      %996 = vmatmul.f32.gmra.mxu0 %v945
      %v997 = vpop.f32.mrf.mxu0
      %v998 = vadd.f32 0.0, %v997
      %999 = vmatmul.f32.gmra.mxu0 %v946
      %v1000 = vpop.f32.mrf.mxu0
      %v1001 = vadd.f32 0.0, %v1000
      %1002 = vmatmul.f32.gmra.mxu0 %v947
      %v1003 = vpop.f32.mrf.mxu0
      %v1004 = vadd.f32 0.0, %v1003
      %1005 = vdwg.mxu0
      %v1006 = vadd.f32 %v932, %v983
      %v1007 = vadd.f32 %v933, %v986
      %v1008 = vadd.f32 %v934, %v989
      %v1009 = vadd.f32 %v935, %v992
      %v1010 = vadd.f32 %v936, %v995
      %v1011 = vadd.f32 %v937, %v998
      %v1012 = vadd.f32 %v938, %v1001
      %v1013 = vadd.f32 %v939, %v1004
      %1014 = vst [vmem:[%s258] sm:$0xff] %v1006
      %1015 = vst [vmem:[%s258 + $0x8] sm:$0xff] %v1007
      %1016 = vst [vmem:[%s258 + $0x10] sm:$0xff] %v1008
      %1017 = vst [vmem:[%s258 + $0x18] sm:$0xff] %v1009
      %1018 = vst [vmem:[%s258 + $0x20] sm:$0xff] %v1010
      %1019 = vst [vmem:[%s258 + $0x28] sm:$0xff] %v1011
      %1020 = vst [vmem:[%s258 + $0x30] sm:$0xff] %v1012
      %1021 = vst [vmem:[%s258 + $0x38] sm:$0xff] %v1013
      %v1022 = vadd.f32 %v1006, %v1007
      %v1023 = vadd.f32 %v1022, %v1008
      %v1024 = vadd.f32 %v1023, %v1009
      %v1025 = vadd.f32 %v1024, %v1010
      %v1026 = vadd.f32 %v1025, %v1011
      %v1027 = vadd.f32 %v1026, %v1012
      %v1028 = vadd.f32 %v1027, %v1013
      %v1029 = vrot.slane %v1028, 4
      %v1030 = vadd.f32 %v1028, %v1029
      %v1031 = vrot.slane %v1030, 2
      %v1032 = vadd.f32 %v1030, %v1031
      %v1033 = vrot.slane %v1032, 1
      %v1034 = vadd.f32 %v1032, %v1033
      %v1035 = vmul.f32 %v1006, %v1006
      %v1036 = vmul.f32 %v1007, %v1007
      %v1037 = vmul.f32 %v1008, %v1008
      %v1038 = vmul.f32 %v1009, %v1009
      %v1039 = vmul.f32 %v1010, %v1010
      %v1040 = vmul.f32 %v1011, %v1011
      %v1041 = vmul.f32 %v1012, %v1012
      %v1042 = vmul.f32 %v1013, %v1013
      %v1043 = vadd.f32 %v1035, %v1036
      %v1044 = vadd.f32 %v1043, %v1037
      %v1045 = vadd.f32 %v1044, %v1038
      %v1046 = vadd.f32 %v1045, %v1039
      %v1047 = vadd.f32 %v1046, %v1040
      %v1048 = vadd.f32 %v1047, %v1041
      %v1049 = vadd.f32 %v1048, %v1042
      %v1050 = vrot.slane %v1049, 4
      %v1051 = vadd.f32 %v1049, %v1050
      %v1052 = vrot.slane %v1051, 2
      %v1053 = vadd.f32 %v1051, %v1052
      %v1054 = vrot.slane %v1053, 1
      %v1055 = vadd.f32 %v1053, %v1054
      %vm1056 = vcmask 1040384
      %v1057 = vsel %vm1056, %v1034, %v1055
      %vm1058 = vcmask 1041408
      %v1059 = vsel %vm1058, %v1057, 0.0
      %1060 = vst [vmem:[%s266] sm:$0xff] %v1059
      %s1061 = smul.u32 8, %s22
      %p1062 = scmp.lt.s32.totalorder %s21, 1
      %s1063 = scalar_select %p1062, %s21, 1
      %p1064 = scmp.lt.s32.totalorder %s1061, 7
      %s1065 = scalar_select %p1064, %s1061, 7
      %s1066 = smul.addr %s1063, 8
      %s1067 = sadd.s32 %s1065, %s1066
      %s1068 = smul.addr %s1067, 8
      %s1069 = scalar_lea.vmem %s4, %s1068
      %p1070 = scmp.lt.s32.totalorder %s21, 1
      %s1071 = scalar_select %p1070, %s21, 1
      %p1072 = scmp.lt.s32.totalorder %s22, 0
      %s1073 = scalar_select %p1072, %s22, 0
      %s1074 = sadd.s32 %s1073, %s1071
      %s1075 = smul.addr %s1074, 8
      %s1076 = scalar_lea.vmem %s5, %s1075
      // Predicated region
      $region45: #{building_block_downsample.4} parent=35 // pred_check
        %p1077 = pneg %p138
      $region46: #{building_block_downsample.4} parent=35 // pred_check_branch
        %1079 = sbr.rel (%p1077) target = $region48
      $region47: #{building_block_downsample.4} parent=35 // pred_region
        %s1080 = smul.u32 8, %s22
      $region48: #{building_block_downsample.4} parent=35 // pred_fallthru
        _
      // Predicated region
      $region49: #{building_block_downsample.4} parent=35 // pred_check
        %p1081 = pneg %p166
      $region50: #{building_block_downsample.4} parent=35 // pred_check_branch
        %1083 = sbr.rel (%p1081) target = $region52
      $region51: #{building_block_downsample.4} parent=35 // pred_region
        _
      $region52: #{building_block_downsample.4} parent=35 // pred_fallthru
        _
    $region36: #{building_block_downsample.4} parent=5 // pred_fallthru
      _
    %p1084 = scmp.le.s32.totalorder 2, %s12
    // Predicated region
    $region53: #{building_block_downsample.4} parent=5 // pred_check
      %p1085 = pneg %p1084
    $region54: #{building_block_downsample.4} parent=5 // pred_check_branch
      %1087 = sbr.rel (%p1085) target = $region56
    $region55: #{building_block_downsample.4} parent=5 // pred_region
      %s1088 = ssub.s32 %s12, 2
      // Predicated region
      $region57: #{building_block_downsample.4} parent=55 // pred_check
        %p1089 = pneg %p144
      $region58: #{building_block_downsample.4} parent=55 // pred_check_branch
        %1091 = sbr.rel (%p1089) target = $region60
      $region59: #{building_block_downsample.4} parent=55 // pred_region
        %s1092 = smul.u32 8, %s24
        %p1093 = scmp.lt.s32.totalorder %s23, 1
        %s1094 = scalar_select %p1093, %s23, 1
        %p1095 = scmp.lt.s32.totalorder %s1092, 7
        %s1096 = scalar_select %p1095, %s1092, 7
        %s1097 = smul.addr %s1094, 8
        %s1098 = sadd.s32 %s1096, %s1097
        %s1099 = smul.addr %s1098, 8
        %s1100 = scalar_lea.vmem %s4, %s1099
      $region60: #{building_block_downsample.4} parent=55 // pred_fallthru
        _
      // Predicated region
      $region61: #{building_block_downsample.4} parent=55 // pred_check
        %p1101 = pneg %p172
      $region62: #{building_block_downsample.4} parent=55 // pred_check_branch
        %1103 = sbr.rel (%p1101) target = $region64
      $region63: #{building_block_downsample.4} parent=55 // pred_region
        %p1104 = scmp.lt.s32.totalorder %s23, 1
        %s1105 = scalar_select %p1104, %s23, 1
        %p1106 = scmp.lt.s32.totalorder %s24, 0
        %s1107 = scalar_select %p1106, %s24, 0
        %s1108 = sadd.s32 %s1107, %s1105
        %s1109 = smul.addr %s1108, 8
        %s1110 = scalar_lea.vmem %s5, %s1109
      $region64: #{building_block_downsample.4} parent=55 // pred_fallthru
        _
    $region56: #{building_block_downsample.4} parent=5 // pred_fallthru
      _
  $region6: #{building_block_downsample.4} parent=0 // loop_footer
    %s16 = sadd.s32 1, %s12
  $region7: #{building_block_downsample.4} parent=0 // loop_footer_branch
    %11 = sbr.rel target = $region3
  $region8: #{building_block_downsample.4} parent=0 // loop_exit
    _

</llo_original>
